<compile_context>
chip_gen: v5e
topology: v5e:2x2
jax: 0.10.0
libtpu: 0.0.40
codegen_flags: <defaults>
</compile_context>

<pallas_src>
import functools

import numpy as np
import jax
import jax.numpy as jnp
from jax.experimental import pallas as pl
from jax.experimental.pallas import tpu as pltpu


# Tap order shared by the mask table, the kernel loops and the flattened
# weight layout: tap t corresponds to (ky, kx) = (dy + 1, dx + 1), t = ky*3+kx.
_TAPS = tuple((dy, dx) for dy in (-1, 0, 1) for dx in (-1, 0, 1))


def _make_tap_masks(H, W):
    """(9, H*W) f32: mask[t, p] = 1 iff (h + dy, w + dx) lies inside the image."""
    masks = np.zeros((len(_TAPS), H * W), np.float32)
    for t, (dy, dx) in enumerate(_TAPS):
        m = np.zeros((H, W), np.float32)
        m[max(0, -dy):H - max(0, dy), max(0, -dx):W - max(0, dx)] = 1.0
        masks[t] = m.reshape(-1)
    return masks


def _flatten_weight(w_oihw):
    """(Cout, Cin, 3, 3) OIHW -> (Cout, 9*Cin); column = (ky*3 + kx)*Cin + ci."""
    cout, cin = w_oihw.shape[0], w_oihw.shape[1]
    return jnp.transpose(w_oihw, (0, 2, 3, 1)).reshape(cout, 9 * cin)


# -----------------------------------------------------------------------------
# Fused kernel: one grid step == one image.
# -----------------------------------------------------------------------------
def _image_registration_kernel(sr_ref, ref_ref, masks_ref,
                               w_sh_ref, b_sh_ref, w_gb_ref, b_gb_ref,
                               w_c1_ref, w_c2_ref, o_ref, *, C, H, W):
    f32 = jnp.float32
    HW = H * W

    sr = sr_ref[...].astype(f32)      # (C, HW)
    rf = ref_ref[...].astype(f32)     # (C, HW)

    # Boundary masks for the 9 taps, loaded once and reused by every conv.
    mask_rows = [masks_ref[t:t + 1, :] for t in range(9)]     # each (1, HW)

    def shifted(x, t):
        """result[:, p] = x[:, p + dy*W + dx], zero outside the image."""
        dy, dx = _TAPS[t]
        s = dy * W + dx
        if s == 0:
            return x
        # pltpu.roll follows np.roll semantics: out[p] = x[(p - shift) % HW],
        # so shift = -s gives out[p] = x[(p + s) % HW]; wrapped elements are
        # exactly the out-of-image taps and get zeroed by the mask.
        rolled = pltpu.roll(x, (-s) % HW, axis=1)
        return rolled * mask_rows[t]

    def conv3x3(xs, w_ref, bias):
        """3x3 'same' conv on the flat (C, HW) layout.

        xs: list of (Ci, HW) inputs whose channel concat is the conv input.
        w_ref: (Cout, 9 * sum(Ci)) flattened weights.  bias: (Cout, 1) or None.
        """
        w = w_ref[...].astype(f32)
        cout = w.shape[0]
        acc = jnp.zeros((cout, HW), f32)
        if bias is not None:
            acc = acc + bias
        col = 0
        for t in range(9):
            for x in xs:
                shx = shifted(x, t)                         # (Ci, HW)
                for ci in range(x.shape[0]):
                    wt = w[:, col:col + 1]                  # (Cout, 1)
                    acc = acc + wt * shx[ci:ci + 1, :]      # VPU broadcast-FMA
                    col += 1
        return acc

    def lrelu(x):
        return jnp.where(x >= 0.0, x, 0.2 * x)

    # ---- per-image statistics (computed once, reused by both modulations) ----
    inv_hw = 1.0 / HW
    sr_mean = jnp.sum(sr, axis=1, keepdims=True) * inv_hw          # (C, 1)
    sr_c = sr - sr_mean
    # torch.std default is unbiased (ddof=1).
    sr_std = jnp.sqrt(jnp.sum(sr_c * sr_c, axis=1, keepdims=True) / (HW - 1))

    rf_mean = jnp.sum(rf, axis=1, keepdims=True) * inv_hw
    rf_c = rf - rf_mean
    rf_var = jnp.sum(rf_c * rf_c, axis=1, keepdims=True) * inv_hw
    rf_norm = rf_c * jax.lax.rsqrt(rf_var + 1e-5)                  # InstanceNorm2d

    # ---- conv_shared (+ReLU) and the fused conv_gamma|conv_beta --------------
    style = jnp.maximum(
        conv3x3([sr, rf], w_sh_ref, b_sh_ref[...].astype(f32)), 0.0)
    gb = conv3x3([style], w_gb_ref, b_gb_ref[...].astype(f32))     # (2C, HW)
    scale = sr_std + gb[:C, :]        # sr_std + gamma
    shift = sr_mean + gb[C:, :]       # sr_mean + beta

    # ---- modulate -> conv1 -> modulate -> conv2 -> + ref ----------------------
    out = lrelu(scale * rf_norm + shift)
    out = conv3x3([out], w_c1_ref, None)
    out = lrelu(scale * out + shift)
    out = conv3x3([out], w_c2_ref, None) + rf
    o_ref[...] = out.astype(o_ref.dtype)


# -----------------------------------------------------------------------------
# Public wrapper: takes PyTorch-style NCHW tensors and OIHW parameters.
# -----------------------------------------------------------------------------
def image_registration_forward(sr_nchw, ref_nchw, params_oihw):
    N, C, H, W = sr_nchw.shape
    HW = H * W

    sr = sr_nchw.reshape(N, C, HW)
    rf = ref_nchw.reshape(N, C, HW)
    masks = jnp.asarray(_make_tap_masks(H, W))

    w_sh = _flatten_weight(params_oihw["w_shared"])                  # (C, 9*2C)
    b_sh = params_oihw["b_shared"].reshape(C, 1)
    w_gb = _flatten_weight(
        jnp.concatenate([params_oihw["w_gamma"], params_oihw["w_beta"]], axis=0))
    b_gb = jnp.concatenate(
        [params_oihw["b_gamma"], params_oihw["b_beta"]]).reshape(2 * C, 1)
    w_c1 = _flatten_weight(params_oihw["w_conv1"])
    w_c2 = _flatten_weight(params_oihw["w_conv2"])

    kernel = functools.partial(_image_registration_kernel, C=C, H=H, W=W)

    img_spec = pl.BlockSpec((None, C, HW), lambda n: (n, 0, 0))

    def full(a):
        return pl.BlockSpec(a.shape, lambda n: (0,) * a.ndim)

    out = pl.pallas_call(
        kernel,
        out_shape=jax.ShapeDtypeStruct((N, C, HW), sr_nchw.dtype),
        grid=(N,),
        in_specs=[img_spec, img_spec, full(masks),
                  full(w_sh), full(b_sh), full(w_gb), full(b_gb),
                  full(w_c1), full(w_c2)],
        out_specs=img_spec,
        compiler_params=pltpu.CompilerParams(dimension_semantics=("parallel",)),
    )(sr, rf, masks, w_sh, b_sh, w_gb, b_gb, w_c1, w_c2)
    return out.reshape(N, C, H, W)


# -----------------------------------------------------------------------------
# Pure-JAX reference (mirrors the PyTorch module) for correctness checking.
# -----------------------------------------------------------------------------
def reference_forward(sr, ref, p):
    def conv(x, w, b):
        y = jax.lax.conv_general_dilated(
            x, w, (1, 1), "SAME", dimension_numbers=("NCHW", "OIHW", "NCHW"))
        if b is not None:
            y = y + b.reshape(1, -1, 1, 1)
        return y

    style = jax.nn.relu(conv(jnp.concatenate([sr, ref], axis=1),
                             p["w_shared"], p["b_shared"]))
    gamma = conv(style, p["w_gamma"], p["b_gamma"])
    beta = conv(style, p["w_beta"], p["b_beta"])

    b_, c_, h_, w_ = sr.shape
    srf = sr.reshape(b_, c_, h_ * w_)
    sr_mean = jnp.mean(srf, axis=-1, keepdims=True)[..., None]
    sr_std = jnp.std(srf, axis=-1, ddof=1, keepdims=True)[..., None]

    rm = jnp.mean(ref, axis=(2, 3), keepdims=True)
    rv = jnp.var(ref, axis=(2, 3), keepdims=True)
    out = (ref - rm) / jnp.sqrt(rv + 1e-5)

    out = (sr_std + gamma) * out + (beta + sr_mean)
    out = jnp.where(out >= 0.0, out, 0.2 * out)
    out = conv(out, p["w_conv1"], None)
    out = (sr_std + gamma) * out + (beta + sr_mean)
    out = jnp.where(out >= 0.0, out, 0.2 * out)
    out = conv(out, p["w_conv2"], None)
    return out + ref


if __name__ == "__main__":
    N, C, H, W = 2, 4, 16, 16

    key = jax.random.PRNGKey(0)
    ks = jax.random.split(key, 10)

    sr = jax.random.normal(ks[0], (N, C, H, W), jnp.float32)
    ref = jax.random.normal(ks[1], (N, C, H, W), jnp.float32)

    # PyTorch-layout (OIHW) parameters.  conv_gamma/conv_beta are zero-init in
    # the module constructor; small random values are used here so that the
    # fused gamma/beta conv path is actually exercised by the test.
    p = {
        "w_shared": 0.1 * jax.random.normal(ks[2], (C, 2 * C, 3, 3), jnp.float32),
        "b_shared": 0.1 * jax.random.normal(ks[3], (C,), jnp.float32),
        "w_gamma": 0.05 * jax.random.normal(ks[4], (C, C, 3, 3), jnp.float32),
        "b_gamma": 0.05 * jax.random.normal(ks[5], (C,), jnp.float32),
        "w_beta": 0.05 * jax.random.normal(ks[6], (C, C, 3, 3), jnp.float32),
        "b_beta": 0.05 * jax.random.normal(ks[7], (C,), jnp.float32),
        "w_conv1": 0.1 * jax.random.normal(ks[8], (C, C, 3, 3), jnp.float32),
        "w_conv2": 0.1 * jax.random.normal(ks[9], (C, C, 3, 3), jnp.float32),
    }

    out = jax.block_until_ready(image_registration_forward(sr, ref, p))
    expected = jax.block_until_ready(reference_forward(sr, ref, p))

    assert out.shape == (N, C, H, W)
    max_err = float(jnp.max(jnp.abs(out - expected)))
    assert jnp.allclose(out, expected, rtol=1e-3, atol=1e-3), max_err
    print("KERNEL_OK")
</pallas_src>

<mosaic_0001>
module attributes {stable_mosaic.version = 11 : i64} {
  func.func @_image_registration_kernel(%arg0: i32, %arg1: memref<1x4x256xf32, #tpu.memory_space<vmem>>, %arg2: memref<1x4x256xf32, #tpu.memory_space<vmem>>, %arg3: memref<9x256xf32, #tpu.memory_space<vmem>>, %arg4: memref<4x72xf32, #tpu.memory_space<vmem>>, %arg5: memref<4x1xf32, #tpu.memory_space<vmem>>, %arg6: memref<8x36xf32, #tpu.memory_space<vmem>>, %arg7: memref<8x1xf32, #tpu.memory_space<vmem>>, %arg8: memref<4x36xf32, #tpu.memory_space<vmem>>, %arg9: memref<4x36xf32, #tpu.memory_space<vmem>>, %arg10: memref<1x4x256xf32, #tpu.memory_space<vmem>>) attributes {dimension_semantics = [#tpu.dimension_semantics<parallel>], iteration_bounds = array<i64: 2>, scalar_prefetch = 0 : i64, scratch_operands = 0 : i64, tpu.core_type = #tpu.core_type<tc>, window_params = [{transform_indices = @transform_0, window_bounds = array<i64: 1, 4, 256>}, {transform_indices = @transform_1, window_bounds = array<i64: 1, 4, 256>}, {pipeline_mode = #tpu.pipeline_mode<synchronous>, transform_indices = @transform_2, window_bounds = array<i64: 9, 256>}, {pipeline_mode = #tpu.pipeline_mode<synchronous>, transform_indices = @transform_3, window_bounds = array<i64: 4, 72>}, {pipeline_mode = #tpu.pipeline_mode<synchronous>, transform_indices = @transform_4, window_bounds = array<i64: 4, 1>}, {pipeline_mode = #tpu.pipeline_mode<synchronous>, transform_indices = @transform_5, window_bounds = array<i64: 8, 36>}, {pipeline_mode = #tpu.pipeline_mode<synchronous>, transform_indices = @transform_6, window_bounds = array<i64: 8, 1>}, {pipeline_mode = #tpu.pipeline_mode<synchronous>, transform_indices = @transform_7, window_bounds = array<i64: 4, 36>}, {pipeline_mode = #tpu.pipeline_mode<synchronous>, transform_indices = @transform_8, window_bounds = array<i64: 4, 36>}, {transform_indices = @transform_9, window_bounds = array<i64: 1, 4, 256>}]} {
    %c0 = arith.constant 0 : index
    %c0_0 = arith.constant 0 : index
    %c0_1 = arith.constant 0 : index
    %0 = vector.load %arg1[%c0, %c0_0, %c0_1] : memref<1x4x256xf32, #tpu.memory_space<vmem>>, vector<1x4x256xf32>
    %1 = vector.shape_cast %0 : vector<1x4x256xf32> to vector<4x256xf32>
    %c0_2 = arith.constant 0 : index
    %c0_3 = arith.constant 0 : index
    %c0_4 = arith.constant 0 : index
    %2 = vector.load %arg2[%c0_2, %c0_3, %c0_4] : memref<1x4x256xf32, #tpu.memory_space<vmem>>, vector<1x4x256xf32>
    %3 = vector.shape_cast %2 : vector<1x4x256xf32> to vector<4x256xf32>
    %c0_5 = arith.constant 0 : index
    %c0_6 = arith.constant 0 : index
    %4 = vector.load %arg3[%c0_5, %c0_6] : memref<9x256xf32, #tpu.memory_space<vmem>>, vector<1x256xf32>
    %c1 = arith.constant 1 : index
    %c0_7 = arith.constant 0 : index
    %5 = vector.load %arg3[%c1, %c0_7] : memref<9x256xf32, #tpu.memory_space<vmem>>, vector<1x256xf32>
    %c2 = arith.constant 2 : index
    %c0_8 = arith.constant 0 : index
    %6 = vector.load %arg3[%c2, %c0_8] : memref<9x256xf32, #tpu.memory_space<vmem>>, vector<1x256xf32>
    %c3 = arith.constant 3 : index
    %c0_9 = arith.constant 0 : index
    %7 = vector.load %arg3[%c3, %c0_9] : memref<9x256xf32, #tpu.memory_space<vmem>>, vector<1x256xf32>
    %c5 = arith.constant 5 : index
    %c0_10 = arith.constant 0 : index
    %8 = vector.load %arg3[%c5, %c0_10] : memref<9x256xf32, #tpu.memory_space<vmem>>, vector<1x256xf32>
    %c6 = arith.constant 6 : index
    %c0_11 = arith.constant 0 : index
    %9 = vector.load %arg3[%c6, %c0_11] : memref<9x256xf32, #tpu.memory_space<vmem>>, vector<1x256xf32>
    %c7 = arith.constant 7 : index
    %c0_12 = arith.constant 0 : index
    %10 = vector.load %arg3[%c7, %c0_12] : memref<9x256xf32, #tpu.memory_space<vmem>>, vector<1x256xf32>
    %c8 = arith.constant 8 : index
    %c0_13 = arith.constant 0 : index
    %11 = vector.load %arg3[%c8, %c0_13] : memref<9x256xf32, #tpu.memory_space<vmem>>, vector<1x256xf32>
    %cst = arith.constant dense<0.000000e+00> : vector<4xf32>
    %12 = vector.multi_reduction <add>, %1, %cst [1] : vector<4x256xf32> to vector<4xf32>
    %13 = vector.shape_cast %12 : vector<4xf32> to vector<4x1xf32>
    %cst_14 = arith.constant 3.906250e-03 : f32
    %14 = vector.broadcast %cst_14 : f32 to vector<4x1xf32>
    %15 = arith.mulf %13, %14 : vector<4x1xf32>
    %16 = vector.broadcast %15 : vector<4x1xf32> to vector<4x256xf32>
    %17 = arith.subf %1, %16 : vector<4x256xf32>
    %18 = arith.mulf %17, %17 : vector<4x256xf32>
    %cst_15 = arith.constant dense<0.000000e+00> : vector<4xf32>
    %19 = vector.multi_reduction <add>, %18, %cst_15 [1] : vector<4x256xf32> to vector<4xf32>
    %20 = vector.shape_cast %19 : vector<4xf32> to vector<4x1xf32>
    %cst_16 = arith.constant 2.550000e+02 : f32
    %21 = vector.broadcast %cst_16 : f32 to vector<4x1xf32>
    %22 = arith.divf %20, %21 : vector<4x1xf32>
    %23 = math.sqrt %22 : vector<4x1xf32>
    %cst_17 = arith.constant dense<0.000000e+00> : vector<4xf32>
    %24 = vector.multi_reduction <add>, %3, %cst_17 [1] : vector<4x256xf32> to vector<4xf32>
    %25 = vector.shape_cast %24 : vector<4xf32> to vector<4x1xf32>
    %cst_18 = arith.constant 3.906250e-03 : f32
    %26 = vector.broadcast %cst_18 : f32 to vector<4x1xf32>
    %27 = arith.mulf %25, %26 : vector<4x1xf32>
    %28 = vector.broadcast %27 : vector<4x1xf32> to vector<4x256xf32>
    %29 = arith.subf %3, %28 : vector<4x256xf32>
    %30 = arith.mulf %29, %29 : vector<4x256xf32>
    %cst_19 = arith.constant dense<0.000000e+00> : vector<4xf32>
    %31 = vector.multi_reduction <add>, %30, %cst_19 [1] : vector<4x256xf32> to vector<4xf32>
    %32 = vector.shape_cast %31 : vector<4xf32> to vector<4x1xf32>
    %cst_20 = arith.constant 3.906250e-03 : f32
    %33 = vector.broadcast %cst_20 : f32 to vector<4x1xf32>
    %34 = arith.mulf %32, %33 : vector<4x1xf32>
    %cst_21 = arith.constant 9.99999974E-6 : f32
    %35 = vector.broadcast %cst_21 : f32 to vector<4x1xf32>
    %36 = arith.addf %34, %35 : vector<4x1xf32>
    %37 = math.rsqrt %36 : vector<4x1xf32>
    %38 = vector.broadcast %37 : vector<4x1xf32> to vector<4x256xf32>
    %39 = arith.mulf %29, %38 : vector<4x256xf32>
    %c0_22 = arith.constant 0 : index
    %c0_23 = arith.constant 0 : index
    %40 = vector.load %arg5[%c0_22, %c0_23] : memref<4x1xf32, #tpu.memory_space<vmem>>, vector<4x1xf32>
    %c0_24 = arith.constant 0 : index
    %c0_25 = arith.constant 0 : index
    %41 = vector.load %arg4[%c0_24, %c0_25] : memref<4x72xf32, #tpu.memory_space<vmem>>, vector<4x72xf32>
    %cst_26 = arith.constant 0.000000e+00 : f32
    %42 = vector.broadcast %cst_26 : f32 to vector<4x256xf32>
    %43 = vector.broadcast %40 : vector<4x1xf32> to vector<4x256xf32>
    %44 = arith.addf %42, %43 : vector<4x256xf32>
    %c17_i32 = arith.constant 17 : i32
    %45 = tpu.dynamic_rotate %1 by %c17_i32 dim 1 : vector<4x256xf32>, i32 -> vector<4x256xf32>
    %46 = vector.broadcast %4 : vector<1x256xf32> to vector<4x256xf32>
    %47 = arith.mulf %45, %46 : vector<4x256xf32>
    %48 = vector.extract_strided_slice %41 {offsets = [0, 0], sizes = [4, 1], strides = [1, 1]} : vector<4x72xf32> to vector<4x1xf32>
    %49 = vector.extract_strided_slice %47 {offsets = [0, 0], sizes = [1, 256], strides = [1, 1]} : vector<4x256xf32> to vector<1x256xf32>
    %50 = vector.broadcast %48 : vector<4x1xf32> to vector<4x256xf32>
    %51 = vector.broadcast %49 : vector<1x256xf32> to vector<4x256xf32>
    %52 = arith.mulf %50, %51 : vector<4x256xf32>
    %53 = arith.addf %44, %52 : vector<4x256xf32>
    %54 = vector.extract_strided_slice %41 {offsets = [0, 1], sizes = [4, 1], strides = [1, 1]} : vector<4x72xf32> to vector<4x1xf32>
    %55 = vector.extract_strided_slice %47 {offsets = [1, 0], sizes = [1, 256], strides = [1, 1]} : vector<4x256xf32> to vector<1x256xf32>
    %56 = vector.broadcast %54 : vector<4x1xf32> to vector<4x256xf32>
    %57 = vector.broadcast %55 : vector<1x256xf32> to vector<4x256xf32>
    %58 = arith.mulf %56, %57 : vector<4x256xf32>
    %59 = arith.addf %53, %58 : vector<4x256xf32>
    %60 = vector.extract_strided_slice %41 {offsets = [0, 2], sizes = [4, 1], strides = [1, 1]} : vector<4x72xf32> to vector<4x1xf32>
    %61 = vector.extract_strided_slice %47 {offsets = [2, 0], sizes = [1, 256], strides = [1, 1]} : vector<4x256xf32> to vector<1x256xf32>
    %62 = vector.broadcast %60 : vector<4x1xf32> to vector<4x256xf32>
    %63 = vector.broadcast %61 : vector<1x256xf32> to vector<4x256xf32>
    %64 = arith.mulf %62, %63 : vector<4x256xf32>
    %65 = arith.addf %59, %64 : vector<4x256xf32>
    %66 = vector.extract_strided_slice %41 {offsets = [0, 3], sizes = [4, 1], strides = [1, 1]} : vector<4x72xf32> to vector<4x1xf32>
    %67 = vector.extract_strided_slice %47 {offsets = [3, 0], sizes = [1, 256], strides = [1, 1]} : vector<4x256xf32> to vector<1x256xf32>
    %68 = vector.broadcast %66 : vector<4x1xf32> to vector<4x256xf32>
    %69 = vector.broadcast %67 : vector<1x256xf32> to vector<4x256xf32>
    %70 = arith.mulf %68, %69 : vector<4x256xf32>
    %71 = arith.addf %65, %70 : vector<4x256xf32>
    %c17_i32_27 = arith.constant 17 : i32
    %72 = tpu.dynamic_rotate %3 by %c17_i32_27 dim 1 : vector<4x256xf32>, i32 -> vector<4x256xf32>
    %73 = vector.broadcast %4 : vector<1x256xf32> to vector<4x256xf32>
    %74 = arith.mulf %72, %73 : vector<4x256xf32>
    %75 = vector.extract_strided_slice %41 {offsets = [0, 4], sizes = [4, 1], strides = [1, 1]} : vector<4x72xf32> to vector<4x1xf32>
    %76 = vector.extract_strided_slice %74 {offsets = [0, 0], sizes = [1, 256], strides = [1, 1]} : vector<4x256xf32> to vector<1x256xf32>
    %77 = vector.broadcast %75 : vector<4x1xf32> to vector<4x256xf32>
    %78 = vector.broadcast %76 : vector<1x256xf32> to vector<4x256xf32>
    %79 = arith.mulf %77, %78 : vector<4x256xf32>
    %80 = arith.addf %71, %79 : vector<4x256xf32>
    %81 = vector.extract_strided_slice %41 {offsets = [0, 5], sizes = [4, 1], strides = [1, 1]} : vector<4x72xf32> to vector<4x1xf32>
    %82 = vector.extract_strided_slice %74 {offsets = [1, 0], sizes = [1, 256], strides = [1, 1]} : vector<4x256xf32> to vector<1x256xf32>
    %83 = vector.broadcast %81 : vector<4x1xf32> to vector<4x256xf32>
    %84 = vector.broadcast %82 : vector<1x256xf32> to vector<4x256xf32>
    %85 = arith.mulf %83, %84 : vector<4x256xf32>
    %86 = arith.addf %80, %85 : vector<4x256xf32>
    %87 = vector.extract_strided_slice %41 {offsets = [0, 6], sizes = [4, 1], strides = [1, 1]} : vector<4x72xf32> to vector<4x1xf32>
    %88 = vector.extract_strided_slice %74 {offsets = [2, 0], sizes = [1, 256], strides = [1, 1]} : vector<4x256xf32> to vector<1x256xf32>
    %89 = vector.broadcast %87 : vector<4x1xf32> to vector<4x256xf32>
    %90 = vector.broadcast %88 : vector<1x256xf32> to vector<4x256xf32>
    %91 = arith.mulf %89, %90 : vector<4x256xf32>
    %92 = arith.addf %86, %91 : vector<4x256xf32>
    %93 = vector.extract_strided_slice %41 {offsets = [0, 7], sizes = [4, 1], strides = [1, 1]} : vector<4x72xf32> to vector<4x1xf32>
    %94 = vector.extract_strided_slice %74 {offsets = [3, 0], sizes = [1, 256], strides = [1, 1]} : vector<4x256xf32> to vector<1x256xf32>
    %95 = vector.broadcast %93 : vector<4x1xf32> to vector<4x256xf32>
    %96 = vector.broadcast %94 : vector<1x256xf32> to vector<4x256xf32>
    %97 = arith.mulf %95, %96 : vector<4x256xf32>
    %98 = arith.addf %92, %97 : vector<4x256xf32>
    %c16_i32 = arith.constant 16 : i32
    %99 = tpu.dynamic_rotate %1 by %c16_i32 dim 1 : vector<4x256xf32>, i32 -> vector<4x256xf32>
    %100 = vector.broadcast %5 : vector<1x256xf32> to vector<4x256xf32>
    %101 = arith.mulf %99, %100 : vector<4x256xf32>
    %102 = vector.extract_strided_slice %41 {offsets = [0, 8], sizes = [4, 1], strides = [1, 1]} : vector<4x72xf32> to vector<4x1xf32>
    %103 = vector.extract_strided_slice %101 {offsets = [0, 0], sizes = [1, 256], strides = [1, 1]} : vector<4x256xf32> to vector<1x256xf32>
    %104 = vector.broadcast %102 : vector<4x1xf32> to vector<4x256xf32>
    %105 = vector.broadcast %103 : vector<1x256xf32> to vector<4x256xf32>
    %106 = arith.mulf %104, %105 : vector<4x256xf32>
    %107 = arith.addf %98, %106 : vector<4x256xf32>
    %108 = vector.extract_strided_slice %41 {offsets = [0, 9], sizes = [4, 1], strides = [1, 1]} : vector<4x72xf32> to vector<4x1xf32>
    %109 = vector.extract_strided_slice %101 {offsets = [1, 0], sizes = [1, 256], strides = [1, 1]} : vector<4x256xf32> to vector<1x256xf32>
    %110 = vector.broadcast %108 : vector<4x1xf32> to vector<4x256xf32>
    %111 = vector.broadcast %109 : vector<1x256xf32> to vector<4x256xf32>
    %112 = arith.mulf %110, %111 : vector<4x256xf32>
    %113 = arith.addf %107, %112 : vector<4x256xf32>
    %114 = vector.extract_strided_slice %41 {offsets = [0, 10], sizes = [4, 1], strides = [1, 1]} : vector<4x72xf32> to vector<4x1xf32>
    %115 = vector.extract_strided_slice %101 {offsets = [2, 0], sizes = [1, 256], strides = [1, 1]} : vector<4x256xf32> to vector<1x256xf32>
    %116 = vector.broadcast %114 : vector<4x1xf32> to vector<4x256xf32>
    %117 = vector.broadcast %115 : vector<1x256xf32> to vector<4x256xf32>
    %118 = arith.mulf %116, %117 : vector<4x256xf32>
    %119 = arith.addf %113, %118 : vector<4x256xf32>
    %120 = vector.extract_strided_slice %41 {offsets = [0, 11], sizes = [4, 1], strides = [1, 1]} : vector<4x72xf32> to vector<4x1xf32>
    %121 = vector.extract_strided_slice %101 {offsets = [3, 0], sizes = [1, 256], strides = [1, 1]} : vector<4x256xf32> to vector<1x256xf32>
    %122 = vector.broadcast %120 : vector<4x1xf32> to vector<4x256xf32>
    %123 = vector.broadcast %121 : vector<1x256xf32> to vector<4x256xf32>
    %124 = arith.mulf %122, %123 : vector<4x256xf32>
    %125 = arith.addf %119, %124 : vector<4x256xf32>
    %c16_i32_28 = arith.constant 16 : i32
    %126 = tpu.dynamic_rotate %3 by %c16_i32_28 dim 1 : vector<4x256xf32>, i32 -> vector<4x256xf32>
    %127 = vector.broadcast %5 : vector<1x256xf32> to vector<4x256xf32>
    %128 = arith.mulf %126, %127 : vector<4x256xf32>
    %129 = vector.extract_strided_slice %41 {offsets = [0, 12], sizes = [4, 1], strides = [1, 1]} : vector<4x72xf32> to vector<4x1xf32>
    %130 = vector.extract_strided_slice %128 {offsets = [0, 0], sizes = [1, 256], strides = [1, 1]} : vector<4x256xf32> to vector<1x256xf32>
    %131 = vector.broadcast %129 : vector<4x1xf32> to vector<4x256xf32>
    %132 = vector.broadcast %130 : vector<1x256xf32> to vector<4x256xf32>
    %133 = arith.mulf %131, %132 : vector<4x256xf32>
    %134 = arith.addf %125, %133 : vector<4x256xf32>
    %135 = vector.extract_strided_slice %41 {offsets = [0, 13], sizes = [4, 1], strides = [1, 1]} : vector<4x72xf32> to vector<4x1xf32>
    %136 = vector.extract_strided_slice %128 {offsets = [1, 0], sizes = [1, 256], strides = [1, 1]} : vector<4x256xf32> to vector<1x256xf32>
    %137 = vector.broadcast %135 : vector<4x1xf32> to vector<4x256xf32>
    %138 = vector.broadcast %136 : vector<1x256xf32> to vector<4x256xf32>
    %139 = arith.mulf %137, %138 : vector<4x256xf32>
    %140 = arith.addf %134, %139 : vector<4x256xf32>
    %141 = vector.extract_strided_slice %41 {offsets = [0, 14], sizes = [4, 1], strides = [1, 1]} : vector<4x72xf32> to vector<4x1xf32>
    %142 = vector.extract_strided_slice %128 {offsets = [2, 0], sizes = [1, 256], strides = [1, 1]} : vector<4x256xf32> to vector<1x256xf32>
    %143 = vector.broadcast %141 : vector<4x1xf32> to vector<4x256xf32>
    %144 = vector.broadcast %142 : vector<1x256xf32> to vector<4x256xf32>
    %145 = arith.mulf %143, %144 : vector<4x256xf32>
    %146 = arith.addf %140, %145 : vector<4x256xf32>
    %147 = vector.extract_strided_slice %41 {offsets = [0, 15], sizes = [4, 1], strides = [1, 1]} : vector<4x72xf32> to vector<4x1xf32>
    %148 = vector.extract_strided_slice %128 {offsets = [3, 0], sizes = [1, 256], strides = [1, 1]} : vector<4x256xf32> to vector<1x256xf32>
    %149 = vector.broadcast %147 : vector<4x1xf32> to vector<4x256xf32>
    %150 = vector.broadcast %148 : vector<1x256xf32> to vector<4x256xf32>
    %151 = arith.mulf %149, %150 : vector<4x256xf32>
    %152 = arith.addf %146, %151 : vector<4x256xf32>
    %c15_i32 = arith.constant 15 : i32
    %153 = tpu.dynamic_rotate %1 by %c15_i32 dim 1 : vector<4x256xf32>, i32 -> vector<4x256xf32>
    %154 = vector.broadcast %6 : vector<1x256xf32> to vector<4x256xf32>
    %155 = arith.mulf %153, %154 : vector<4x256xf32>
    %156 = vector.extract_strided_slice %41 {offsets = [0, 16], sizes = [4, 1], strides = [1, 1]} : vector<4x72xf32> to vector<4x1xf32>
    %157 = vector.extract_strided_slice %155 {offsets = [0, 0], sizes = [1, 256], strides = [1, 1]} : vector<4x256xf32> to vector<1x256xf32>
    %158 = vector.broadcast %156 : vector<4x1xf32> to vector<4x256xf32>
    %159 = vector.broadcast %157 : vector<1x256xf32> to vector<4x256xf32>
    %160 = arith.mulf %158, %159 : vector<4x256xf32>
    %161 = arith.addf %152, %160 : vector<4x256xf32>
    %162 = vector.extract_strided_slice %41 {offsets = [0, 17], sizes = [4, 1], strides = [1, 1]} : vector<4x72xf32> to vector<4x1xf32>
    %163 = vector.extract_strided_slice %155 {offsets = [1, 0], sizes = [1, 256], strides = [1, 1]} : vector<4x256xf32> to vector<1x256xf32>
    %164 = vector.broadcast %162 : vector<4x1xf32> to vector<4x256xf32>
    %165 = vector.broadcast %163 : vector<1x256xf32> to vector<4x256xf32>
    %166 = arith.mulf %164, %165 : vector<4x256xf32>
    %167 = arith.addf %161, %166 : vector<4x256xf32>
    %168 = vector.extract_strided_slice %41 {offsets = [0, 18], sizes = [4, 1], strides = [1, 1]} : vector<4x72xf32> to vector<4x1xf32>
    %169 = vector.extract_strided_slice %155 {offsets = [2, 0], sizes = [1, 256], strides = [1, 1]} : vector<4x256xf32> to vector<1x256xf32>
    %170 = vector.broadcast %168 : vector<4x1xf32> to vector<4x256xf32>
    %171 = vector.broadcast %169 : vector<1x256xf32> to vector<4x256xf32>
    %172 = arith.mulf %170, %171 : vector<4x256xf32>
    %173 = arith.addf %167, %172 : vector<4x256xf32>
    %174 = vector.extract_strided_slice %41 {offsets = [0, 19], sizes = [4, 1], strides = [1, 1]} : vector<4x72xf32> to vector<4x1xf32>
    %175 = vector.extract_strided_slice %155 {offsets = [3, 0], sizes = [1, 256], strides = [1, 1]} : vector<4x256xf32> to vector<1x256xf32>
    %176 = vector.broadcast %174 : vector<4x1xf32> to vector<4x256xf32>
    %177 = vector.broadcast %175 : vector<1x256xf32> to vector<4x256xf32>
    %178 = arith.mulf %176, %177 : vector<4x256xf32>
    %179 = arith.addf %173, %178 : vector<4x256xf32>
    %c15_i32_29 = arith.constant 15 : i32
    %180 = tpu.dynamic_rotate %3 by %c15_i32_29 dim 1 : vector<4x256xf32>, i32 -> vector<4x256xf32>
    %181 = vector.broadcast %6 : vector<1x256xf32> to vector<4x256xf32>
    %182 = arith.mulf %180, %181 : vector<4x256xf32>
    %183 = vector.extract_strided_slice %41 {offsets = [0, 20], sizes = [4, 1], strides = [1, 1]} : vector<4x72xf32> to vector<4x1xf32>
    %184 = vector.extract_strided_slice %182 {offsets = [0, 0], sizes = [1, 256], strides = [1, 1]} : vector<4x256xf32> to vector<1x256xf32>
    %185 = vector.broadcast %183 : vector<4x1xf32> to vector<4x256xf32>
    %186 = vector.broadcast %184 : vector<1x256xf32> to vector<4x256xf32>
    %187 = arith.mulf %185, %186 : vector<4x256xf32>
    %188 = arith.addf %179, %187 : vector<4x256xf32>
    %189 = vector.extract_strided_slice %41 {offsets = [0, 21], sizes = [4, 1], strides = [1, 1]} : vector<4x72xf32> to vector<4x1xf32>
    %190 = vector.extract_strided_slice %182 {offsets = [1, 0], sizes = [1, 256], strides = [1, 1]} : vector<4x256xf32> to vector<1x256xf32>
    %191 = vector.broadcast %189 : vector<4x1xf32> to vector<4x256xf32>
    %192 = vector.broadcast %190 : vector<1x256xf32> to vector<4x256xf32>
    %193 = arith.mulf %191, %192 : vector<4x256xf32>
    %194 = arith.addf %188, %193 : vector<4x256xf32>
    %195 = vector.extract_strided_slice %41 {offsets = [0, 22], sizes = [4, 1], strides = [1, 1]} : vector<4x72xf32> to vector<4x1xf32>
    %196 = vector.extract_strided_slice %182 {offsets = [2, 0], sizes = [1, 256], strides = [1, 1]} : vector<4x256xf32> to vector<1x256xf32>
    %197 = vector.broadcast %195 : vector<4x1xf32> to vector<4x256xf32>
    %198 = vector.broadcast %196 : vector<1x256xf32> to vector<4x256xf32>
    %199 = arith.mulf %197, %198 : vector<4x256xf32>
    %200 = arith.addf %194, %199 : vector<4x256xf32>
    %201 = vector.extract_strided_slice %41 {offsets = [0, 23], sizes = [4, 1], strides = [1, 1]} : vector<4x72xf32> to vector<4x1xf32>
    %202 = vector.extract_strided_slice %182 {offsets = [3, 0], sizes = [1, 256], strides = [1, 1]} : vector<4x256xf32> to vector<1x256xf32>
    %203 = vector.broadcast %201 : vector<4x1xf32> to vector<4x256xf32>
    %204 = vector.broadcast %202 : vector<1x256xf32> to vector<4x256xf32>
    %205 = arith.mulf %203, %204 : vector<4x256xf32>
    %206 = arith.addf %200, %205 : vector<4x256xf32>
    %c1_i32 = arith.constant 1 : i32
    %207 = tpu.dynamic_rotate %1 by %c1_i32 dim 1 : vector<4x256xf32>, i32 -> vector<4x256xf32>
    %208 = vector.broadcast %7 : vector<1x256xf32> to vector<4x256xf32>
    %209 = arith.mulf %207, %208 : vector<4x256xf32>
    %210 = vector.extract_strided_slice %41 {offsets = [0, 24], sizes = [4, 1], strides = [1, 1]} : vector<4x72xf32> to vector<4x1xf32>
    %211 = vector.extract_strided_slice %209 {offsets = [0, 0], sizes = [1, 256], strides = [1, 1]} : vector<4x256xf32> to vector<1x256xf32>
    %212 = vector.broadcast %210 : vector<4x1xf32> to vector<4x256xf32>
    %213 = vector.broadcast %211 : vector<1x256xf32> to vector<4x256xf32>
    %214 = arith.mulf %212, %213 : vector<4x256xf32>
    %215 = arith.addf %206, %214 : vector<4x256xf32>
    %216 = vector.extract_strided_slice %41 {offsets = [0, 25], sizes = [4, 1], strides = [1, 1]} : vector<4x72xf32> to vector<4x1xf32>
    %217 = vector.extract_strided_slice %209 {offsets = [1, 0], sizes = [1, 256], strides = [1, 1]} : vector<4x256xf32> to vector<1x256xf32>
    %218 = vector.broadcast %216 : vector<4x1xf32> to vector<4x256xf32>
    %219 = vector.broadcast %217 : vector<1x256xf32> to vector<4x256xf32>
    %220 = arith.mulf %218, %219 : vector<4x256xf32>
    %221 = arith.addf %215, %220 : vector<4x256xf32>
    %222 = vector.extract_strided_slice %41 {offsets = [0, 26], sizes = [4, 1], strides = [1, 1]} : vector<4x72xf32> to vector<4x1xf32>
    %223 = vector.extract_strided_slice %209 {offsets = [2, 0], sizes = [1, 256], strides = [1, 1]} : vector<4x256xf32> to vector<1x256xf32>
    %224 = vector.broadcast %222 : vector<4x1xf32> to vector<4x256xf32>
    %225 = vector.broadcast %223 : vector<1x256xf32> to vector<4x256xf32>
    %226 = arith.mulf %224, %225 : vector<4x256xf32>
    %227 = arith.addf %221, %226 : vector<4x256xf32>
    %228 = vector.extract_strided_slice %41 {offsets = [0, 27], sizes = [4, 1], strides = [1, 1]} : vector<4x72xf32> to vector<4x1xf32>
    %229 = vector.extract_strided_slice %209 {offsets = [3, 0], sizes = [1, 256], strides = [1, 1]} : vector<4x256xf32> to vector<1x256xf32>
    %230 = vector.broadcast %228 : vector<4x1xf32> to vector<4x256xf32>
    %231 = vector.broadcast %229 : vector<1x256xf32> to vector<4x256xf32>
    %232 = arith.mulf %230, %231 : vector<4x256xf32>
    %233 = arith.addf %227, %232 : vector<4x256xf32>
    %c1_i32_30 = arith.constant 1 : i32
    %234 = tpu.dynamic_rotate %3 by %c1_i32_30 dim 1 : vector<4x256xf32>, i32 -> vector<4x256xf32>
    %235 = vector.broadcast %7 : vector<1x256xf32> to vector<4x256xf32>
    %236 = arith.mulf %234, %235 : vector<4x256xf32>
    %237 = vector.extract_strided_slice %41 {offsets = [0, 28], sizes = [4, 1], strides = [1, 1]} : vector<4x72xf32> to vector<4x1xf32>
    %238 = vector.extract_strided_slice %236 {offsets = [0, 0], sizes = [1, 256], strides = [1, 1]} : vector<4x256xf32> to vector<1x256xf32>
    %239 = vector.broadcast %237 : vector<4x1xf32> to vector<4x256xf32>
    %240 = vector.broadcast %238 : vector<1x256xf32> to vector<4x256xf32>
    %241 = arith.mulf %239, %240 : vector<4x256xf32>
    %242 = arith.addf %233, %241 : vector<4x256xf32>
    %243 = vector.extract_strided_slice %41 {offsets = [0, 29], sizes = [4, 1], strides = [1, 1]} : vector<4x72xf32> to vector<4x1xf32>
    %244 = vector.extract_strided_slice %236 {offsets = [1, 0], sizes = [1, 256], strides = [1, 1]} : vector<4x256xf32> to vector<1x256xf32>
    %245 = vector.broadcast %243 : vector<4x1xf32> to vector<4x256xf32>
    %246 = vector.broadcast %244 : vector<1x256xf32> to vector<4x256xf32>
    %247 = arith.mulf %245, %246 : vector<4x256xf32>
    %248 = arith.addf %242, %247 : vector<4x256xf32>
    %249 = vector.extract_strided_slice %41 {offsets = [0, 30], sizes = [4, 1], strides = [1, 1]} : vector<4x72xf32> to vector<4x1xf32>
    %250 = vector.extract_strided_slice %236 {offsets = [2, 0], sizes = [1, 256], strides = [1, 1]} : vector<4x256xf32> to vector<1x256xf32>
    %251 = vector.broadcast %249 : vector<4x1xf32> to vector<4x256xf32>
    %252 = vector.broadcast %250 : vector<1x256xf32> to vector<4x256xf32>
    %253 = arith.mulf %251, %252 : vector<4x256xf32>
    %254 = arith.addf %248, %253 : vector<4x256xf32>
    %255 = vector.extract_strided_slice %41 {offsets = [0, 31], sizes = [4, 1], strides = [1, 1]} : vector<4x72xf32> to vector<4x1xf32>
    %256 = vector.extract_strided_slice %236 {offsets = [3, 0], sizes = [1, 256], strides = [1, 1]} : vector<4x256xf32> to vector<1x256xf32>
    %257 = vector.broadcast %255 : vector<4x1xf32> to vector<4x256xf32>
    %258 = vector.broadcast %256 : vector<1x256xf32> to vector<4x256xf32>
    %259 = arith.mulf %257, %258 : vector<4x256xf32>
    %260 = arith.addf %254, %259 : vector<4x256xf32>
    %261 = vector.extract_strided_slice %41 {offsets = [0, 32], sizes = [4, 1], strides = [1, 1]} : vector<4x72xf32> to vector<4x1xf32>
    %262 = vector.extract_strided_slice %1 {offsets = [0, 0], sizes = [1, 256], strides = [1, 1]} : vector<4x256xf32> to vector<1x256xf32>
    %263 = vector.broadcast %261 : vector<4x1xf32> to vector<4x256xf32>
    %264 = vector.broadcast %262 : vector<1x256xf32> to vector<4x256xf32>
    %265 = arith.mulf %263, %264 : vector<4x256xf32>
    %266 = arith.addf %260, %265 : vector<4x256xf32>
    %267 = vector.extract_strided_slice %41 {offsets = [0, 33], sizes = [4, 1], strides = [1, 1]} : vector<4x72xf32> to vector<4x1xf32>
    %268 = vector.extract_strided_slice %1 {offsets = [1, 0], sizes = [1, 256], strides = [1, 1]} : vector<4x256xf32> to vector<1x256xf32>
    %269 = vector.broadcast %267 : vector<4x1xf32> to vector<4x256xf32>
    %270 = vector.broadcast %268 : vector<1x256xf32> to vector<4x256xf32>
    %271 = arith.mulf %269, %270 : vector<4x256xf32>
    %272 = arith.addf %266, %271 : vector<4x256xf32>
    %273 = vector.extract_strided_slice %41 {offsets = [0, 34], sizes = [4, 1], strides = [1, 1]} : vector<4x72xf32> to vector<4x1xf32>
    %274 = vector.extract_strided_slice %1 {offsets = [2, 0], sizes = [1, 256], strides = [1, 1]} : vector<4x256xf32> to vector<1x256xf32>
    %275 = vector.broadcast %273 : vector<4x1xf32> to vector<4x256xf32>
    %276 = vector.broadcast %274 : vector<1x256xf32> to vector<4x256xf32>
    %277 = arith.mulf %275, %276 : vector<4x256xf32>
    %278 = arith.addf %272, %277 : vector<4x256xf32>
    %279 = vector.extract_strided_slice %41 {offsets = [0, 35], sizes = [4, 1], strides = [1, 1]} : vector<4x72xf32> to vector<4x1xf32>
    %280 = vector.extract_strided_slice %1 {offsets = [3, 0], sizes = [1, 256], strides = [1, 1]} : vector<4x256xf32> to vector<1x256xf32>
    %281 = vector.broadcast %279 : vector<4x1xf32> to vector<4x256xf32>
    %282 = vector.broadcast %280 : vector<1x256xf32> to vector<4x256xf32>
    %283 = arith.mulf %281, %282 : vector<4x256xf32>
    %284 = arith.addf %278, %283 : vector<4x256xf32>
    %285 = vector.extract_strided_slice %41 {offsets = [0, 36], sizes = [4, 1], strides = [1, 1]} : vector<4x72xf32> to vector<4x1xf32>
    %286 = vector.extract_strided_slice %3 {offsets = [0, 0], sizes = [1, 256], strides = [1, 1]} : vector<4x256xf32> to vector<1x256xf32>
    %287 = vector.broadcast %285 : vector<4x1xf32> to vector<4x256xf32>
    %288 = vector.broadcast %286 : vector<1x256xf32> to vector<4x256xf32>
    %289 = arith.mulf %287, %288 : vector<4x256xf32>
    %290 = arith.addf %284, %289 : vector<4x256xf32>
    %291 = vector.extract_strided_slice %41 {offsets = [0, 37], sizes = [4, 1], strides = [1, 1]} : vector<4x72xf32> to vector<4x1xf32>
    %292 = vector.extract_strided_slice %3 {offsets = [1, 0], sizes = [1, 256], strides = [1, 1]} : vector<4x256xf32> to vector<1x256xf32>
    %293 = vector.broadcast %291 : vector<4x1xf32> to vector<4x256xf32>
    %294 = vector.broadcast %292 : vector<1x256xf32> to vector<4x256xf32>
    %295 = arith.mulf %293, %294 : vector<4x256xf32>
    %296 = arith.addf %290, %295 : vector<4x256xf32>
    %297 = vector.extract_strided_slice %41 {offsets = [0, 38], sizes = [4, 1], strides = [1, 1]} : vector<4x72xf32> to vector<4x1xf32>
    %298 = vector.extract_strided_slice %3 {offsets = [2, 0], sizes = [1, 256], strides = [1, 1]} : vector<4x256xf32> to vector<1x256xf32>
    %299 = vector.broadcast %297 : vector<4x1xf32> to vector<4x256xf32>
    %300 = vector.broadcast %298 : vector<1x256xf32> to vector<4x256xf32>
    %301 = arith.mulf %299, %300 : vector<4x256xf32>
    %302 = arith.addf %296, %301 : vector<4x256xf32>
    %303 = vector.extract_strided_slice %41 {offsets = [0, 39], sizes = [4, 1], strides = [1, 1]} : vector<4x72xf32> to vector<4x1xf32>
    %304 = vector.extract_strided_slice %3 {offsets = [3, 0], sizes = [1, 256], strides = [1, 1]} : vector<4x256xf32> to vector<1x256xf32>
    %305 = vector.broadcast %303 : vector<4x1xf32> to vector<4x256xf32>
    %306 = vector.broadcast %304 : vector<1x256xf32> to vector<4x256xf32>
    %307 = arith.mulf %305, %306 : vector<4x256xf32>
    %308 = arith.addf %302, %307 : vector<4x256xf32>
    %c255_i32 = arith.constant 255 : i32
    %309 = tpu.dynamic_rotate %1 by %c255_i32 dim 1 : vector<4x256xf32>, i32 -> vector<4x256xf32>
    %310 = vector.broadcast %8 : vector<1x256xf32> to vector<4x256xf32>
    %311 = arith.mulf %309, %310 : vector<4x256xf32>
    %312 = vector.extract_strided_slice %41 {offsets = [0, 40], sizes = [4, 1], strides = [1, 1]} : vector<4x72xf32> to vector<4x1xf32>
    %313 = vector.extract_strided_slice %311 {offsets = [0, 0], sizes = [1, 256], strides = [1, 1]} : vector<4x256xf32> to vector<1x256xf32>
    %314 = vector.broadcast %312 : vector<4x1xf32> to vector<4x256xf32>
    %315 = vector.broadcast %313 : vector<1x256xf32> to vector<4x256xf32>
    %316 = arith.mulf %314, %315 : vector<4x256xf32>
    %317 = arith.addf %308, %316 : vector<4x256xf32>
    %318 = vector.extract_strided_slice %41 {offsets = [0, 41], sizes = [4, 1], strides = [1, 1]} : vector<4x72xf32> to vector<4x1xf32>
    %319 = vector.extract_strided_slice %311 {offsets = [1, 0], sizes = [1, 256], strides = [1, 1]} : vector<4x256xf32> to vector<1x256xf32>
    %320 = vector.broadcast %318 : vector<4x1xf32> to vector<4x256xf32>
    %321 = vector.broadcast %319 : vector<1x256xf32> to vector<4x256xf32>
    %322 = arith.mulf %320, %321 : vector<4x256xf32>
    %323 = arith.addf %317, %322 : vector<4x256xf32>
    %324 = vector.extract_strided_slice %41 {offsets = [0, 42], sizes = [4, 1], strides = [1, 1]} : vector<4x72xf32> to vector<4x1xf32>
    %325 = vector.extract_strided_slice %311 {offsets = [2, 0], sizes = [1, 256], strides = [1, 1]} : vector<4x256xf32> to vector<1x256xf32>
    %326 = vector.broadcast %324 : vector<4x1xf32> to vector<4x256xf32>
    %327 = vector.broadcast %325 : vector<1x256xf32> to vector<4x256xf32>
    %328 = arith.mulf %326, %327 : vector<4x256xf32>
    %329 = arith.addf %323, %328 : vector<4x256xf32>
    %330 = vector.extract_strided_slice %41 {offsets = [0, 43], sizes = [4, 1], strides = [1, 1]} : vector<4x72xf32> to vector<4x1xf32>
    %331 = vector.extract_strided_slice %311 {offsets = [3, 0], sizes = [1, 256], strides = [1, 1]} : vector<4x256xf32> to vector<1x256xf32>
    %332 = vector.broadcast %330 : vector<4x1xf32> to vector<4x256xf32>
    %333 = vector.broadcast %331 : vector<1x256xf32> to vector<4x256xf32>
    %334 = arith.mulf %332, %333 : vector<4x256xf32>
    %335 = arith.addf %329, %334 : vector<4x256xf32>
    %c255_i32_31 = arith.constant 255 : i32
    %336 = tpu.dynamic_rotate %3 by %c255_i32_31 dim 1 : vector<4x256xf32>, i32 -> vector<4x256xf32>
    %337 = vector.broadcast %8 : vector<1x256xf32> to vector<4x256xf32>
    %338 = arith.mulf %336, %337 : vector<4x256xf32>
    %339 = vector.extract_strided_slice %41 {offsets = [0, 44], sizes = [4, 1], strides = [1, 1]} : vector<4x72xf32> to vector<4x1xf32>
    %340 = vector.extract_strided_slice %338 {offsets = [0, 0], sizes = [1, 256], strides = [1, 1]} : vector<4x256xf32> to vector<1x256xf32>
    %341 = vector.broadcast %339 : vector<4x1xf32> to vector<4x256xf32>
    %342 = vector.broadcast %340 : vector<1x256xf32> to vector<4x256xf32>
    %343 = arith.mulf %341, %342 : vector<4x256xf32>
    %344 = arith.addf %335, %343 : vector<4x256xf32>
    %345 = vector.extract_strided_slice %41 {offsets = [0, 45], sizes = [4, 1], strides = [1, 1]} : vector<4x72xf32> to vector<4x1xf32>
    %346 = vector.extract_strided_slice %338 {offsets = [1, 0], sizes = [1, 256], strides = [1, 1]} : vector<4x256xf32> to vector<1x256xf32>
    %347 = vector.broadcast %345 : vector<4x1xf32> to vector<4x256xf32>
    %348 = vector.broadcast %346 : vector<1x256xf32> to vector<4x256xf32>
    %349 = arith.mulf %347, %348 : vector<4x256xf32>
    %350 = arith.addf %344, %349 : vector<4x256xf32>
    %351 = vector.extract_strided_slice %41 {offsets = [0, 46], sizes = [4, 1], strides = [1, 1]} : vector<4x72xf32> to vector<4x1xf32>
    %352 = vector.extract_strided_slice %338 {offsets = [2, 0], sizes = [1, 256], strides = [1, 1]} : vector<4x256xf32> to vector<1x256xf32>
    %353 = vector.broadcast %351 : vector<4x1xf32> to vector<4x256xf32>
    %354 = vector.broadcast %352 : vector<1x256xf32> to vector<4x256xf32>
    %355 = arith.mulf %353, %354 : vector<4x256xf32>
    %356 = arith.addf %350, %355 : vector<4x256xf32>
    %357 = vector.extract_strided_slice %41 {offsets = [0, 47], sizes = [4, 1], strides = [1, 1]} : vector<4x72xf32> to vector<4x1xf32>
    %358 = vector.extract_strided_slice %338 {offsets = [3, 0], sizes = [1, 256], strides = [1, 1]} : vector<4x256xf32> to vector<1x256xf32>
    %359 = vector.broadcast %357 : vector<4x1xf32> to vector<4x256xf32>
    %360 = vector.broadcast %358 : vector<1x256xf32> to vector<4x256xf32>
    %361 = arith.mulf %359, %360 : vector<4x256xf32>
    %362 = arith.addf %356, %361 : vector<4x256xf32>
    %c241_i32 = arith.constant 241 : i32
    %363 = tpu.dynamic_rotate %1 by %c241_i32 dim 1 : vector<4x256xf32>, i32 -> vector<4x256xf32>
    %364 = vector.broadcast %9 : vector<1x256xf32> to vector<4x256xf32>
    %365 = arith.mulf %363, %364 : vector<4x256xf32>
    %366 = vector.extract_strided_slice %41 {offsets = [0, 48], sizes = [4, 1], strides = [1, 1]} : vector<4x72xf32> to vector<4x1xf32>
    %367 = vector.extract_strided_slice %365 {offsets = [0, 0], sizes = [1, 256], strides = [1, 1]} : vector<4x256xf32> to vector<1x256xf32>
    %368 = vector.broadcast %366 : vector<4x1xf32> to vector<4x256xf32>
    %369 = vector.broadcast %367 : vector<1x256xf32> to vector<4x256xf32>
    %370 = arith.mulf %368, %369 : vector<4x256xf32>
    %371 = arith.addf %362, %370 : vector<4x256xf32>
    %372 = vector.extract_strided_slice %41 {offsets = [0, 49], sizes = [4, 1], strides = [1, 1]} : vector<4x72xf32> to vector<4x1xf32>
    %373 = vector.extract_strided_slice %365 {offsets = [1, 0], sizes = [1, 256], strides = [1, 1]} : vector<4x256xf32> to vector<1x256xf32>
    %374 = vector.broadcast %372 : vector<4x1xf32> to vector<4x256xf32>
    %375 = vector.broadcast %373 : vector<1x256xf32> to vector<4x256xf32>
    %376 = arith.mulf %374, %375 : vector<4x256xf32>
    %377 = arith.addf %371, %376 : vector<4x256xf32>
    %378 = vector.extract_strided_slice %41 {offsets = [0, 50], sizes = [4, 1], strides = [1, 1]} : vector<4x72xf32> to vector<4x1xf32>
    %379 = vector.extract_strided_slice %365 {offsets = [2, 0], sizes = [1, 256], strides = [1, 1]} : vector<4x256xf32> to vector<1x256xf32>
    %380 = vector.broadcast %378 : vector<4x1xf32> to vector<4x256xf32>
    %381 = vector.broadcast %379 : vector<1x256xf32> to vector<4x256xf32>
    %382 = arith.mulf %380, %381 : vector<4x256xf32>
    %383 = arith.addf %377, %382 : vector<4x256xf32>
    %384 = vector.extract_strided_slice %41 {offsets = [0, 51], sizes = [4, 1], strides = [1, 1]} : vector<4x72xf32> to vector<4x1xf32>
    %385 = vector.extract_strided_slice %365 {offsets = [3, 0], sizes = [1, 256], strides = [1, 1]} : vector<4x256xf32> to vector<1x256xf32>
    %386 = vector.broadcast %384 : vector<4x1xf32> to vector<4x256xf32>
    %387 = vector.broadcast %385 : vector<1x256xf32> to vector<4x256xf32>
    %388 = arith.mulf %386, %387 : vector<4x256xf32>
    %389 = arith.addf %383, %388 : vector<4x256xf32>
    %c241_i32_32 = arith.constant 241 : i32
    %390 = tpu.dynamic_rotate %3 by %c241_i32_32 dim 1 : vector<4x256xf32>, i32 -> vector<4x256xf32>
    %391 = vector.broadcast %9 : vector<1x256xf32> to vector<4x256xf32>
    %392 = arith.mulf %390, %391 : vector<4x256xf32>
    %393 = vector.extract_strided_slice %41 {offsets = [0, 52], sizes = [4, 1], strides = [1, 1]} : vector<4x72xf32> to vector<4x1xf32>
    %394 = vector.extract_strided_slice %392 {offsets = [0, 0], sizes = [1, 256], strides = [1, 1]} : vector<4x256xf32> to vector<1x256xf32>
    %395 = vector.broadcast %393 : vector<4x1xf32> to vector<4x256xf32>
    %396 = vector.broadcast %394 : vector<1x256xf32> to vector<4x256xf32>
    %397 = arith.mulf %395, %396 : vector<4x256xf32>
    %398 = arith.addf %389, %397 : vector<4x256xf32>
    %399 = vector.extract_strided_slice %41 {offsets = [0, 53], sizes = [4, 1], strides = [1, 1]} : vector<4x72xf32> to vector<4x1xf32>
    %400 = vector.extract_strided_slice %392 {offsets = [1, 0], sizes = [1, 256], strides = [1, 1]} : vector<4x256xf32> to vector<1x256xf32>
    %401 = vector.broadcast %399 : vector<4x1xf32> to vector<4x256xf32>
    %402 = vector.broadcast %400 : vector<1x256xf32> to vector<4x256xf32>
    %403 = arith.mulf %401, %402 : vector<4x256xf32>
    %404 = arith.addf %398, %403 : vector<4x256xf32>
    %405 = vector.extract_strided_slice %41 {offsets = [0, 54], sizes = [4, 1], strides = [1, 1]} : vector<4x72xf32> to vector<4x1xf32>
    %406 = vector.extract_strided_slice %392 {offsets = [2, 0], sizes = [1, 256], strides = [1, 1]} : vector<4x256xf32> to vector<1x256xf32>
    %407 = vector.broadcast %405 : vector<4x1xf32> to vector<4x256xf32>
    %408 = vector.broadcast %406 : vector<1x256xf32> to vector<4x256xf32>
    %409 = arith.mulf %407, %408 : vector<4x256xf32>
    %410 = arith.addf %404, %409 : vector<4x256xf32>
    %411 = vector.extract_strided_slice %41 {offsets = [0, 55], sizes = [4, 1], strides = [1, 1]} : vector<4x72xf32> to vector<4x1xf32>
    %412 = vector.extract_strided_slice %392 {offsets = [3, 0], sizes = [1, 256], strides = [1, 1]} : vector<4x256xf32> to vector<1x256xf32>
    %413 = vector.broadcast %411 : vector<4x1xf32> to vector<4x256xf32>
    %414 = vector.broadcast %412 : vector<1x256xf32> to vector<4x256xf32>
    %415 = arith.mulf %413, %414 : vector<4x256xf32>
    %416 = arith.addf %410, %415 : vector<4x256xf32>
    %c240_i32 = arith.constant 240 : i32
    %417 = tpu.dynamic_rotate %1 by %c240_i32 dim 1 : vector<4x256xf32>, i32 -> vector<4x256xf32>
    %418 = vector.broadcast %10 : vector<1x256xf32> to vector<4x256xf32>
    %419 = arith.mulf %417, %418 : vector<4x256xf32>
    %420 = vector.extract_strided_slice %41 {offsets = [0, 56], sizes = [4, 1], strides = [1, 1]} : vector<4x72xf32> to vector<4x1xf32>
    %421 = vector.extract_strided_slice %419 {offsets = [0, 0], sizes = [1, 256], strides = [1, 1]} : vector<4x256xf32> to vector<1x256xf32>
    %422 = vector.broadcast %420 : vector<4x1xf32> to vector<4x256xf32>
    %423 = vector.broadcast %421 : vector<1x256xf32> to vector<4x256xf32>
    %424 = arith.mulf %422, %423 : vector<4x256xf32>
    %425 = arith.addf %416, %424 : vector<4x256xf32>
    %426 = vector.extract_strided_slice %41 {offsets = [0, 57], sizes = [4, 1], strides = [1, 1]} : vector<4x72xf32> to vector<4x1xf32>
    %427 = vector.extract_strided_slice %419 {offsets = [1, 0], sizes = [1, 256], strides = [1, 1]} : vector<4x256xf32> to vector<1x256xf32>
    %428 = vector.broadcast %426 : vector<4x1xf32> to vector<4x256xf32>
    %429 = vector.broadcast %427 : vector<1x256xf32> to vector<4x256xf32>
    %430 = arith.mulf %428, %429 : vector<4x256xf32>
    %431 = arith.addf %425, %430 : vector<4x256xf32>
    %432 = vector.extract_strided_slice %41 {offsets = [0, 58], sizes = [4, 1], strides = [1, 1]} : vector<4x72xf32> to vector<4x1xf32>
    %433 = vector.extract_strided_slice %419 {offsets = [2, 0], sizes = [1, 256], strides = [1, 1]} : vector<4x256xf32> to vector<1x256xf32>
    %434 = vector.broadcast %432 : vector<4x1xf32> to vector<4x256xf32>
    %435 = vector.broadcast %433 : vector<1x256xf32> to vector<4x256xf32>
    %436 = arith.mulf %434, %435 : vector<4x256xf32>
    %437 = arith.addf %431, %436 : vector<4x256xf32>
    %438 = vector.extract_strided_slice %41 {offsets = [0, 59], sizes = [4, 1], strides = [1, 1]} : vector<4x72xf32> to vector<4x1xf32>
    %439 = vector.extract_strided_slice %419 {offsets = [3, 0], sizes = [1, 256], strides = [1, 1]} : vector<4x256xf32> to vector<1x256xf32>
    %440 = vector.broadcast %438 : vector<4x1xf32> to vector<4x256xf32>
    %441 = vector.broadcast %439 : vector<1x256xf32> to vector<4x256xf32>
    %442 = arith.mulf %440, %441 : vector<4x256xf32>
    %443 = arith.addf %437, %442 : vector<4x256xf32>
    %c240_i32_33 = arith.constant 240 : i32
    %444 = tpu.dynamic_rotate %3 by %c240_i32_33 dim 1 : vector<4x256xf32>, i32 -> vector<4x256xf32>
    %445 = vector.broadcast %10 : vector<1x256xf32> to vector<4x256xf32>
    %446 = arith.mulf %444, %445 : vector<4x256xf32>
    %447 = vector.extract_strided_slice %41 {offsets = [0, 60], sizes = [4, 1], strides = [1, 1]} : vector<4x72xf32> to vector<4x1xf32>
    %448 = vector.extract_strided_slice %446 {offsets = [0, 0], sizes = [1, 256], strides = [1, 1]} : vector<4x256xf32> to vector<1x256xf32>
    %449 = vector.broadcast %447 : vector<4x1xf32> to vector<4x256xf32>
    %450 = vector.broadcast %448 : vector<1x256xf32> to vector<4x256xf32>
    %451 = arith.mulf %449, %450 : vector<4x256xf32>
    %452 = arith.addf %443, %451 : vector<4x256xf32>
    %453 = vector.extract_strided_slice %41 {offsets = [0, 61], sizes = [4, 1], strides = [1, 1]} : vector<4x72xf32> to vector<4x1xf32>
    %454 = vector.extract_strided_slice %446 {offsets = [1, 0], sizes = [1, 256], strides = [1, 1]} : vector<4x256xf32> to vector<1x256xf32>
    %455 = vector.broadcast %453 : vector<4x1xf32> to vector<4x256xf32>
    %456 = vector.broadcast %454 : vector<1x256xf32> to vector<4x256xf32>
    %457 = arith.mulf %455, %456 : vector<4x256xf32>
    %458 = arith.addf %452, %457 : vector<4x256xf32>
    %459 = vector.extract_strided_slice %41 {offsets = [0, 62], sizes = [4, 1], strides = [1, 1]} : vector<4x72xf32> to vector<4x1xf32>
    %460 = vector.extract_strided_slice %446 {offsets = [2, 0], sizes = [1, 256], strides = [1, 1]} : vector<4x256xf32> to vector<1x256xf32>
    %461 = vector.broadcast %459 : vector<4x1xf32> to vector<4x256xf32>
    %462 = vector.broadcast %460 : vector<1x256xf32> to vector<4x256xf32>
    %463 = arith.mulf %461, %462 : vector<4x256xf32>
    %464 = arith.addf %458, %463 : vector<4x256xf32>
    %465 = vector.extract_strided_slice %41 {offsets = [0, 63], sizes = [4, 1], strides = [1, 1]} : vector<4x72xf32> to vector<4x1xf32>
    %466 = vector.extract_strided_slice %446 {offsets = [3, 0], sizes = [1, 256], strides = [1, 1]} : vector<4x256xf32> to vector<1x256xf32>
    %467 = vector.broadcast %465 : vector<4x1xf32> to vector<4x256xf32>
    %468 = vector.broadcast %466 : vector<1x256xf32> to vector<4x256xf32>
    %469 = arith.mulf %467, %468 : vector<4x256xf32>
    %470 = arith.addf %464, %469 : vector<4x256xf32>
    %c239_i32 = arith.constant 239 : i32
    %471 = tpu.dynamic_rotate %1 by %c239_i32 dim 1 : vector<4x256xf32>, i32 -> vector<4x256xf32>
    %472 = vector.broadcast %11 : vector<1x256xf32> to vector<4x256xf32>
    %473 = arith.mulf %471, %472 : vector<4x256xf32>
    %474 = vector.extract_strided_slice %41 {offsets = [0, 64], sizes = [4, 1], strides = [1, 1]} : vector<4x72xf32> to vector<4x1xf32>
    %475 = vector.extract_strided_slice %473 {offsets = [0, 0], sizes = [1, 256], strides = [1, 1]} : vector<4x256xf32> to vector<1x256xf32>
    %476 = vector.broadcast %474 : vector<4x1xf32> to vector<4x256xf32>
    %477 = vector.broadcast %475 : vector<1x256xf32> to vector<4x256xf32>
    %478 = arith.mulf %476, %477 : vector<4x256xf32>
    %479 = arith.addf %470, %478 : vector<4x256xf32>
    %480 = vector.extract_strided_slice %41 {offsets = [0, 65], sizes = [4, 1], strides = [1, 1]} : vector<4x72xf32> to vector<4x1xf32>
    %481 = vector.extract_strided_slice %473 {offsets = [1, 0], sizes = [1, 256], strides = [1, 1]} : vector<4x256xf32> to vector<1x256xf32>
    %482 = vector.broadcast %480 : vector<4x1xf32> to vector<4x256xf32>
    %483 = vector.broadcast %481 : vector<1x256xf32> to vector<4x256xf32>
    %484 = arith.mulf %482, %483 : vector<4x256xf32>
    %485 = arith.addf %479, %484 : vector<4x256xf32>
    %486 = vector.extract_strided_slice %41 {offsets = [0, 66], sizes = [4, 1], strides = [1, 1]} : vector<4x72xf32> to vector<4x1xf32>
    %487 = vector.extract_strided_slice %473 {offsets = [2, 0], sizes = [1, 256], strides = [1, 1]} : vector<4x256xf32> to vector<1x256xf32>
    %488 = vector.broadcast %486 : vector<4x1xf32> to vector<4x256xf32>
    %489 = vector.broadcast %487 : vector<1x256xf32> to vector<4x256xf32>
    %490 = arith.mulf %488, %489 : vector<4x256xf32>
    %491 = arith.addf %485, %490 : vector<4x256xf32>
    %492 = vector.extract_strided_slice %41 {offsets = [0, 67], sizes = [4, 1], strides = [1, 1]} : vector<4x72xf32> to vector<4x1xf32>
    %493 = vector.extract_strided_slice %473 {offsets = [3, 0], sizes = [1, 256], strides = [1, 1]} : vector<4x256xf32> to vector<1x256xf32>
    %494 = vector.broadcast %492 : vector<4x1xf32> to vector<4x256xf32>
    %495 = vector.broadcast %493 : vector<1x256xf32> to vector<4x256xf32>
    %496 = arith.mulf %494, %495 : vector<4x256xf32>
    %497 = arith.addf %491, %496 : vector<4x256xf32>
    %c239_i32_34 = arith.constant 239 : i32
    %498 = tpu.dynamic_rotate %3 by %c239_i32_34 dim 1 : vector<4x256xf32>, i32 -> vector<4x256xf32>
    %499 = vector.broadcast %11 : vector<1x256xf32> to vector<4x256xf32>
    %500 = arith.mulf %498, %499 : vector<4x256xf32>
    %501 = vector.extract_strided_slice %41 {offsets = [0, 68], sizes = [4, 1], strides = [1, 1]} : vector<4x72xf32> to vector<4x1xf32>
    %502 = vector.extract_strided_slice %500 {offsets = [0, 0], sizes = [1, 256], strides = [1, 1]} : vector<4x256xf32> to vector<1x256xf32>
    %503 = vector.broadcast %501 : vector<4x1xf32> to vector<4x256xf32>
    %504 = vector.broadcast %502 : vector<1x256xf32> to vector<4x256xf32>
    %505 = arith.mulf %503, %504 : vector<4x256xf32>
    %506 = arith.addf %497, %505 : vector<4x256xf32>
    %507 = vector.extract_strided_slice %41 {offsets = [0, 69], sizes = [4, 1], strides = [1, 1]} : vector<4x72xf32> to vector<4x1xf32>
    %508 = vector.extract_strided_slice %500 {offsets = [1, 0], sizes = [1, 256], strides = [1, 1]} : vector<4x256xf32> to vector<1x256xf32>
    %509 = vector.broadcast %507 : vector<4x1xf32> to vector<4x256xf32>
    %510 = vector.broadcast %508 : vector<1x256xf32> to vector<4x256xf32>
    %511 = arith.mulf %509, %510 : vector<4x256xf32>
    %512 = arith.addf %506, %511 : vector<4x256xf32>
    %513 = vector.extract_strided_slice %41 {offsets = [0, 70], sizes = [4, 1], strides = [1, 1]} : vector<4x72xf32> to vector<4x1xf32>
    %514 = vector.extract_strided_slice %500 {offsets = [2, 0], sizes = [1, 256], strides = [1, 1]} : vector<4x256xf32> to vector<1x256xf32>
    %515 = vector.broadcast %513 : vector<4x1xf32> to vector<4x256xf32>
    %516 = vector.broadcast %514 : vector<1x256xf32> to vector<4x256xf32>
    %517 = arith.mulf %515, %516 : vector<4x256xf32>
    %518 = arith.addf %512, %517 : vector<4x256xf32>
    %519 = vector.extract_strided_slice %41 {offsets = [0, 71], sizes = [4, 1], strides = [1, 1]} : vector<4x72xf32> to vector<4x1xf32>
    %520 = vector.extract_strided_slice %500 {offsets = [3, 0], sizes = [1, 256], strides = [1, 1]} : vector<4x256xf32> to vector<1x256xf32>
    %521 = vector.broadcast %519 : vector<4x1xf32> to vector<4x256xf32>
    %522 = vector.broadcast %520 : vector<1x256xf32> to vector<4x256xf32>
    %523 = arith.mulf %521, %522 : vector<4x256xf32>
    %524 = arith.addf %518, %523 : vector<4x256xf32>
    %cst_35 = arith.constant 0.000000e+00 : f32
    %525 = vector.broadcast %cst_35 : f32 to vector<4x256xf32>
    %526 = arith.maximumf %524, %525 : vector<4x256xf32>
    %c0_36 = arith.constant 0 : index
    %c0_37 = arith.constant 0 : index
    %527 = vector.load %arg7[%c0_36, %c0_37] : memref<8x1xf32, #tpu.memory_space<vmem>>, vector<8x1xf32>
    %c0_38 = arith.constant 0 : index
    %c0_39 = arith.constant 0 : index
    %528 = vector.load %arg6[%c0_38, %c0_39] : memref<8x36xf32, #tpu.memory_space<vmem>>, vector<8x36xf32>
    %cst_40 = arith.constant 0.000000e+00 : f32
    %529 = vector.broadcast %cst_40 : f32 to vector<8x256xf32>
    %530 = vector.broadcast %527 : vector<8x1xf32> to vector<8x256xf32>
    %531 = arith.addf %529, %530 : vector<8x256xf32>
    %c17_i32_41 = arith.constant 17 : i32
    %532 = tpu.dynamic_rotate %526 by %c17_i32_41 dim 1 : vector<4x256xf32>, i32 -> vector<4x256xf32>
    %533 = vector.broadcast %4 : vector<1x256xf32> to vector<4x256xf32>
    %534 = arith.mulf %532, %533 : vector<4x256xf32>
    %535 = vector.extract_strided_slice %528 {offsets = [0, 0], sizes = [8, 1], strides = [1, 1]} : vector<8x36xf32> to vector<8x1xf32>
    %536 = vector.extract_strided_slice %534 {offsets = [0, 0], sizes = [1, 256], strides = [1, 1]} : vector<4x256xf32> to vector<1x256xf32>
    %537 = vector.broadcast %535 : vector<8x1xf32> to vector<8x256xf32>
    %538 = vector.broadcast %536 : vector<1x256xf32> to vector<8x256xf32>
    %539 = arith.mulf %537, %538 : vector<8x256xf32>
    %540 = arith.addf %531, %539 : vector<8x256xf32>
    %541 = vector.extract_strided_slice %528 {offsets = [0, 1], sizes = [8, 1], strides = [1, 1]} : vector<8x36xf32> to vector<8x1xf32>
    %542 = vector.extract_strided_slice %534 {offsets = [1, 0], sizes = [1, 256], strides = [1, 1]} : vector<4x256xf32> to vector<1x256xf32>
    %543 = vector.broadcast %541 : vector<8x1xf32> to vector<8x256xf32>
    %544 = vector.broadcast %542 : vector<1x256xf32> to vector<8x256xf32>
    %545 = arith.mulf %543, %544 : vector<8x256xf32>
    %546 = arith.addf %540, %545 : vector<8x256xf32>
    %547 = vector.extract_strided_slice %528 {offsets = [0, 2], sizes = [8, 1], strides = [1, 1]} : vector<8x36xf32> to vector<8x1xf32>
    %548 = vector.extract_strided_slice %534 {offsets = [2, 0], sizes = [1, 256], strides = [1, 1]} : vector<4x256xf32> to vector<1x256xf32>
    %549 = vector.broadcast %547 : vector<8x1xf32> to vector<8x256xf32>
    %550 = vector.broadcast %548 : vector<1x256xf32> to vector<8x256xf32>
    %551 = arith.mulf %549, %550 : vector<8x256xf32>
    %552 = arith.addf %546, %551 : vector<8x256xf32>
    %553 = vector.extract_strided_slice %528 {offsets = [0, 3], sizes = [8, 1], strides = [1, 1]} : vector<8x36xf32> to vector<8x1xf32>
    %554 = vector.extract_strided_slice %534 {offsets = [3, 0], sizes = [1, 256], strides = [1, 1]} : vector<4x256xf32> to vector<1x256xf32>
    %555 = vector.broadcast %553 : vector<8x1xf32> to vector<8x256xf32>
    %556 = vector.broadcast %554 : vector<1x256xf32> to vector<8x256xf32>
    %557 = arith.mulf %555, %556 : vector<8x256xf32>
    %558 = arith.addf %552, %557 : vector<8x256xf32>
    %c16_i32_42 = arith.constant 16 : i32
    %559 = tpu.dynamic_rotate %526 by %c16_i32_42 dim 1 : vector<4x256xf32>, i32 -> vector<4x256xf32>
    %560 = vector.broadcast %5 : vector<1x256xf32> to vector<4x256xf32>
    %561 = arith.mulf %559, %560 : vector<4x256xf32>
    %562 = vector.extract_strided_slice %528 {offsets = [0, 4], sizes = [8, 1], strides = [1, 1]} : vector<8x36xf32> to vector<8x1xf32>
    %563 = vector.extract_strided_slice %561 {offsets = [0, 0], sizes = [1, 256], strides = [1, 1]} : vector<4x256xf32> to vector<1x256xf32>
    %564 = vector.broadcast %562 : vector<8x1xf32> to vector<8x256xf32>
    %565 = vector.broadcast %563 : vector<1x256xf32> to vector<8x256xf32>
    %566 = arith.mulf %564, %565 : vector<8x256xf32>
    %567 = arith.addf %558, %566 : vector<8x256xf32>
    %568 = vector.extract_strided_slice %528 {offsets = [0, 5], sizes = [8, 1], strides = [1, 1]} : vector<8x36xf32> to vector<8x1xf32>
    %569 = vector.extract_strided_slice %561 {offsets = [1, 0], sizes = [1, 256], strides = [1, 1]} : vector<4x256xf32> to vector<1x256xf32>
    %570 = vector.broadcast %568 : vector<8x1xf32> to vector<8x256xf32>
    %571 = vector.broadcast %569 : vector<1x256xf32> to vector<8x256xf32>
    %572 = arith.mulf %570, %571 : vector<8x256xf32>
    %573 = arith.addf %567, %572 : vector<8x256xf32>
    %574 = vector.extract_strided_slice %528 {offsets = [0, 6], sizes = [8, 1], strides = [1, 1]} : vector<8x36xf32> to vector<8x1xf32>
    %575 = vector.extract_strided_slice %561 {offsets = [2, 0], sizes = [1, 256], strides = [1, 1]} : vector<4x256xf32> to vector<1x256xf32>
    %576 = vector.broadcast %574 : vector<8x1xf32> to vector<8x256xf32>
    %577 = vector.broadcast %575 : vector<1x256xf32> to vector<8x256xf32>
    %578 = arith.mulf %576, %577 : vector<8x256xf32>
    %579 = arith.addf %573, %578 : vector<8x256xf32>
    %580 = vector.extract_strided_slice %528 {offsets = [0, 7], sizes = [8, 1], strides = [1, 1]} : vector<8x36xf32> to vector<8x1xf32>
    %581 = vector.extract_strided_slice %561 {offsets = [3, 0], sizes = [1, 256], strides = [1, 1]} : vector<4x256xf32> to vector<1x256xf32>
    %582 = vector.broadcast %580 : vector<8x1xf32> to vector<8x256xf32>
    %583 = vector.broadcast %581 : vector<1x256xf32> to vector<8x256xf32>
    %584 = arith.mulf %582, %583 : vector<8x256xf32>
    %585 = arith.addf %579, %584 : vector<8x256xf32>
    %c15_i32_43 = arith.constant 15 : i32
    %586 = tpu.dynamic_rotate %526 by %c15_i32_43 dim 1 : vector<4x256xf32>, i32 -> vector<4x256xf32>
    %587 = vector.broadcast %6 : vector<1x256xf32> to vector<4x256xf32>
    %588 = arith.mulf %586, %587 : vector<4x256xf32>
    %589 = vector.extract_strided_slice %528 {offsets = [0, 8], sizes = [8, 1], strides = [1, 1]} : vector<8x36xf32> to vector<8x1xf32>
    %590 = vector.extract_strided_slice %588 {offsets = [0, 0], sizes = [1, 256], strides = [1, 1]} : vector<4x256xf32> to vector<1x256xf32>
    %591 = vector.broadcast %589 : vector<8x1xf32> to vector<8x256xf32>
    %592 = vector.broadcast %590 : vector<1x256xf32> to vector<8x256xf32>
    %593 = arith.mulf %591, %592 : vector<8x256xf32>
    %594 = arith.addf %585, %593 : vector<8x256xf32>
    %595 = vector.extract_strided_slice %528 {offsets = [0, 9], sizes = [8, 1], strides = [1, 1]} : vector<8x36xf32> to vector<8x1xf32>
    %596 = vector.extract_strided_slice %588 {offsets = [1, 0], sizes = [1, 256], strides = [1, 1]} : vector<4x256xf32> to vector<1x256xf32>
    %597 = vector.broadcast %595 : vector<8x1xf32> to vector<8x256xf32>
    %598 = vector.broadcast %596 : vector<1x256xf32> to vector<8x256xf32>
    %599 = arith.mulf %597, %598 : vector<8x256xf32>
    %600 = arith.addf %594, %599 : vector<8x256xf32>
    %601 = vector.extract_strided_slice %528 {offsets = [0, 10], sizes = [8, 1], strides = [1, 1]} : vector<8x36xf32> to vector<8x1xf32>
    %602 = vector.extract_strided_slice %588 {offsets = [2, 0], sizes = [1, 256], strides = [1, 1]} : vector<4x256xf32> to vector<1x256xf32>
    %603 = vector.broadcast %601 : vector<8x1xf32> to vector<8x256xf32>
    %604 = vector.broadcast %602 : vector<1x256xf32> to vector<8x256xf32>
    %605 = arith.mulf %603, %604 : vector<8x256xf32>
    %606 = arith.addf %600, %605 : vector<8x256xf32>
    %607 = vector.extract_strided_slice %528 {offsets = [0, 11], sizes = [8, 1], strides = [1, 1]} : vector<8x36xf32> to vector<8x1xf32>
    %608 = vector.extract_strided_slice %588 {offsets = [3, 0], sizes = [1, 256], strides = [1, 1]} : vector<4x256xf32> to vector<1x256xf32>
    %609 = vector.broadcast %607 : vector<8x1xf32> to vector<8x256xf32>
    %610 = vector.broadcast %608 : vector<1x256xf32> to vector<8x256xf32>
    %611 = arith.mulf %609, %610 : vector<8x256xf32>
    %612 = arith.addf %606, %611 : vector<8x256xf32>
    %c1_i32_44 = arith.constant 1 : i32
    %613 = tpu.dynamic_rotate %526 by %c1_i32_44 dim 1 : vector<4x256xf32>, i32 -> vector<4x256xf32>
    %614 = vector.broadcast %7 : vector<1x256xf32> to vector<4x256xf32>
    %615 = arith.mulf %613, %614 : vector<4x256xf32>
    %616 = vector.extract_strided_slice %528 {offsets = [0, 12], sizes = [8, 1], strides = [1, 1]} : vector<8x36xf32> to vector<8x1xf32>
    %617 = vector.extract_strided_slice %615 {offsets = [0, 0], sizes = [1, 256], strides = [1, 1]} : vector<4x256xf32> to vector<1x256xf32>
    %618 = vector.broadcast %616 : vector<8x1xf32> to vector<8x256xf32>
    %619 = vector.broadcast %617 : vector<1x256xf32> to vector<8x256xf32>
    %620 = arith.mulf %618, %619 : vector<8x256xf32>
    %621 = arith.addf %612, %620 : vector<8x256xf32>
    %622 = vector.extract_strided_slice %528 {offsets = [0, 13], sizes = [8, 1], strides = [1, 1]} : vector<8x36xf32> to vector<8x1xf32>
    %623 = vector.extract_strided_slice %615 {offsets = [1, 0], sizes = [1, 256], strides = [1, 1]} : vector<4x256xf32> to vector<1x256xf32>
    %624 = vector.broadcast %622 : vector<8x1xf32> to vector<8x256xf32>
    %625 = vector.broadcast %623 : vector<1x256xf32> to vector<8x256xf32>
    %626 = arith.mulf %624, %625 : vector<8x256xf32>
    %627 = arith.addf %621, %626 : vector<8x256xf32>
    %628 = vector.extract_strided_slice %528 {offsets = [0, 14], sizes = [8, 1], strides = [1, 1]} : vector<8x36xf32> to vector<8x1xf32>
    %629 = vector.extract_strided_slice %615 {offsets = [2, 0], sizes = [1, 256], strides = [1, 1]} : vector<4x256xf32> to vector<1x256xf32>
    %630 = vector.broadcast %628 : vector<8x1xf32> to vector<8x256xf32>
    %631 = vector.broadcast %629 : vector<1x256xf32> to vector<8x256xf32>
    %632 = arith.mulf %630, %631 : vector<8x256xf32>
    %633 = arith.addf %627, %632 : vector<8x256xf32>
    %634 = vector.extract_strided_slice %528 {offsets = [0, 15], sizes = [8, 1], strides = [1, 1]} : vector<8x36xf32> to vector<8x1xf32>
    %635 = vector.extract_strided_slice %615 {offsets = [3, 0], sizes = [1, 256], strides = [1, 1]} : vector<4x256xf32> to vector<1x256xf32>
    %636 = vector.broadcast %634 : vector<8x1xf32> to vector<8x256xf32>
    %637 = vector.broadcast %635 : vector<1x256xf32> to vector<8x256xf32>
    %638 = arith.mulf %636, %637 : vector<8x256xf32>
    %639 = arith.addf %633, %638 : vector<8x256xf32>
    %640 = vector.extract_strided_slice %528 {offsets = [0, 16], sizes = [8, 1], strides = [1, 1]} : vector<8x36xf32> to vector<8x1xf32>
    %641 = vector.extract_strided_slice %526 {offsets = [0, 0], sizes = [1, 256], strides = [1, 1]} : vector<4x256xf32> to vector<1x256xf32>
    %642 = vector.broadcast %640 : vector<8x1xf32> to vector<8x256xf32>
    %643 = vector.broadcast %641 : vector<1x256xf32> to vector<8x256xf32>
    %644 = arith.mulf %642, %643 : vector<8x256xf32>
    %645 = arith.addf %639, %644 : vector<8x256xf32>
    %646 = vector.extract_strided_slice %528 {offsets = [0, 17], sizes = [8, 1], strides = [1, 1]} : vector<8x36xf32> to vector<8x1xf32>
    %647 = vector.extract_strided_slice %526 {offsets = [1, 0], sizes = [1, 256], strides = [1, 1]} : vector<4x256xf32> to vector<1x256xf32>
    %648 = vector.broadcast %646 : vector<8x1xf32> to vector<8x256xf32>
    %649 = vector.broadcast %647 : vector<1x256xf32> to vector<8x256xf32>
    %650 = arith.mulf %648, %649 : vector<8x256xf32>
    %651 = arith.addf %645, %650 : vector<8x256xf32>
    %652 = vector.extract_strided_slice %528 {offsets = [0, 18], sizes = [8, 1], strides = [1, 1]} : vector<8x36xf32> to vector<8x1xf32>
    %653 = vector.extract_strided_slice %526 {offsets = [2, 0], sizes = [1, 256], strides = [1, 1]} : vector<4x256xf32> to vector<1x256xf32>
    %654 = vector.broadcast %652 : vector<8x1xf32> to vector<8x256xf32>
    %655 = vector.broadcast %653 : vector<1x256xf32> to vector<8x256xf32>
    %656 = arith.mulf %654, %655 : vector<8x256xf32>
    %657 = arith.addf %651, %656 : vector<8x256xf32>
    %658 = vector.extract_strided_slice %528 {offsets = [0, 19], sizes = [8, 1], strides = [1, 1]} : vector<8x36xf32> to vector<8x1xf32>
    %659 = vector.extract_strided_slice %526 {offsets = [3, 0], sizes = [1, 256], strides = [1, 1]} : vector<4x256xf32> to vector<1x256xf32>
    %660 = vector.broadcast %658 : vector<8x1xf32> to vector<8x256xf32>
    %661 = vector.broadcast %659 : vector<1x256xf32> to vector<8x256xf32>
    %662 = arith.mulf %660, %661 : vector<8x256xf32>
    %663 = arith.addf %657, %662 : vector<8x256xf32>
    %c255_i32_45 = arith.constant 255 : i32
    %664 = tpu.dynamic_rotate %526 by %c255_i32_45 dim 1 : vector<4x256xf32>, i32 -> vector<4x256xf32>
    %665 = vector.broadcast %8 : vector<1x256xf32> to vector<4x256xf32>
    %666 = arith.mulf %664, %665 : vector<4x256xf32>
    %667 = vector.extract_strided_slice %528 {offsets = [0, 20], sizes = [8, 1], strides = [1, 1]} : vector<8x36xf32> to vector<8x1xf32>
    %668 = vector.extract_strided_slice %666 {offsets = [0, 0], sizes = [1, 256], strides = [1, 1]} : vector<4x256xf32> to vector<1x256xf32>
    %669 = vector.broadcast %667 : vector<8x1xf32> to vector<8x256xf32>
    %670 = vector.broadcast %668 : vector<1x256xf32> to vector<8x256xf32>
    %671 = arith.mulf %669, %670 : vector<8x256xf32>
    %672 = arith.addf %663, %671 : vector<8x256xf32>
    %673 = vector.extract_strided_slice %528 {offsets = [0, 21], sizes = [8, 1], strides = [1, 1]} : vector<8x36xf32> to vector<8x1xf32>
    %674 = vector.extract_strided_slice %666 {offsets = [1, 0], sizes = [1, 256], strides = [1, 1]} : vector<4x256xf32> to vector<1x256xf32>
    %675 = vector.broadcast %673 : vector<8x1xf32> to vector<8x256xf32>
    %676 = vector.broadcast %674 : vector<1x256xf32> to vector<8x256xf32>
    %677 = arith.mulf %675, %676 : vector<8x256xf32>
    %678 = arith.addf %672, %677 : vector<8x256xf32>
    %679 = vector.extract_strided_slice %528 {offsets = [0, 22], sizes = [8, 1], strides = [1, 1]} : vector<8x36xf32> to vector<8x1xf32>
    %680 = vector.extract_strided_slice %666 {offsets = [2, 0], sizes = [1, 256], strides = [1, 1]} : vector<4x256xf32> to vector<1x256xf32>
    %681 = vector.broadcast %679 : vector<8x1xf32> to vector<8x256xf32>
    %682 = vector.broadcast %680 : vector<1x256xf32> to vector<8x256xf32>
    %683 = arith.mulf %681, %682 : vector<8x256xf32>
    %684 = arith.addf %678, %683 : vector<8x256xf32>
    %685 = vector.extract_strided_slice %528 {offsets = [0, 23], sizes = [8, 1], strides = [1, 1]} : vector<8x36xf32> to vector<8x1xf32>
    %686 = vector.extract_strided_slice %666 {offsets = [3, 0], sizes = [1, 256], strides = [1, 1]} : vector<4x256xf32> to vector<1x256xf32>
    %687 = vector.broadcast %685 : vector<8x1xf32> to vector<8x256xf32>
    %688 = vector.broadcast %686 : vector<1x256xf32> to vector<8x256xf32>
    %689 = arith.mulf %687, %688 : vector<8x256xf32>
    %690 = arith.addf %684, %689 : vector<8x256xf32>
    %c241_i32_46 = arith.constant 241 : i32
    %691 = tpu.dynamic_rotate %526 by %c241_i32_46 dim 1 : vector<4x256xf32>, i32 -> vector<4x256xf32>
    %692 = vector.broadcast %9 : vector<1x256xf32> to vector<4x256xf32>
    %693 = arith.mulf %691, %692 : vector<4x256xf32>
    %694 = vector.extract_strided_slice %528 {offsets = [0, 24], sizes = [8, 1], strides = [1, 1]} : vector<8x36xf32> to vector<8x1xf32>
    %695 = vector.extract_strided_slice %693 {offsets = [0, 0], sizes = [1, 256], strides = [1, 1]} : vector<4x256xf32> to vector<1x256xf32>
    %696 = vector.broadcast %694 : vector<8x1xf32> to vector<8x256xf32>
    %697 = vector.broadcast %695 : vector<1x256xf32> to vector<8x256xf32>
    %698 = arith.mulf %696, %697 : vector<8x256xf32>
    %699 = arith.addf %690, %698 : vector<8x256xf32>
    %700 = vector.extract_strided_slice %528 {offsets = [0, 25], sizes = [8, 1], strides = [1, 1]} : vector<8x36xf32> to vector<8x1xf32>
    %701 = vector.extract_strided_slice %693 {offsets = [1, 0], sizes = [1, 256], strides = [1, 1]} : vector<4x256xf32> to vector<1x256xf32>
    %702 = vector.broadcast %700 : vector<8x1xf32> to vector<8x256xf32>
    %703 = vector.broadcast %701 : vector<1x256xf32> to vector<8x256xf32>
    %704 = arith.mulf %702, %703 : vector<8x256xf32>
    %705 = arith.addf %699, %704 : vector<8x256xf32>
    %706 = vector.extract_strided_slice %528 {offsets = [0, 26], sizes = [8, 1], strides = [1, 1]} : vector<8x36xf32> to vector<8x1xf32>
    %707 = vector.extract_strided_slice %693 {offsets = [2, 0], sizes = [1, 256], strides = [1, 1]} : vector<4x256xf32> to vector<1x256xf32>
    %708 = vector.broadcast %706 : vector<8x1xf32> to vector<8x256xf32>
    %709 = vector.broadcast %707 : vector<1x256xf32> to vector<8x256xf32>
    %710 = arith.mulf %708, %709 : vector<8x256xf32>
    %711 = arith.addf %705, %710 : vector<8x256xf32>
    %712 = vector.extract_strided_slice %528 {offsets = [0, 27], sizes = [8, 1], strides = [1, 1]} : vector<8x36xf32> to vector<8x1xf32>
    %713 = vector.extract_strided_slice %693 {offsets = [3, 0], sizes = [1, 256], strides = [1, 1]} : vector<4x256xf32> to vector<1x256xf32>
    %714 = vector.broadcast %712 : vector<8x1xf32> to vector<8x256xf32>
    %715 = vector.broadcast %713 : vector<1x256xf32> to vector<8x256xf32>
    %716 = arith.mulf %714, %715 : vector<8x256xf32>
    %717 = arith.addf %711, %716 : vector<8x256xf32>
    %c240_i32_47 = arith.constant 240 : i32
    %718 = tpu.dynamic_rotate %526 by %c240_i32_47 dim 1 : vector<4x256xf32>, i32 -> vector<4x256xf32>
    %719 = vector.broadcast %10 : vector<1x256xf32> to vector<4x256xf32>
    %720 = arith.mulf %718, %719 : vector<4x256xf32>
    %721 = vector.extract_strided_slice %528 {offsets = [0, 28], sizes = [8, 1], strides = [1, 1]} : vector<8x36xf32> to vector<8x1xf32>
    %722 = vector.extract_strided_slice %720 {offsets = [0, 0], sizes = [1, 256], strides = [1, 1]} : vector<4x256xf32> to vector<1x256xf32>
    %723 = vector.broadcast %721 : vector<8x1xf32> to vector<8x256xf32>
    %724 = vector.broadcast %722 : vector<1x256xf32> to vector<8x256xf32>
    %725 = arith.mulf %723, %724 : vector<8x256xf32>
    %726 = arith.addf %717, %725 : vector<8x256xf32>
    %727 = vector.extract_strided_slice %528 {offsets = [0, 29], sizes = [8, 1], strides = [1, 1]} : vector<8x36xf32> to vector<8x1xf32>
    %728 = vector.extract_strided_slice %720 {offsets = [1, 0], sizes = [1, 256], strides = [1, 1]} : vector<4x256xf32> to vector<1x256xf32>
    %729 = vector.broadcast %727 : vector<8x1xf32> to vector<8x256xf32>
    %730 = vector.broadcast %728 : vector<1x256xf32> to vector<8x256xf32>
    %731 = arith.mulf %729, %730 : vector<8x256xf32>
    %732 = arith.addf %726, %731 : vector<8x256xf32>
    %733 = vector.extract_strided_slice %528 {offsets = [0, 30], sizes = [8, 1], strides = [1, 1]} : vector<8x36xf32> to vector<8x1xf32>
    %734 = vector.extract_strided_slice %720 {offsets = [2, 0], sizes = [1, 256], strides = [1, 1]} : vector<4x256xf32> to vector<1x256xf32>
    %735 = vector.broadcast %733 : vector<8x1xf32> to vector<8x256xf32>
    %736 = vector.broadcast %734 : vector<1x256xf32> to vector<8x256xf32>
    %737 = arith.mulf %735, %736 : vector<8x256xf32>
    %738 = arith.addf %732, %737 : vector<8x256xf32>
    %739 = vector.extract_strided_slice %528 {offsets = [0, 31], sizes = [8, 1], strides = [1, 1]} : vector<8x36xf32> to vector<8x1xf32>
    %740 = vector.extract_strided_slice %720 {offsets = [3, 0], sizes = [1, 256], strides = [1, 1]} : vector<4x256xf32> to vector<1x256xf32>
    %741 = vector.broadcast %739 : vector<8x1xf32> to vector<8x256xf32>
    %742 = vector.broadcast %740 : vector<1x256xf32> to vector<8x256xf32>
    %743 = arith.mulf %741, %742 : vector<8x256xf32>
    %744 = arith.addf %738, %743 : vector<8x256xf32>
    %c239_i32_48 = arith.constant 239 : i32
    %745 = tpu.dynamic_rotate %526 by %c239_i32_48 dim 1 : vector<4x256xf32>, i32 -> vector<4x256xf32>
    %746 = vector.broadcast %11 : vector<1x256xf32> to vector<4x256xf32>
    %747 = arith.mulf %745, %746 : vector<4x256xf32>
    %748 = vector.extract_strided_slice %528 {offsets = [0, 32], sizes = [8, 1], strides = [1, 1]} : vector<8x36xf32> to vector<8x1xf32>
    %749 = vector.extract_strided_slice %747 {offsets = [0, 0], sizes = [1, 256], strides = [1, 1]} : vector<4x256xf32> to vector<1x256xf32>
    %750 = vector.broadcast %748 : vector<8x1xf32> to vector<8x256xf32>
    %751 = vector.broadcast %749 : vector<1x256xf32> to vector<8x256xf32>
    %752 = arith.mulf %750, %751 : vector<8x256xf32>
    %753 = arith.addf %744, %752 : vector<8x256xf32>
    %754 = vector.extract_strided_slice %528 {offsets = [0, 33], sizes = [8, 1], strides = [1, 1]} : vector<8x36xf32> to vector<8x1xf32>
    %755 = vector.extract_strided_slice %747 {offsets = [1, 0], sizes = [1, 256], strides = [1, 1]} : vector<4x256xf32> to vector<1x256xf32>
    %756 = vector.broadcast %754 : vector<8x1xf32> to vector<8x256xf32>
    %757 = vector.broadcast %755 : vector<1x256xf32> to vector<8x256xf32>
    %758 = arith.mulf %756, %757 : vector<8x256xf32>
    %759 = arith.addf %753, %758 : vector<8x256xf32>
    %760 = vector.extract_strided_slice %528 {offsets = [0, 34], sizes = [8, 1], strides = [1, 1]} : vector<8x36xf32> to vector<8x1xf32>
    %761 = vector.extract_strided_slice %747 {offsets = [2, 0], sizes = [1, 256], strides = [1, 1]} : vector<4x256xf32> to vector<1x256xf32>
    %762 = vector.broadcast %760 : vector<8x1xf32> to vector<8x256xf32>
    %763 = vector.broadcast %761 : vector<1x256xf32> to vector<8x256xf32>
    %764 = arith.mulf %762, %763 : vector<8x256xf32>
    %765 = arith.addf %759, %764 : vector<8x256xf32>
    %766 = vector.extract_strided_slice %528 {offsets = [0, 35], sizes = [8, 1], strides = [1, 1]} : vector<8x36xf32> to vector<8x1xf32>
    %767 = vector.extract_strided_slice %747 {offsets = [3, 0], sizes = [1, 256], strides = [1, 1]} : vector<4x256xf32> to vector<1x256xf32>
    %768 = vector.broadcast %766 : vector<8x1xf32> to vector<8x256xf32>
    %769 = vector.broadcast %767 : vector<1x256xf32> to vector<8x256xf32>
    %770 = arith.mulf %768, %769 : vector<8x256xf32>
    %771 = arith.addf %765, %770 : vector<8x256xf32>
    %772 = vector.extract_strided_slice %771 {offsets = [0, 0], sizes = [4, 256], strides = [1, 1]} : vector<8x256xf32> to vector<4x256xf32>
    %773 = vector.broadcast %23 : vector<4x1xf32> to vector<4x256xf32>
    %774 = arith.addf %773, %772 : vector<4x256xf32>
    %775 = vector.extract_strided_slice %771 {offsets = [4, 0], sizes = [4, 256], strides = [1, 1]} : vector<8x256xf32> to vector<4x256xf32>
    %776 = vector.broadcast %15 : vector<4x1xf32> to vector<4x256xf32>
    %777 = arith.addf %776, %775 : vector<4x256xf32>
    %778 = arith.mulf %774, %39 : vector<4x256xf32>
    %779 = arith.addf %778, %777 : vector<4x256xf32>
    %cst_49 = arith.constant 0.000000e+00 : f32
    %780 = vector.broadcast %cst_49 : f32 to vector<4x256xf32>
    %781 = arith.cmpf oge, %779, %780 : vector<4x256xf32>
    %cst_50 = arith.constant 2.000000e-01 : f32
    %782 = vector.broadcast %cst_50 : f32 to vector<4x256xf32>
    %783 = arith.mulf %782, %779 : vector<4x256xf32>
    %784 = arith.select %781, %779, %783 : vector<4x256xi1>, vector<4x256xf32>
    %c0_51 = arith.constant 0 : index
    %c0_52 = arith.constant 0 : index
    %785 = vector.load %arg8[%c0_51, %c0_52] : memref<4x36xf32, #tpu.memory_space<vmem>>, vector<4x36xf32>
    %cst_53 = arith.constant 0.000000e+00 : f32
    %786 = vector.broadcast %cst_53 : f32 to vector<4x256xf32>
    %c17_i32_54 = arith.constant 17 : i32
    %787 = tpu.dynamic_rotate %784 by %c17_i32_54 dim 1 : vector<4x256xf32>, i32 -> vector<4x256xf32>
    %788 = vector.broadcast %4 : vector<1x256xf32> to vector<4x256xf32>
    %789 = arith.mulf %787, %788 : vector<4x256xf32>
    %790 = vector.extract_strided_slice %785 {offsets = [0, 0], sizes = [4, 1], strides = [1, 1]} : vector<4x36xf32> to vector<4x1xf32>
    %791 = vector.extract_strided_slice %789 {offsets = [0, 0], sizes = [1, 256], strides = [1, 1]} : vector<4x256xf32> to vector<1x256xf32>
    %792 = vector.broadcast %790 : vector<4x1xf32> to vector<4x256xf32>
    %793 = vector.broadcast %791 : vector<1x256xf32> to vector<4x256xf32>
    %794 = arith.mulf %792, %793 : vector<4x256xf32>
    %795 = arith.addf %786, %794 : vector<4x256xf32>
    %796 = vector.extract_strided_slice %785 {offsets = [0, 1], sizes = [4, 1], strides = [1, 1]} : vector<4x36xf32> to vector<4x1xf32>
    %797 = vector.extract_strided_slice %789 {offsets = [1, 0], sizes = [1, 256], strides = [1, 1]} : vector<4x256xf32> to vector<1x256xf32>
    %798 = vector.broadcast %796 : vector<4x1xf32> to vector<4x256xf32>
    %799 = vector.broadcast %797 : vector<1x256xf32> to vector<4x256xf32>
    %800 = arith.mulf %798, %799 : vector<4x256xf32>
    %801 = arith.addf %795, %800 : vector<4x256xf32>
    %802 = vector.extract_strided_slice %785 {offsets = [0, 2], sizes = [4, 1], strides = [1, 1]} : vector<4x36xf32> to vector<4x1xf32>
    %803 = vector.extract_strided_slice %789 {offsets = [2, 0], sizes = [1, 256], strides = [1, 1]} : vector<4x256xf32> to vector<1x256xf32>
    %804 = vector.broadcast %802 : vector<4x1xf32> to vector<4x256xf32>
    %805 = vector.broadcast %803 : vector<1x256xf32> to vector<4x256xf32>
    %806 = arith.mulf %804, %805 : vector<4x256xf32>
    %807 = arith.addf %801, %806 : vector<4x256xf32>
    %808 = vector.extract_strided_slice %785 {offsets = [0, 3], sizes = [4, 1], strides = [1, 1]} : vector<4x36xf32> to vector<4x1xf32>
    %809 = vector.extract_strided_slice %789 {offsets = [3, 0], sizes = [1, 256], strides = [1, 1]} : vector<4x256xf32> to vector<1x256xf32>
    %810 = vector.broadcast %808 : vector<4x1xf32> to vector<4x256xf32>
    %811 = vector.broadcast %809 : vector<1x256xf32> to vector<4x256xf32>
    %812 = arith.mulf %810, %811 : vector<4x256xf32>
    %813 = arith.addf %807, %812 : vector<4x256xf32>
    %c16_i32_55 = arith.constant 16 : i32
    %814 = tpu.dynamic_rotate %784 by %c16_i32_55 dim 1 : vector<4x256xf32>, i32 -> vector<4x256xf32>
    %815 = vector.broadcast %5 : vector<1x256xf32> to vector<4x256xf32>
    %816 = arith.mulf %814, %815 : vector<4x256xf32>
    %817 = vector.extract_strided_slice %785 {offsets = [0, 4], sizes = [4, 1], strides = [1, 1]} : vector<4x36xf32> to vector<4x1xf32>
    %818 = vector.extract_strided_slice %816 {offsets = [0, 0], sizes = [1, 256], strides = [1, 1]} : vector<4x256xf32> to vector<1x256xf32>
    %819 = vector.broadcast %817 : vector<4x1xf32> to vector<4x256xf32>
    %820 = vector.broadcast %818 : vector<1x256xf32> to vector<4x256xf32>
    %821 = arith.mulf %819, %820 : vector<4x256xf32>
    %822 = arith.addf %813, %821 : vector<4x256xf32>
    %823 = vector.extract_strided_slice %785 {offsets = [0, 5], sizes = [4, 1], strides = [1, 1]} : vector<4x36xf32> to vector<4x1xf32>
    %824 = vector.extract_strided_slice %816 {offsets = [1, 0], sizes = [1, 256], strides = [1, 1]} : vector<4x256xf32> to vector<1x256xf32>
    %825 = vector.broadcast %823 : vector<4x1xf32> to vector<4x256xf32>
    %826 = vector.broadcast %824 : vector<1x256xf32> to vector<4x256xf32>
    %827 = arith.mulf %825, %826 : vector<4x256xf32>
    %828 = arith.addf %822, %827 : vector<4x256xf32>
    %829 = vector.extract_strided_slice %785 {offsets = [0, 6], sizes = [4, 1], strides = [1, 1]} : vector<4x36xf32> to vector<4x1xf32>
    %830 = vector.extract_strided_slice %816 {offsets = [2, 0], sizes = [1, 256], strides = [1, 1]} : vector<4x256xf32> to vector<1x256xf32>
    %831 = vector.broadcast %829 : vector<4x1xf32> to vector<4x256xf32>
    %832 = vector.broadcast %830 : vector<1x256xf32> to vector<4x256xf32>
    %833 = arith.mulf %831, %832 : vector<4x256xf32>
    %834 = arith.addf %828, %833 : vector<4x256xf32>
    %835 = vector.extract_strided_slice %785 {offsets = [0, 7], sizes = [4, 1], strides = [1, 1]} : vector<4x36xf32> to vector<4x1xf32>
    %836 = vector.extract_strided_slice %816 {offsets = [3, 0], sizes = [1, 256], strides = [1, 1]} : vector<4x256xf32> to vector<1x256xf32>
    %837 = vector.broadcast %835 : vector<4x1xf32> to vector<4x256xf32>
    %838 = vector.broadcast %836 : vector<1x256xf32> to vector<4x256xf32>
    %839 = arith.mulf %837, %838 : vector<4x256xf32>
    %840 = arith.addf %834, %839 : vector<4x256xf32>
    %c15_i32_56 = arith.constant 15 : i32
    %841 = tpu.dynamic_rotate %784 by %c15_i32_56 dim 1 : vector<4x256xf32>, i32 -> vector<4x256xf32>
    %842 = vector.broadcast %6 : vector<1x256xf32> to vector<4x256xf32>
    %843 = arith.mulf %841, %842 : vector<4x256xf32>
    %844 = vector.extract_strided_slice %785 {offsets = [0, 8], sizes = [4, 1], strides = [1, 1]} : vector<4x36xf32> to vector<4x1xf32>
    %845 = vector.extract_strided_slice %843 {offsets = [0, 0], sizes = [1, 256], strides = [1, 1]} : vector<4x256xf32> to vector<1x256xf32>
    %846 = vector.broadcast %844 : vector<4x1xf32> to vector<4x256xf32>
    %847 = vector.broadcast %845 : vector<1x256xf32> to vector<4x256xf32>
    %848 = arith.mulf %846, %847 : vector<4x256xf32>
    %849 = arith.addf %840, %848 : vector<4x256xf32>
    %850 = vector.extract_strided_slice %785 {offsets = [0, 9], sizes = [4, 1], strides = [1, 1]} : vector<4x36xf32> to vector<4x1xf32>
    %851 = vector.extract_strided_slice %843 {offsets = [1, 0], sizes = [1, 256], strides = [1, 1]} : vector<4x256xf32> to vector<1x256xf32>
    %852 = vector.broadcast %850 : vector<4x1xf32> to vector<4x256xf32>
    %853 = vector.broadcast %851 : vector<1x256xf32> to vector<4x256xf32>
    %854 = arith.mulf %852, %853 : vector<4x256xf32>
    %855 = arith.addf %849, %854 : vector<4x256xf32>
    %856 = vector.extract_strided_slice %785 {offsets = [0, 10], sizes = [4, 1], strides = [1, 1]} : vector<4x36xf32> to vector<4x1xf32>
    %857 = vector.extract_strided_slice %843 {offsets = [2, 0], sizes = [1, 256], strides = [1, 1]} : vector<4x256xf32> to vector<1x256xf32>
    %858 = vector.broadcast %856 : vector<4x1xf32> to vector<4x256xf32>
    %859 = vector.broadcast %857 : vector<1x256xf32> to vector<4x256xf32>
    %860 = arith.mulf %858, %859 : vector<4x256xf32>
    %861 = arith.addf %855, %860 : vector<4x256xf32>
    %862 = vector.extract_strided_slice %785 {offsets = [0, 11], sizes = [4, 1], strides = [1, 1]} : vector<4x36xf32> to vector<4x1xf32>
    %863 = vector.extract_strided_slice %843 {offsets = [3, 0], sizes = [1, 256], strides = [1, 1]} : vector<4x256xf32> to vector<1x256xf32>
    %864 = vector.broadcast %862 : vector<4x1xf32> to vector<4x256xf32>
    %865 = vector.broadcast %863 : vector<1x256xf32> to vector<4x256xf32>
    %866 = arith.mulf %864, %865 : vector<4x256xf32>
    %867 = arith.addf %861, %866 : vector<4x256xf32>
    %c1_i32_57 = arith.constant 1 : i32
    %868 = tpu.dynamic_rotate %784 by %c1_i32_57 dim 1 : vector<4x256xf32>, i32 -> vector<4x256xf32>
    %869 = vector.broadcast %7 : vector<1x256xf32> to vector<4x256xf32>
    %870 = arith.mulf %868, %869 : vector<4x256xf32>
    %871 = vector.extract_strided_slice %785 {offsets = [0, 12], sizes = [4, 1], strides = [1, 1]} : vector<4x36xf32> to vector<4x1xf32>
    %872 = vector.extract_strided_slice %870 {offsets = [0, 0], sizes = [1, 256], strides = [1, 1]} : vector<4x256xf32> to vector<1x256xf32>
    %873 = vector.broadcast %871 : vector<4x1xf32> to vector<4x256xf32>
    %874 = vector.broadcast %872 : vector<1x256xf32> to vector<4x256xf32>
    %875 = arith.mulf %873, %874 : vector<4x256xf32>
    %876 = arith.addf %867, %875 : vector<4x256xf32>
    %877 = vector.extract_strided_slice %785 {offsets = [0, 13], sizes = [4, 1], strides = [1, 1]} : vector<4x36xf32> to vector<4x1xf32>
    %878 = vector.extract_strided_slice %870 {offsets = [1, 0], sizes = [1, 256], strides = [1, 1]} : vector<4x256xf32> to vector<1x256xf32>
    %879 = vector.broadcast %877 : vector<4x1xf32> to vector<4x256xf32>
    %880 = vector.broadcast %878 : vector<1x256xf32> to vector<4x256xf32>
    %881 = arith.mulf %879, %880 : vector<4x256xf32>
    %882 = arith.addf %876, %881 : vector<4x256xf32>
    %883 = vector.extract_strided_slice %785 {offsets = [0, 14], sizes = [4, 1], strides = [1, 1]} : vector<4x36xf32> to vector<4x1xf32>
    %884 = vector.extract_strided_slice %870 {offsets = [2, 0], sizes = [1, 256], strides = [1, 1]} : vector<4x256xf32> to vector<1x256xf32>
    %885 = vector.broadcast %883 : vector<4x1xf32> to vector<4x256xf32>
    %886 = vector.broadcast %884 : vector<1x256xf32> to vector<4x256xf32>
    %887 = arith.mulf %885, %886 : vector<4x256xf32>
    %888 = arith.addf %882, %887 : vector<4x256xf32>
    %889 = vector.extract_strided_slice %785 {offsets = [0, 15], sizes = [4, 1], strides = [1, 1]} : vector<4x36xf32> to vector<4x1xf32>
    %890 = vector.extract_strided_slice %870 {offsets = [3, 0], sizes = [1, 256], strides = [1, 1]} : vector<4x256xf32> to vector<1x256xf32>
    %891 = vector.broadcast %889 : vector<4x1xf32> to vector<4x256xf32>
    %892 = vector.broadcast %890 : vector<1x256xf32> to vector<4x256xf32>
    %893 = arith.mulf %891, %892 : vector<4x256xf32>
    %894 = arith.addf %888, %893 : vector<4x256xf32>
    %895 = vector.extract_strided_slice %785 {offsets = [0, 16], sizes = [4, 1], strides = [1, 1]} : vector<4x36xf32> to vector<4x1xf32>
    %896 = vector.extract_strided_slice %784 {offsets = [0, 0], sizes = [1, 256], strides = [1, 1]} : vector<4x256xf32> to vector<1x256xf32>
    %897 = vector.broadcast %895 : vector<4x1xf32> to vector<4x256xf32>
    %898 = vector.broadcast %896 : vector<1x256xf32> to vector<4x256xf32>
    %899 = arith.mulf %897, %898 : vector<4x256xf32>
    %900 = arith.addf %894, %899 : vector<4x256xf32>
    %901 = vector.extract_strided_slice %785 {offsets = [0, 17], sizes = [4, 1], strides = [1, 1]} : vector<4x36xf32> to vector<4x1xf32>
    %902 = vector.extract_strided_slice %784 {offsets = [1, 0], sizes = [1, 256], strides = [1, 1]} : vector<4x256xf32> to vector<1x256xf32>
    %903 = vector.broadcast %901 : vector<4x1xf32> to vector<4x256xf32>
    %904 = vector.broadcast %902 : vector<1x256xf32> to vector<4x256xf32>
    %905 = arith.mulf %903, %904 : vector<4x256xf32>
    %906 = arith.addf %900, %905 : vector<4x256xf32>
    %907 = vector.extract_strided_slice %785 {offsets = [0, 18], sizes = [4, 1], strides = [1, 1]} : vector<4x36xf32> to vector<4x1xf32>
    %908 = vector.extract_strided_slice %784 {offsets = [2, 0], sizes = [1, 256], strides = [1, 1]} : vector<4x256xf32> to vector<1x256xf32>
    %909 = vector.broadcast %907 : vector<4x1xf32> to vector<4x256xf32>
    %910 = vector.broadcast %908 : vector<1x256xf32> to vector<4x256xf32>
    %911 = arith.mulf %909, %910 : vector<4x256xf32>
    %912 = arith.addf %906, %911 : vector<4x256xf32>
    %913 = vector.extract_strided_slice %785 {offsets = [0, 19], sizes = [4, 1], strides = [1, 1]} : vector<4x36xf32> to vector<4x1xf32>
    %914 = vector.extract_strided_slice %784 {offsets = [3, 0], sizes = [1, 256], strides = [1, 1]} : vector<4x256xf32> to vector<1x256xf32>
    %915 = vector.broadcast %913 : vector<4x1xf32> to vector<4x256xf32>
    %916 = vector.broadcast %914 : vector<1x256xf32> to vector<4x256xf32>
    %917 = arith.mulf %915, %916 : vector<4x256xf32>
    %918 = arith.addf %912, %917 : vector<4x256xf32>
    %c255_i32_58 = arith.constant 255 : i32
    %919 = tpu.dynamic_rotate %784 by %c255_i32_58 dim 1 : vector<4x256xf32>, i32 -> vector<4x256xf32>
    %920 = vector.broadcast %8 : vector<1x256xf32> to vector<4x256xf32>
    %921 = arith.mulf %919, %920 : vector<4x256xf32>
    %922 = vector.extract_strided_slice %785 {offsets = [0, 20], sizes = [4, 1], strides = [1, 1]} : vector<4x36xf32> to vector<4x1xf32>
    %923 = vector.extract_strided_slice %921 {offsets = [0, 0], sizes = [1, 256], strides = [1, 1]} : vector<4x256xf32> to vector<1x256xf32>
    %924 = vector.broadcast %922 : vector<4x1xf32> to vector<4x256xf32>
    %925 = vector.broadcast %923 : vector<1x256xf32> to vector<4x256xf32>
    %926 = arith.mulf %924, %925 : vector<4x256xf32>
    %927 = arith.addf %918, %926 : vector<4x256xf32>
    %928 = vector.extract_strided_slice %785 {offsets = [0, 21], sizes = [4, 1], strides = [1, 1]} : vector<4x36xf32> to vector<4x1xf32>
    %929 = vector.extract_strided_slice %921 {offsets = [1, 0], sizes = [1, 256], strides = [1, 1]} : vector<4x256xf32> to vector<1x256xf32>
    %930 = vector.broadcast %928 : vector<4x1xf32> to vector<4x256xf32>
    %931 = vector.broadcast %929 : vector<1x256xf32> to vector<4x256xf32>
    %932 = arith.mulf %930, %931 : vector<4x256xf32>
    %933 = arith.addf %927, %932 : vector<4x256xf32>
    %934 = vector.extract_strided_slice %785 {offsets = [0, 22], sizes = [4, 1], strides = [1, 1]} : vector<4x36xf32> to vector<4x1xf32>
    %935 = vector.extract_strided_slice %921 {offsets = [2, 0], sizes = [1, 256], strides = [1, 1]} : vector<4x256xf32> to vector<1x256xf32>
    %936 = vector.broadcast %934 : vector<4x1xf32> to vector<4x256xf32>
    %937 = vector.broadcast %935 : vector<1x256xf32> to vector<4x256xf32>
    %938 = arith.mulf %936, %937 : vector<4x256xf32>
    %939 = arith.addf %933, %938 : vector<4x256xf32>
    %940 = vector.extract_strided_slice %785 {offsets = [0, 23], sizes = [4, 1], strides = [1, 1]} : vector<4x36xf32> to vector<4x1xf32>
    %941 = vector.extract_strided_slice %921 {offsets = [3, 0], sizes = [1, 256], strides = [1, 1]} : vector<4x256xf32> to vector<1x256xf32>
    %942 = vector.broadcast %940 : vector<4x1xf32> to vector<4x256xf32>
    %943 = vector.broadcast %941 : vector<1x256xf32> to vector<4x256xf32>
    %944 = arith.mulf %942, %943 : vector<4x256xf32>
    %945 = arith.addf %939, %944 : vector<4x256xf32>
    %c241_i32_59 = arith.constant 241 : i32
    %946 = tpu.dynamic_rotate %784 by %c241_i32_59 dim 1 : vector<4x256xf32>, i32 -> vector<4x256xf32>
    %947 = vector.broadcast %9 : vector<1x256xf32> to vector<4x256xf32>
    %948 = arith.mulf %946, %947 : vector<4x256xf32>
    %949 = vector.extract_strided_slice %785 {offsets = [0, 24], sizes = [4, 1], strides = [1, 1]} : vector<4x36xf32> to vector<4x1xf32>
    %950 = vector.extract_strided_slice %948 {offsets = [0, 0], sizes = [1, 256], strides = [1, 1]} : vector<4x256xf32> to vector<1x256xf32>
    %951 = vector.broadcast %949 : vector<4x1xf32> to vector<4x256xf32>
    %952 = vector.broadcast %950 : vector<1x256xf32> to vector<4x256xf32>
    %953 = arith.mulf %951, %952 : vector<4x256xf32>
    %954 = arith.addf %945, %953 : vector<4x256xf32>
    %955 = vector.extract_strided_slice %785 {offsets = [0, 25], sizes = [4, 1], strides = [1, 1]} : vector<4x36xf32> to vector<4x1xf32>
    %956 = vector.extract_strided_slice %948 {offsets = [1, 0], sizes = [1, 256], strides = [1, 1]} : vector<4x256xf32> to vector<1x256xf32>
    %957 = vector.broadcast %955 : vector<4x1xf32> to vector<4x256xf32>
    %958 = vector.broadcast %956 : vector<1x256xf32> to vector<4x256xf32>
    %959 = arith.mulf %957, %958 : vector<4x256xf32>
    %960 = arith.addf %954, %959 : vector<4x256xf32>
    %961 = vector.extract_strided_slice %785 {offsets = [0, 26], sizes = [4, 1], strides = [1, 1]} : vector<4x36xf32> to vector<4x1xf32>
    %962 = vector.extract_strided_slice %948 {offsets = [2, 0], sizes = [1, 256], strides = [1, 1]} : vector<4x256xf32> to vector<1x256xf32>
    %963 = vector.broadcast %961 : vector<4x1xf32> to vector<4x256xf32>
    %964 = vector.broadcast %962 : vector<1x256xf32> to vector<4x256xf32>
    %965 = arith.mulf %963, %964 : vector<4x256xf32>
    %966 = arith.addf %960, %965 : vector<4x256xf32>
    %967 = vector.extract_strided_slice %785 {offsets = [0, 27], sizes = [4, 1], strides = [1, 1]} : vector<4x36xf32> to vector<4x1xf32>
    %968 = vector.extract_strided_slice %948 {offsets = [3, 0], sizes = [1, 256], strides = [1, 1]} : vector<4x256xf32> to vector<1x256xf32>
    %969 = vector.broadcast %967 : vector<4x1xf32> to vector<4x256xf32>
    %970 = vector.broadcast %968 : vector<1x256xf32> to vector<4x256xf32>
    %971 = arith.mulf %969, %970 : vector<4x256xf32>
    %972 = arith.addf %966, %971 : vector<4x256xf32>
    %c240_i32_60 = arith.constant 240 : i32
    %973 = tpu.dynamic_rotate %784 by %c240_i32_60 dim 1 : vector<4x256xf32>, i32 -> vector<4x256xf32>
    %974 = vector.broadcast %10 : vector<1x256xf32> to vector<4x256xf32>
    %975 = arith.mulf %973, %974 : vector<4x256xf32>
    %976 = vector.extract_strided_slice %785 {offsets = [0, 28], sizes = [4, 1], strides = [1, 1]} : vector<4x36xf32> to vector<4x1xf32>
    %977 = vector.extract_strided_slice %975 {offsets = [0, 0], sizes = [1, 256], strides = [1, 1]} : vector<4x256xf32> to vector<1x256xf32>
    %978 = vector.broadcast %976 : vector<4x1xf32> to vector<4x256xf32>
    %979 = vector.broadcast %977 : vector<1x256xf32> to vector<4x256xf32>
    %980 = arith.mulf %978, %979 : vector<4x256xf32>
    %981 = arith.addf %972, %980 : vector<4x256xf32>
    %982 = vector.extract_strided_slice %785 {offsets = [0, 29], sizes = [4, 1], strides = [1, 1]} : vector<4x36xf32> to vector<4x1xf32>
    %983 = vector.extract_strided_slice %975 {offsets = [1, 0], sizes = [1, 256], strides = [1, 1]} : vector<4x256xf32> to vector<1x256xf32>
    %984 = vector.broadcast %982 : vector<4x1xf32> to vector<4x256xf32>
    %985 = vector.broadcast %983 : vector<1x256xf32> to vector<4x256xf32>
    %986 = arith.mulf %984, %985 : vector<4x256xf32>
    %987 = arith.addf %981, %986 : vector<4x256xf32>
    %988 = vector.extract_strided_slice %785 {offsets = [0, 30], sizes = [4, 1], strides = [1, 1]} : vector<4x36xf32> to vector<4x1xf32>
    %989 = vector.extract_strided_slice %975 {offsets = [2, 0], sizes = [1, 256], strides = [1, 1]} : vector<4x256xf32> to vector<1x256xf32>
    %990 = vector.broadcast %988 : vector<4x1xf32> to vector<4x256xf32>
    %991 = vector.broadcast %989 : vector<1x256xf32> to vector<4x256xf32>
    %992 = arith.mulf %990, %991 : vector<4x256xf32>
    %993 = arith.addf %987, %992 : vector<4x256xf32>
    %994 = vector.extract_strided_slice %785 {offsets = [0, 31], sizes = [4, 1], strides = [1, 1]} : vector<4x36xf32> to vector<4x1xf32>
    %995 = vector.extract_strided_slice %975 {offsets = [3, 0], sizes = [1, 256], strides = [1, 1]} : vector<4x256xf32> to vector<1x256xf32>
    %996 = vector.broadcast %994 : vector<4x1xf32> to vector<4x256xf32>
    %997 = vector.broadcast %995 : vector<1x256xf32> to vector<4x256xf32>
    %998 = arith.mulf %996, %997 : vector<4x256xf32>
    %999 = arith.addf %993, %998 : vector<4x256xf32>
    %c239_i32_61 = arith.constant 239 : i32
    %1000 = tpu.dynamic_rotate %784 by %c239_i32_61 dim 1 : vector<4x256xf32>, i32 -> vector<4x256xf32>
    %1001 = vector.broadcast %11 : vector<1x256xf32> to vector<4x256xf32>
    %1002 = arith.mulf %1000, %1001 : vector<4x256xf32>
    %1003 = vector.extract_strided_slice %785 {offsets = [0, 32], sizes = [4, 1], strides = [1, 1]} : vector<4x36xf32> to vector<4x1xf32>
    %1004 = vector.extract_strided_slice %1002 {offsets = [0, 0], sizes = [1, 256], strides = [1, 1]} : vector<4x256xf32> to vector<1x256xf32>
    %1005 = vector.broadcast %1003 : vector<4x1xf32> to vector<4x256xf32>
    %1006 = vector.broadcast %1004 : vector<1x256xf32> to vector<4x256xf32>
    %1007 = arith.mulf %1005, %1006 : vector<4x256xf32>
    %1008 = arith.addf %999, %1007 : vector<4x256xf32>
    %1009 = vector.extract_strided_slice %785 {offsets = [0, 33], sizes = [4, 1], strides = [1, 1]} : vector<4x36xf32> to vector<4x1xf32>
    %1010 = vector.extract_strided_slice %1002 {offsets = [1, 0], sizes = [1, 256], strides = [1, 1]} : vector<4x256xf32> to vector<1x256xf32>
    %1011 = vector.broadcast %1009 : vector<4x1xf32> to vector<4x256xf32>
    %1012 = vector.broadcast %1010 : vector<1x256xf32> to vector<4x256xf32>
    %1013 = arith.mulf %1011, %1012 : vector<4x256xf32>
    %1014 = arith.addf %1008, %1013 : vector<4x256xf32>
    %1015 = vector.extract_strided_slice %785 {offsets = [0, 34], sizes = [4, 1], strides = [1, 1]} : vector<4x36xf32> to vector<4x1xf32>
    %1016 = vector.extract_strided_slice %1002 {offsets = [2, 0], sizes = [1, 256], strides = [1, 1]} : vector<4x256xf32> to vector<1x256xf32>
    %1017 = vector.broadcast %1015 : vector<4x1xf32> to vector<4x256xf32>
    %1018 = vector.broadcast %1016 : vector<1x256xf32> to vector<4x256xf32>
    %1019 = arith.mulf %1017, %1018 : vector<4x256xf32>
    %1020 = arith.addf %1014, %1019 : vector<4x256xf32>
    %1021 = vector.extract_strided_slice %785 {offsets = [0, 35], sizes = [4, 1], strides = [1, 1]} : vector<4x36xf32> to vector<4x1xf32>
    %1022 = vector.extract_strided_slice %1002 {offsets = [3, 0], sizes = [1, 256], strides = [1, 1]} : vector<4x256xf32> to vector<1x256xf32>
    %1023 = vector.broadcast %1021 : vector<4x1xf32> to vector<4x256xf32>
    %1024 = vector.broadcast %1022 : vector<1x256xf32> to vector<4x256xf32>
    %1025 = arith.mulf %1023, %1024 : vector<4x256xf32>
    %1026 = arith.addf %1020, %1025 : vector<4x256xf32>
    %1027 = arith.mulf %774, %1026 : vector<4x256xf32>
    %1028 = arith.addf %1027, %777 : vector<4x256xf32>
    %cst_62 = arith.constant 0.000000e+00 : f32
    %1029 = vector.broadcast %cst_62 : f32 to vector<4x256xf32>
    %1030 = arith.cmpf oge, %1028, %1029 : vector<4x256xf32>
    %cst_63 = arith.constant 2.000000e-01 : f32
    %1031 = vector.broadcast %cst_63 : f32 to vector<4x256xf32>
    %1032 = arith.mulf %1031, %1028 : vector<4x256xf32>
    %1033 = arith.select %1030, %1028, %1032 : vector<4x256xi1>, vector<4x256xf32>
    %c0_64 = arith.constant 0 : index
    %c0_65 = arith.constant 0 : index
    %1034 = vector.load %arg9[%c0_64, %c0_65] : memref<4x36xf32, #tpu.memory_space<vmem>>, vector<4x36xf32>
    %cst_66 = arith.constant 0.000000e+00 : f32
    %1035 = vector.broadcast %cst_66 : f32 to vector<4x256xf32>
    %c17_i32_67 = arith.constant 17 : i32
    %1036 = tpu.dynamic_rotate %1033 by %c17_i32_67 dim 1 : vector<4x256xf32>, i32 -> vector<4x256xf32>
    %1037 = vector.broadcast %4 : vector<1x256xf32> to vector<4x256xf32>
    %1038 = arith.mulf %1036, %1037 : vector<4x256xf32>
    %1039 = vector.extract_strided_slice %1034 {offsets = [0, 0], sizes = [4, 1], strides = [1, 1]} : vector<4x36xf32> to vector<4x1xf32>
    %1040 = vector.extract_strided_slice %1038 {offsets = [0, 0], sizes = [1, 256], strides = [1, 1]} : vector<4x256xf32> to vector<1x256xf32>
    %1041 = vector.broadcast %1039 : vector<4x1xf32> to vector<4x256xf32>
    %1042 = vector.broadcast %1040 : vector<1x256xf32> to vector<4x256xf32>
    %1043 = arith.mulf %1041, %1042 : vector<4x256xf32>
    %1044 = arith.addf %1035, %1043 : vector<4x256xf32>
    %1045 = vector.extract_strided_slice %1034 {offsets = [0, 1], sizes = [4, 1], strides = [1, 1]} : vector<4x36xf32> to vector<4x1xf32>
    %1046 = vector.extract_strided_slice %1038 {offsets = [1, 0], sizes = [1, 256], strides = [1, 1]} : vector<4x256xf32> to vector<1x256xf32>
    %1047 = vector.broadcast %1045 : vector<4x1xf32> to vector<4x256xf32>
    %1048 = vector.broadcast %1046 : vector<1x256xf32> to vector<4x256xf32>
    %1049 = arith.mulf %1047, %1048 : vector<4x256xf32>
    %1050 = arith.addf %1044, %1049 : vector<4x256xf32>
    %1051 = vector.extract_strided_slice %1034 {offsets = [0, 2], sizes = [4, 1], strides = [1, 1]} : vector<4x36xf32> to vector<4x1xf32>
    %1052 = vector.extract_strided_slice %1038 {offsets = [2, 0], sizes = [1, 256], strides = [1, 1]} : vector<4x256xf32> to vector<1x256xf32>
    %1053 = vector.broadcast %1051 : vector<4x1xf32> to vector<4x256xf32>
    %1054 = vector.broadcast %1052 : vector<1x256xf32> to vector<4x256xf32>
    %1055 = arith.mulf %1053, %1054 : vector<4x256xf32>
    %1056 = arith.addf %1050, %1055 : vector<4x256xf32>
    %1057 = vector.extract_strided_slice %1034 {offsets = [0, 3], sizes = [4, 1], strides = [1, 1]} : vector<4x36xf32> to vector<4x1xf32>
    %1058 = vector.extract_strided_slice %1038 {offsets = [3, 0], sizes = [1, 256], strides = [1, 1]} : vector<4x256xf32> to vector<1x256xf32>
    %1059 = vector.broadcast %1057 : vector<4x1xf32> to vector<4x256xf32>
    %1060 = vector.broadcast %1058 : vector<1x256xf32> to vector<4x256xf32>
    %1061 = arith.mulf %1059, %1060 : vector<4x256xf32>
    %1062 = arith.addf %1056, %1061 : vector<4x256xf32>
    %c16_i32_68 = arith.constant 16 : i32
    %1063 = tpu.dynamic_rotate %1033 by %c16_i32_68 dim 1 : vector<4x256xf32>, i32 -> vector<4x256xf32>
    %1064 = vector.broadcast %5 : vector<1x256xf32> to vector<4x256xf32>
    %1065 = arith.mulf %1063, %1064 : vector<4x256xf32>
    %1066 = vector.extract_strided_slice %1034 {offsets = [0, 4], sizes = [4, 1], strides = [1, 1]} : vector<4x36xf32> to vector<4x1xf32>
    %1067 = vector.extract_strided_slice %1065 {offsets = [0, 0], sizes = [1, 256], strides = [1, 1]} : vector<4x256xf32> to vector<1x256xf32>
    %1068 = vector.broadcast %1066 : vector<4x1xf32> to vector<4x256xf32>
    %1069 = vector.broadcast %1067 : vector<1x256xf32> to vector<4x256xf32>
    %1070 = arith.mulf %1068, %1069 : vector<4x256xf32>
    %1071 = arith.addf %1062, %1070 : vector<4x256xf32>
    %1072 = vector.extract_strided_slice %1034 {offsets = [0, 5], sizes = [4, 1], strides = [1, 1]} : vector<4x36xf32> to vector<4x1xf32>
    %1073 = vector.extract_strided_slice %1065 {offsets = [1, 0], sizes = [1, 256], strides = [1, 1]} : vector<4x256xf32> to vector<1x256xf32>
    %1074 = vector.broadcast %1072 : vector<4x1xf32> to vector<4x256xf32>
    %1075 = vector.broadcast %1073 : vector<1x256xf32> to vector<4x256xf32>
    %1076 = arith.mulf %1074, %1075 : vector<4x256xf32>
    %1077 = arith.addf %1071, %1076 : vector<4x256xf32>
    %1078 = vector.extract_strided_slice %1034 {offsets = [0, 6], sizes = [4, 1], strides = [1, 1]} : vector<4x36xf32> to vector<4x1xf32>
    %1079 = vector.extract_strided_slice %1065 {offsets = [2, 0], sizes = [1, 256], strides = [1, 1]} : vector<4x256xf32> to vector<1x256xf32>
    %1080 = vector.broadcast %1078 : vector<4x1xf32> to vector<4x256xf32>
    %1081 = vector.broadcast %1079 : vector<1x256xf32> to vector<4x256xf32>
    %1082 = arith.mulf %1080, %1081 : vector<4x256xf32>
    %1083 = arith.addf %1077, %1082 : vector<4x256xf32>
    %1084 = vector.extract_strided_slice %1034 {offsets = [0, 7], sizes = [4, 1], strides = [1, 1]} : vector<4x36xf32> to vector<4x1xf32>
    %1085 = vector.extract_strided_slice %1065 {offsets = [3, 0], sizes = [1, 256], strides = [1, 1]} : vector<4x256xf32> to vector<1x256xf32>
    %1086 = vector.broadcast %1084 : vector<4x1xf32> to vector<4x256xf32>
    %1087 = vector.broadcast %1085 : vector<1x256xf32> to vector<4x256xf32>
    %1088 = arith.mulf %1086, %1087 : vector<4x256xf32>
    %1089 = arith.addf %1083, %1088 : vector<4x256xf32>
    %c15_i32_69 = arith.constant 15 : i32
    %1090 = tpu.dynamic_rotate %1033 by %c15_i32_69 dim 1 : vector<4x256xf32>, i32 -> vector<4x256xf32>
    %1091 = vector.broadcast %6 : vector<1x256xf32> to vector<4x256xf32>
    %1092 = arith.mulf %1090, %1091 : vector<4x256xf32>
    %1093 = vector.extract_strided_slice %1034 {offsets = [0, 8], sizes = [4, 1], strides = [1, 1]} : vector<4x36xf32> to vector<4x1xf32>
    %1094 = vector.extract_strided_slice %1092 {offsets = [0, 0], sizes = [1, 256], strides = [1, 1]} : vector<4x256xf32> to vector<1x256xf32>
    %1095 = vector.broadcast %1093 : vector<4x1xf32> to vector<4x256xf32>
    %1096 = vector.broadcast %1094 : vector<1x256xf32> to vector<4x256xf32>
    %1097 = arith.mulf %1095, %1096 : vector<4x256xf32>
    %1098 = arith.addf %1089, %1097 : vector<4x256xf32>
    %1099 = vector.extract_strided_slice %1034 {offsets = [0, 9], sizes = [4, 1], strides = [1, 1]} : vector<4x36xf32> to vector<4x1xf32>
    %1100 = vector.extract_strided_slice %1092 {offsets = [1, 0], sizes = [1, 256], strides = [1, 1]} : vector<4x256xf32> to vector<1x256xf32>
    %1101 = vector.broadcast %1099 : vector<4x1xf32> to vector<4x256xf32>
    %1102 = vector.broadcast %1100 : vector<1x256xf32> to vector<4x256xf32>
    %1103 = arith.mulf %1101, %1102 : vector<4x256xf32>
    %1104 = arith.addf %1098, %1103 : vector<4x256xf32>
    %1105 = vector.extract_strided_slice %1034 {offsets = [0, 10], sizes = [4, 1], strides = [1, 1]} : vector<4x36xf32> to vector<4x1xf32>
    %1106 = vector.extract_strided_slice %1092 {offsets = [2, 0], sizes = [1, 256], strides = [1, 1]} : vector<4x256xf32> to vector<1x256xf32>
    %1107 = vector.broadcast %1105 : vector<4x1xf32> to vector<4x256xf32>
    %1108 = vector.broadcast %1106 : vector<1x256xf32> to vector<4x256xf32>
    %1109 = arith.mulf %1107, %1108 : vector<4x256xf32>
    %1110 = arith.addf %1104, %1109 : vector<4x256xf32>
    %1111 = vector.extract_strided_slice %1034 {offsets = [0, 11], sizes = [4, 1], strides = [1, 1]} : vector<4x36xf32> to vector<4x1xf32>
    %1112 = vector.extract_strided_slice %1092 {offsets = [3, 0], sizes = [1, 256], strides = [1, 1]} : vector<4x256xf32> to vector<1x256xf32>
    %1113 = vector.broadcast %1111 : vector<4x1xf32> to vector<4x256xf32>
    %1114 = vector.broadcast %1112 : vector<1x256xf32> to vector<4x256xf32>
    %1115 = arith.mulf %1113, %1114 : vector<4x256xf32>
    %1116 = arith.addf %1110, %1115 : vector<4x256xf32>
    %c1_i32_70 = arith.constant 1 : i32
    %1117 = tpu.dynamic_rotate %1033 by %c1_i32_70 dim 1 : vector<4x256xf32>, i32 -> vector<4x256xf32>
    %1118 = vector.broadcast %7 : vector<1x256xf32> to vector<4x256xf32>
    %1119 = arith.mulf %1117, %1118 : vector<4x256xf32>
    %1120 = vector.extract_strided_slice %1034 {offsets = [0, 12], sizes = [4, 1], strides = [1, 1]} : vector<4x36xf32> to vector<4x1xf32>
    %1121 = vector.extract_strided_slice %1119 {offsets = [0, 0], sizes = [1, 256], strides = [1, 1]} : vector<4x256xf32> to vector<1x256xf32>
    %1122 = vector.broadcast %1120 : vector<4x1xf32> to vector<4x256xf32>
    %1123 = vector.broadcast %1121 : vector<1x256xf32> to vector<4x256xf32>
    %1124 = arith.mulf %1122, %1123 : vector<4x256xf32>
    %1125 = arith.addf %1116, %1124 : vector<4x256xf32>
    %1126 = vector.extract_strided_slice %1034 {offsets = [0, 13], sizes = [4, 1], strides = [1, 1]} : vector<4x36xf32> to vector<4x1xf32>
    %1127 = vector.extract_strided_slice %1119 {offsets = [1, 0], sizes = [1, 256], strides = [1, 1]} : vector<4x256xf32> to vector<1x256xf32>
    %1128 = vector.broadcast %1126 : vector<4x1xf32> to vector<4x256xf32>
    %1129 = vector.broadcast %1127 : vector<1x256xf32> to vector<4x256xf32>
    %1130 = arith.mulf %1128, %1129 : vector<4x256xf32>
    %1131 = arith.addf %1125, %1130 : vector<4x256xf32>
    %1132 = vector.extract_strided_slice %1034 {offsets = [0, 14], sizes = [4, 1], strides = [1, 1]} : vector<4x36xf32> to vector<4x1xf32>
    %1133 = vector.extract_strided_slice %1119 {offsets = [2, 0], sizes = [1, 256], strides = [1, 1]} : vector<4x256xf32> to vector<1x256xf32>
    %1134 = vector.broadcast %1132 : vector<4x1xf32> to vector<4x256xf32>
    %1135 = vector.broadcast %1133 : vector<1x256xf32> to vector<4x256xf32>
    %1136 = arith.mulf %1134, %1135 : vector<4x256xf32>
    %1137 = arith.addf %1131, %1136 : vector<4x256xf32>
    %1138 = vector.extract_strided_slice %1034 {offsets = [0, 15], sizes = [4, 1], strides = [1, 1]} : vector<4x36xf32> to vector<4x1xf32>
    %1139 = vector.extract_strided_slice %1119 {offsets = [3, 0], sizes = [1, 256], strides = [1, 1]} : vector<4x256xf32> to vector<1x256xf32>
    %1140 = vector.broadcast %1138 : vector<4x1xf32> to vector<4x256xf32>
    %1141 = vector.broadcast %1139 : vector<1x256xf32> to vector<4x256xf32>
    %1142 = arith.mulf %1140, %1141 : vector<4x256xf32>
    %1143 = arith.addf %1137, %1142 : vector<4x256xf32>
    %1144 = vector.extract_strided_slice %1034 {offsets = [0, 16], sizes = [4, 1], strides = [1, 1]} : vector<4x36xf32> to vector<4x1xf32>
    %1145 = vector.extract_strided_slice %1033 {offsets = [0, 0], sizes = [1, 256], strides = [1, 1]} : vector<4x256xf32> to vector<1x256xf32>
    %1146 = vector.broadcast %1144 : vector<4x1xf32> to vector<4x256xf32>
    %1147 = vector.broadcast %1145 : vector<1x256xf32> to vector<4x256xf32>
    %1148 = arith.mulf %1146, %1147 : vector<4x256xf32>
    %1149 = arith.addf %1143, %1148 : vector<4x256xf32>
    %1150 = vector.extract_strided_slice %1034 {offsets = [0, 17], sizes = [4, 1], strides = [1, 1]} : vector<4x36xf32> to vector<4x1xf32>
    %1151 = vector.extract_strided_slice %1033 {offsets = [1, 0], sizes = [1, 256], strides = [1, 1]} : vector<4x256xf32> to vector<1x256xf32>
    %1152 = vector.broadcast %1150 : vector<4x1xf32> to vector<4x256xf32>
    %1153 = vector.broadcast %1151 : vector<1x256xf32> to vector<4x256xf32>
    %1154 = arith.mulf %1152, %1153 : vector<4x256xf32>
    %1155 = arith.addf %1149, %1154 : vector<4x256xf32>
    %1156 = vector.extract_strided_slice %1034 {offsets = [0, 18], sizes = [4, 1], strides = [1, 1]} : vector<4x36xf32> to vector<4x1xf32>
    %1157 = vector.extract_strided_slice %1033 {offsets = [2, 0], sizes = [1, 256], strides = [1, 1]} : vector<4x256xf32> to vector<1x256xf32>
    %1158 = vector.broadcast %1156 : vector<4x1xf32> to vector<4x256xf32>
    %1159 = vector.broadcast %1157 : vector<1x256xf32> to vector<4x256xf32>
    %1160 = arith.mulf %1158, %1159 : vector<4x256xf32>
    %1161 = arith.addf %1155, %1160 : vector<4x256xf32>
    %1162 = vector.extract_strided_slice %1034 {offsets = [0, 19], sizes = [4, 1], strides = [1, 1]} : vector<4x36xf32> to vector<4x1xf32>
    %1163 = vector.extract_strided_slice %1033 {offsets = [3, 0], sizes = [1, 256], strides = [1, 1]} : vector<4x256xf32> to vector<1x256xf32>
    %1164 = vector.broadcast %1162 : vector<4x1xf32> to vector<4x256xf32>
    %1165 = vector.broadcast %1163 : vector<1x256xf32> to vector<4x256xf32>
    %1166 = arith.mulf %1164, %1165 : vector<4x256xf32>
    %1167 = arith.addf %1161, %1166 : vector<4x256xf32>
    %c255_i32_71 = arith.constant 255 : i32
    %1168 = tpu.dynamic_rotate %1033 by %c255_i32_71 dim 1 : vector<4x256xf32>, i32 -> vector<4x256xf32>
    %1169 = vector.broadcast %8 : vector<1x256xf32> to vector<4x256xf32>
    %1170 = arith.mulf %1168, %1169 : vector<4x256xf32>
    %1171 = vector.extract_strided_slice %1034 {offsets = [0, 20], sizes = [4, 1], strides = [1, 1]} : vector<4x36xf32> to vector<4x1xf32>
    %1172 = vector.extract_strided_slice %1170 {offsets = [0, 0], sizes = [1, 256], strides = [1, 1]} : vector<4x256xf32> to vector<1x256xf32>
    %1173 = vector.broadcast %1171 : vector<4x1xf32> to vector<4x256xf32>
    %1174 = vector.broadcast %1172 : vector<1x256xf32> to vector<4x256xf32>
    %1175 = arith.mulf %1173, %1174 : vector<4x256xf32>
    %1176 = arith.addf %1167, %1175 : vector<4x256xf32>
    %1177 = vector.extract_strided_slice %1034 {offsets = [0, 21], sizes = [4, 1], strides = [1, 1]} : vector<4x36xf32> to vector<4x1xf32>
    %1178 = vector.extract_strided_slice %1170 {offsets = [1, 0], sizes = [1, 256], strides = [1, 1]} : vector<4x256xf32> to vector<1x256xf32>
    %1179 = vector.broadcast %1177 : vector<4x1xf32> to vector<4x256xf32>
    %1180 = vector.broadcast %1178 : vector<1x256xf32> to vector<4x256xf32>
    %1181 = arith.mulf %1179, %1180 : vector<4x256xf32>
    %1182 = arith.addf %1176, %1181 : vector<4x256xf32>
    %1183 = vector.extract_strided_slice %1034 {offsets = [0, 22], sizes = [4, 1], strides = [1, 1]} : vector<4x36xf32> to vector<4x1xf32>
    %1184 = vector.extract_strided_slice %1170 {offsets = [2, 0], sizes = [1, 256], strides = [1, 1]} : vector<4x256xf32> to vector<1x256xf32>
    %1185 = vector.broadcast %1183 : vector<4x1xf32> to vector<4x256xf32>
    %1186 = vector.broadcast %1184 : vector<1x256xf32> to vector<4x256xf32>
    %1187 = arith.mulf %1185, %1186 : vector<4x256xf32>
    %1188 = arith.addf %1182, %1187 : vector<4x256xf32>
    %1189 = vector.extract_strided_slice %1034 {offsets = [0, 23], sizes = [4, 1], strides = [1, 1]} : vector<4x36xf32> to vector<4x1xf32>
    %1190 = vector.extract_strided_slice %1170 {offsets = [3, 0], sizes = [1, 256], strides = [1, 1]} : vector<4x256xf32> to vector<1x256xf32>
    %1191 = vector.broadcast %1189 : vector<4x1xf32> to vector<4x256xf32>
    %1192 = vector.broadcast %1190 : vector<1x256xf32> to vector<4x256xf32>
    %1193 = arith.mulf %1191, %1192 : vector<4x256xf32>
    %1194 = arith.addf %1188, %1193 : vector<4x256xf32>
    %c241_i32_72 = arith.constant 241 : i32
    %1195 = tpu.dynamic_rotate %1033 by %c241_i32_72 dim 1 : vector<4x256xf32>, i32 -> vector<4x256xf32>
    %1196 = vector.broadcast %9 : vector<1x256xf32> to vector<4x256xf32>
    %1197 = arith.mulf %1195, %1196 : vector<4x256xf32>
    %1198 = vector.extract_strided_slice %1034 {offsets = [0, 24], sizes = [4, 1], strides = [1, 1]} : vector<4x36xf32> to vector<4x1xf32>
    %1199 = vector.extract_strided_slice %1197 {offsets = [0, 0], sizes = [1, 256], strides = [1, 1]} : vector<4x256xf32> to vector<1x256xf32>
    %1200 = vector.broadcast %1198 : vector<4x1xf32> to vector<4x256xf32>
    %1201 = vector.broadcast %1199 : vector<1x256xf32> to vector<4x256xf32>
    %1202 = arith.mulf %1200, %1201 : vector<4x256xf32>
    %1203 = arith.addf %1194, %1202 : vector<4x256xf32>
    %1204 = vector.extract_strided_slice %1034 {offsets = [0, 25], sizes = [4, 1], strides = [1, 1]} : vector<4x36xf32> to vector<4x1xf32>
    %1205 = vector.extract_strided_slice %1197 {offsets = [1, 0], sizes = [1, 256], strides = [1, 1]} : vector<4x256xf32> to vector<1x256xf32>
    %1206 = vector.broadcast %1204 : vector<4x1xf32> to vector<4x256xf32>
    %1207 = vector.broadcast %1205 : vector<1x256xf32> to vector<4x256xf32>
    %1208 = arith.mulf %1206, %1207 : vector<4x256xf32>
    %1209 = arith.addf %1203, %1208 : vector<4x256xf32>
    %1210 = vector.extract_strided_slice %1034 {offsets = [0, 26], sizes = [4, 1], strides = [1, 1]} : vector<4x36xf32> to vector<4x1xf32>
    %1211 = vector.extract_strided_slice %1197 {offsets = [2, 0], sizes = [1, 256], strides = [1, 1]} : vector<4x256xf32> to vector<1x256xf32>
    %1212 = vector.broadcast %1210 : vector<4x1xf32> to vector<4x256xf32>
    %1213 = vector.broadcast %1211 : vector<1x256xf32> to vector<4x256xf32>
    %1214 = arith.mulf %1212, %1213 : vector<4x256xf32>
    %1215 = arith.addf %1209, %1214 : vector<4x256xf32>
    %1216 = vector.extract_strided_slice %1034 {offsets = [0, 27], sizes = [4, 1], strides = [1, 1]} : vector<4x36xf32> to vector<4x1xf32>
    %1217 = vector.extract_strided_slice %1197 {offsets = [3, 0], sizes = [1, 256], strides = [1, 1]} : vector<4x256xf32> to vector<1x256xf32>
    %1218 = vector.broadcast %1216 : vector<4x1xf32> to vector<4x256xf32>
    %1219 = vector.broadcast %1217 : vector<1x256xf32> to vector<4x256xf32>
    %1220 = arith.mulf %1218, %1219 : vector<4x256xf32>
    %1221 = arith.addf %1215, %1220 : vector<4x256xf32>
    %c240_i32_73 = arith.constant 240 : i32
    %1222 = tpu.dynamic_rotate %1033 by %c240_i32_73 dim 1 : vector<4x256xf32>, i32 -> vector<4x256xf32>
    %1223 = vector.broadcast %10 : vector<1x256xf32> to vector<4x256xf32>
    %1224 = arith.mulf %1222, %1223 : vector<4x256xf32>
    %1225 = vector.extract_strided_slice %1034 {offsets = [0, 28], sizes = [4, 1], strides = [1, 1]} : vector<4x36xf32> to vector<4x1xf32>
    %1226 = vector.extract_strided_slice %1224 {offsets = [0, 0], sizes = [1, 256], strides = [1, 1]} : vector<4x256xf32> to vector<1x256xf32>
    %1227 = vector.broadcast %1225 : vector<4x1xf32> to vector<4x256xf32>
    %1228 = vector.broadcast %1226 : vector<1x256xf32> to vector<4x256xf32>
    %1229 = arith.mulf %1227, %1228 : vector<4x256xf32>
    %1230 = arith.addf %1221, %1229 : vector<4x256xf32>
    %1231 = vector.extract_strided_slice %1034 {offsets = [0, 29], sizes = [4, 1], strides = [1, 1]} : vector<4x36xf32> to vector<4x1xf32>
    %1232 = vector.extract_strided_slice %1224 {offsets = [1, 0], sizes = [1, 256], strides = [1, 1]} : vector<4x256xf32> to vector<1x256xf32>
    %1233 = vector.broadcast %1231 : vector<4x1xf32> to vector<4x256xf32>
    %1234 = vector.broadcast %1232 : vector<1x256xf32> to vector<4x256xf32>
    %1235 = arith.mulf %1233, %1234 : vector<4x256xf32>
    %1236 = arith.addf %1230, %1235 : vector<4x256xf32>
    %1237 = vector.extract_strided_slice %1034 {offsets = [0, 30], sizes = [4, 1], strides = [1, 1]} : vector<4x36xf32> to vector<4x1xf32>
    %1238 = vector.extract_strided_slice %1224 {offsets = [2, 0], sizes = [1, 256], strides = [1, 1]} : vector<4x256xf32> to vector<1x256xf32>
    %1239 = vector.broadcast %1237 : vector<4x1xf32> to vector<4x256xf32>
    %1240 = vector.broadcast %1238 : vector<1x256xf32> to vector<4x256xf32>
    %1241 = arith.mulf %1239, %1240 : vector<4x256xf32>
    %1242 = arith.addf %1236, %1241 : vector<4x256xf32>
    %1243 = vector.extract_strided_slice %1034 {offsets = [0, 31], sizes = [4, 1], strides = [1, 1]} : vector<4x36xf32> to vector<4x1xf32>
    %1244 = vector.extract_strided_slice %1224 {offsets = [3, 0], sizes = [1, 256], strides = [1, 1]} : vector<4x256xf32> to vector<1x256xf32>
    %1245 = vector.broadcast %1243 : vector<4x1xf32> to vector<4x256xf32>
    %1246 = vector.broadcast %1244 : vector<1x256xf32> to vector<4x256xf32>
    %1247 = arith.mulf %1245, %1246 : vector<4x256xf32>
    %1248 = arith.addf %1242, %1247 : vector<4x256xf32>
    %c239_i32_74 = arith.constant 239 : i32
    %1249 = tpu.dynamic_rotate %1033 by %c239_i32_74 dim 1 : vector<4x256xf32>, i32 -> vector<4x256xf32>
    %1250 = vector.broadcast %11 : vector<1x256xf32> to vector<4x256xf32>
    %1251 = arith.mulf %1249, %1250 : vector<4x256xf32>
    %1252 = vector.extract_strided_slice %1034 {offsets = [0, 32], sizes = [4, 1], strides = [1, 1]} : vector<4x36xf32> to vector<4x1xf32>
    %1253 = vector.extract_strided_slice %1251 {offsets = [0, 0], sizes = [1, 256], strides = [1, 1]} : vector<4x256xf32> to vector<1x256xf32>
    %1254 = vector.broadcast %1252 : vector<4x1xf32> to vector<4x256xf32>
    %1255 = vector.broadcast %1253 : vector<1x256xf32> to vector<4x256xf32>
    %1256 = arith.mulf %1254, %1255 : vector<4x256xf32>
    %1257 = arith.addf %1248, %1256 : vector<4x256xf32>
    %1258 = vector.extract_strided_slice %1034 {offsets = [0, 33], sizes = [4, 1], strides = [1, 1]} : vector<4x36xf32> to vector<4x1xf32>
    %1259 = vector.extract_strided_slice %1251 {offsets = [1, 0], sizes = [1, 256], strides = [1, 1]} : vector<4x256xf32> to vector<1x256xf32>
    %1260 = vector.broadcast %1258 : vector<4x1xf32> to vector<4x256xf32>
    %1261 = vector.broadcast %1259 : vector<1x256xf32> to vector<4x256xf32>
    %1262 = arith.mulf %1260, %1261 : vector<4x256xf32>
    %1263 = arith.addf %1257, %1262 : vector<4x256xf32>
    %1264 = vector.extract_strided_slice %1034 {offsets = [0, 34], sizes = [4, 1], strides = [1, 1]} : vector<4x36xf32> to vector<4x1xf32>
    %1265 = vector.extract_strided_slice %1251 {offsets = [2, 0], sizes = [1, 256], strides = [1, 1]} : vector<4x256xf32> to vector<1x256xf32>
    %1266 = vector.broadcast %1264 : vector<4x1xf32> to vector<4x256xf32>
    %1267 = vector.broadcast %1265 : vector<1x256xf32> to vector<4x256xf32>
    %1268 = arith.mulf %1266, %1267 : vector<4x256xf32>
    %1269 = arith.addf %1263, %1268 : vector<4x256xf32>
    %1270 = vector.extract_strided_slice %1034 {offsets = [0, 35], sizes = [4, 1], strides = [1, 1]} : vector<4x36xf32> to vector<4x1xf32>
    %1271 = vector.extract_strided_slice %1251 {offsets = [3, 0], sizes = [1, 256], strides = [1, 1]} : vector<4x256xf32> to vector<1x256xf32>
    %1272 = vector.broadcast %1270 : vector<4x1xf32> to vector<4x256xf32>
    %1273 = vector.broadcast %1271 : vector<1x256xf32> to vector<4x256xf32>
    %1274 = arith.mulf %1272, %1273 : vector<4x256xf32>
    %1275 = arith.addf %1269, %1274 : vector<4x256xf32>
    %1276 = arith.addf %1275, %3 : vector<4x256xf32>
    %c0_75 = arith.constant 0 : index
    %c0_76 = arith.constant 0 : index
    %c0_77 = arith.constant 0 : index
    %1277 = vector.load %arg10[%c0_75, %c0_76, %c0_77] : memref<1x4x256xf32, #tpu.memory_space<vmem>>, vector<1x4x256xf32>
    %1278 = vector.shape_cast %1277 : vector<1x4x256xf32> to vector<4x256xf32>
    %1279 = vector.shape_cast %1276 : vector<4x256xf32> to vector<1x4x256xf32>
    tpu.vector_store %arg10[%c0_75, %c0_76, %c0_77], %1279 {strides = array<i32>} : memref<1x4x256xf32, #tpu.memory_space<vmem>>, vector<1x4x256xf32>,
    return
  }
  func.func @transform_0(%arg0: i32) -> (i32, i32, i32) {
    %c0_i32 = arith.constant 0 : i32
    %c0_i32_0 = arith.constant 0 : i32
    %c0_i32_1 = arith.constant 0 : i32
    return %arg0, %c0_i32, %c0_i32_0 : i32, i32, i32
  }
  func.func @transform_1(%arg0: i32) -> (i32, i32, i32) {
    %c0_i32 = arith.constant 0 : i32
    %c0_i32_0 = arith.constant 0 : i32
    %c0_i32_1 = arith.constant 0 : i32
    return %arg0, %c0_i32, %c0_i32_0 : i32, i32, i32
  }
  func.func @transform_2(%arg0: i32) -> (i32, i32) {
    %c0_i32 = arith.constant 0 : i32
    %c0_i32_0 = arith.constant 0 : i32
    %c0_i32_1 = arith.constant 0 : i32
    return %c0_i32, %c0_i32_0 : i32, i32
  }
  func.func @transform_3(%arg0: i32) -> (i32, i32) {
    %c0_i32 = arith.constant 0 : i32
    %c0_i32_0 = arith.constant 0 : i32
    %c0_i32_1 = arith.constant 0 : i32
    return %c0_i32, %c0_i32_0 : i32, i32
  }
  func.func @transform_4(%arg0: i32) -> (i32, i32) {
    %c0_i32 = arith.constant 0 : i32
    %c0_i32_0 = arith.constant 0 : i32
    %c0_i32_1 = arith.constant 0 : i32
    return %c0_i32, %c0_i32_0 : i32, i32
  }
  func.func @transform_5(%arg0: i32) -> (i32, i32) {
    %c0_i32 = arith.constant 0 : i32
    %c0_i32_0 = arith.constant 0 : i32
    %c0_i32_1 = arith.constant 0 : i32
    return %c0_i32, %c0_i32_0 : i32, i32
  }
  func.func @transform_6(%arg0: i32) -> (i32, i32) {
    %c0_i32 = arith.constant 0 : i32
    %c0_i32_0 = arith.constant 0 : i32
    %c0_i32_1 = arith.constant 0 : i32
    return %c0_i32, %c0_i32_0 : i32, i32
  }
  func.func @transform_7(%arg0: i32) -> (i32, i32) {
    %c0_i32 = arith.constant 0 : i32
    %c0_i32_0 = arith.constant 0 : i32
    %c0_i32_1 = arith.constant 0 : i32
    return %c0_i32, %c0_i32_0 : i32, i32
  }
  func.func @transform_8(%arg0: i32) -> (i32, i32) {
    %c0_i32 = arith.constant 0 : i32
    %c0_i32_0 = arith.constant 0 : i32
    %c0_i32_1 = arith.constant 0 : i32
    return %c0_i32, %c0_i32_0 : i32, i32
  }
  func.func @transform_9(%arg0: i32) -> (i32, i32, i32) {
    %c0_i32 = arith.constant 0 : i32
    %c0_i32_0 = arith.constant 0 : i32
    %c0_i32_1 = arith.constant 0 : i32
    return %arg0, %c0_i32, %c0_i32_0 : i32, i32, i32
  }
}

</mosaic_0001>

<llo_original>
// kernel: tpu_custom_call.1
$region0: #{tpu_custom_call.1}
  #allocation0 [shape = 'u32[]', space=smem, size = 0x4, offset = 0x4, fixed_abs, tag = 'smem constant byte address 0x4 - core index']
  #allocation1 [shape = 'u32[72,128]{1,0:T(1,128)}', space=vmem, size = 0x9000, scoped, tag = 'internal scratch']
  %s0 = inlined_call_operand.hbm [shape: f32[2,4,256], index: 0, kind: input, shape index: {}]
  %s1 = inlined_call_operand.hbm [shape: f32[2,4,256], index: 1, kind: input, shape index: {}]
  %s2 = inlined_call_operand.hbm [shape: f32[9,256], index: 2, kind: input, shape index: {}]
  %s3 = inlined_call_operand.vmem [shape: f32[4,72], index: 3, kind: input, shape index: {}]
  %s4 = inlined_call_operand.vmem [shape: f32[4,1], index: 4, kind: input, shape index: {}]
  %s5 = inlined_call_operand.vmem [shape: f32[8,36], index: 5, kind: input, shape index: {}]
  %s6 = inlined_call_operand.vmem [shape: f32[8,1], index: 6, kind: input, shape index: {}]
  %s7 = inlined_call_operand.vmem [shape: f32[4,36], index: 7, kind: input, shape index: {}]
  %s8 = inlined_call_operand.hbm [shape: f32[4,36], index: 8, kind: input, shape index: {}]
  %s9 = inlined_call_operand.hbm [shape: f32[2,4,256], index: 9, kind: output, shape index: {}]
  %s10 = sld [smem:[#allocation0]]
  $region85: #{tpu_custom_call.1} parent=0
    _
  %s12 = ssub.s32 1, %s10
  %s13 = scalar_select 0, %s12, %s10
  $region1: #{tpu_custom_call.1} parent=0
    #allocation2 [shape = 'u8[8192]{0}', space=vmem, size = 0x2000, scoped, tag = 'input window, operand 0']
    #allocation3 [shape = 's32[2]{0}', space=sflag, size = 0x8, scoped, tag = 'scoped memory for tpu_custom_call.1']
    #allocation4 [shape = 's32[2]{0}', space=sflag, size = 0x8, scoped, tag = 'scoped memory for tpu_custom_call.1']
    #allocation5 [shape = 'u8[8192]{0}', space=vmem, size = 0x2000, scoped, tag = 'input window, operand 1']
    #allocation6 [shape = 's32[2]{0}', space=sflag, size = 0x8, scoped, tag = 'scoped memory for tpu_custom_call.1']
    #allocation7 [shape = 'u8[16384]{0}', space=vmem, size = 0x4000, scoped, tag = 'input window, operand 2, single buffered']
    #allocation8 [shape = 'u8[2048]{0}', space=vmem, size = 0x800, scoped, tag = 'input window, operand 8, single buffered']
    #allocation9 [shape = 's32[1]{0}', space=sflag, size = 0x4, scoped, tag = 'scoped memory for tpu_custom_call.1']
    #allocation10 [shape = 'u8[8192]{0}', space=vmem, size = 0x2000, scoped, tag = 'output window, operand 0']
    %14 = vsyncpa [#allocation3], 0
    %s15 = scalar_lea.sflag [#allocation3], 1
    %16 = vsyncpa %s15, 0
    %17 = vsyncpa [#allocation6], 0
    %s18 = scalar_lea.sflag [#allocation6], 1
    %19 = vsyncpa %s18, 0
    %20 = vsyncpa [#allocation9], 0
    %21 = vsyncpa [#allocation4], 0
    %s22 = scalar_lea.sflag [#allocation4], 1
    %23 = vsyncpa %s22, 0
    loop: start=0, step=1, limit=4
    $region2: #{tpu_custom_call.1} parent=1 // loop_pre_header
      _
    $region3: #{tpu_custom_call.1} parent=1 // loop_header
      %s25 = sphi 0, %s29
      %p26 = scmp.ge.s32.totalorder %s25, 4
      %s35 = sphi 0, %s37
      %s38 = sphi 0, %s35
      %s39 = sphi 0, %s38
      %s55 = sphi 0, %s39
      %s61 = sphi 0, %s63
      %s64 = sphi 0, %s61
      %s65 = sphi 0, %s64
      %s81 = sphi 0, %s65
      %s85 = sphi 0, %s85
      %s87 = sphi 0, %s85
      %s88 = sphi 0, %s87
      %s102 = sphi 0, %s88
      %s106 = sphi 0, %s106
      %s108 = sphi 0, %s106
      %s109 = sphi 0, %s108
      %s123 = sphi 0, %s109
      %s127 = sphi 0, %s127
      %s129 = sphi 0, %s127
      %s130 = sphi 0, %s129
      %s144 = sphi 0, %s130
      %s148 = sphi 0, %s148
      %s150 = sphi 0, %s148
      %s151 = sphi 0, %s150
      %s165 = sphi 0, %s151
      %s169 = sphi 0, %s169
      %s171 = sphi 0, %s169
      %s172 = sphi 0, %s171
      %s186 = sphi 0, %s172
      %s190 = sphi 0, %s190
      %s192 = sphi 0, %s190
      %s193 = sphi 0, %s192
      %s207 = sphi 0, %s193
      %s211 = sphi 0, %s211
      %s213 = sphi 0, %s211
      %s214 = sphi 0, %s213
      %s228 = sphi 0, %s214
      %s234 = sphi 0, %s236
      %s237 = sphi 0, %s234
      %s238 = sphi 0, %s237
      %s254 = sphi 0, %s238
    $region4: #{tpu_custom_call.1} parent=1 // loop_header_branch
      %28 = sbr.rel (%p26) target = $region8
    $region5: #{tpu_custom_call.1} parent=1 // loop_body
      %s30 = ssub.s32 %s25, 1
      %s31 = ssub.s32 %s25, 2
      %s32 = sadd.s32 %s25, 1
      %s33 = ssub.s32 %s25, %s32
      %p34 = scmp.eq.s32.totalorder %s33, 0
      %s36 = sadd.s32 %s35, 1
      %s37 = scalar_select %p34, %s35, %s36
      %p40 = pneg %p34
      %p41 = scmp.eq.s32.totalorder %s25, 1
      %p42 = por %p40, %p41
      %p43 = scmp.ne.s32.totalorder %s35, %s38
      %p44 = scmp.eq.s32.totalorder %s25, 0
      %p45 = por %p43, %p44
      %p46 = scmp.ne.s32.totalorder %s35, %s38
      %p47 = scmp.eq.s32.totalorder %s30, 1
      %p48 = por %p46, %p47
      %p49 = scmp.ne.s32.totalorder %s38, %s39
      %p50 = scmp.eq.s32.totalorder %s30, 0
      %p51 = por %p49, %p50
      %p52 = scmp.ne.s32.totalorder %s38, %s39
      %p53 = scmp.eq.s32.totalorder %s31, 1
      %p54 = por %p52, %p53
      %p56 = scmp.ne.s32.totalorder %s39, %s55
      %p57 = scmp.eq.s32.totalorder %s31, 0
      %p58 = por %p56, %p57
      %s59 = ssub.s32 %s25, %s32
      %p60 = scmp.eq.s32.totalorder %s59, 0
      %s62 = sadd.s32 %s61, 1
      %s63 = scalar_select %p60, %s61, %s62
      %p66 = pneg %p60
      %p67 = scmp.eq.s32.totalorder %s25, 1
      %p68 = por %p66, %p67
      %p69 = scmp.ne.s32.totalorder %s61, %s64
      %p70 = scmp.eq.s32.totalorder %s25, 0
      %p71 = por %p69, %p70
      %p72 = scmp.ne.s32.totalorder %s61, %s64
      %p73 = scmp.eq.s32.totalorder %s30, 1
      %p74 = por %p72, %p73
      %p75 = scmp.ne.s32.totalorder %s64, %s65
      %p76 = scmp.eq.s32.totalorder %s30, 0
      %p77 = por %p75, %p76
      %p78 = scmp.ne.s32.totalorder %s64, %s65
      %p79 = scmp.eq.s32.totalorder %s31, 1
      %p80 = por %p78, %p79
      %p82 = scmp.ne.s32.totalorder %s65, %s81
      %p83 = scmp.eq.s32.totalorder %s31, 0
      %p84 = por %p82, %p83
      %s86 = sadd.s32 %s85, 1
      %p89 = scmp.eq.s32.totalorder %s25, 1
      %p90 = scmp.ne.s32.totalorder %s85, %s87
      %p91 = scmp.eq.s32.totalorder %s25, 0
      %p92 = por %p90, %p91
      %p93 = scmp.ne.s32.totalorder %s85, %s87
      %p94 = scmp.eq.s32.totalorder %s30, 1
      %p95 = por %p93, %p94
      %p96 = scmp.ne.s32.totalorder %s87, %s88
      %p97 = scmp.eq.s32.totalorder %s30, 0
      %p98 = por %p96, %p97
      %p99 = scmp.ne.s32.totalorder %s87, %s88
      %p100 = scmp.eq.s32.totalorder %s31, 1
      %p101 = por %p99, %p100
      %p103 = scmp.ne.s32.totalorder %s88, %s102
      %p104 = scmp.eq.s32.totalorder %s31, 0
      %p105 = por %p103, %p104
      %s107 = sadd.s32 %s106, 1
      %p110 = scmp.eq.s32.totalorder %s25, 1
      %p111 = scmp.ne.s32.totalorder %s106, %s108
      %p112 = scmp.eq.s32.totalorder %s25, 0
      %p113 = por %p111, %p112
      %p114 = scmp.ne.s32.totalorder %s106, %s108
      %p115 = scmp.eq.s32.totalorder %s30, 1
      %p116 = por %p114, %p115
      %p117 = scmp.ne.s32.totalorder %s108, %s109
      %p118 = scmp.eq.s32.totalorder %s30, 0
      %p119 = por %p117, %p118
      %p120 = scmp.ne.s32.totalorder %s108, %s109
      %p121 = scmp.eq.s32.totalorder %s31, 1
      %p122 = por %p120, %p121
      %p124 = scmp.ne.s32.totalorder %s109, %s123
      %p125 = scmp.eq.s32.totalorder %s31, 0
      %p126 = por %p124, %p125
      %s128 = sadd.s32 %s127, 1
      %p131 = scmp.eq.s32.totalorder %s25, 1
      %p132 = scmp.ne.s32.totalorder %s127, %s129
      %p133 = scmp.eq.s32.totalorder %s25, 0
      %p134 = por %p132, %p133
      %p135 = scmp.ne.s32.totalorder %s127, %s129
      %p136 = scmp.eq.s32.totalorder %s30, 1
      %p137 = por %p135, %p136
      %p138 = scmp.ne.s32.totalorder %s129, %s130
      %p139 = scmp.eq.s32.totalorder %s30, 0
      %p140 = por %p138, %p139
      %p141 = scmp.ne.s32.totalorder %s129, %s130
      %p142 = scmp.eq.s32.totalorder %s31, 1
      %p143 = por %p141, %p142
      %p145 = scmp.ne.s32.totalorder %s130, %s144
      %p146 = scmp.eq.s32.totalorder %s31, 0
      %p147 = por %p145, %p146
      %s149 = sadd.s32 %s148, 1
      %p152 = scmp.eq.s32.totalorder %s25, 1
      %p153 = scmp.ne.s32.totalorder %s148, %s150
      %p154 = scmp.eq.s32.totalorder %s25, 0
      %p155 = por %p153, %p154
      %p156 = scmp.ne.s32.totalorder %s148, %s150
      %p157 = scmp.eq.s32.totalorder %s30, 1
      %p158 = por %p156, %p157
      %p159 = scmp.ne.s32.totalorder %s150, %s151
      %p160 = scmp.eq.s32.totalorder %s30, 0
      %p161 = por %p159, %p160
      %p162 = scmp.ne.s32.totalorder %s150, %s151
      %p163 = scmp.eq.s32.totalorder %s31, 1
      %p164 = por %p162, %p163
      %p166 = scmp.ne.s32.totalorder %s151, %s165
      %p167 = scmp.eq.s32.totalorder %s31, 0
      %p168 = por %p166, %p167
      %s170 = sadd.s32 %s169, 1
      %p173 = scmp.eq.s32.totalorder %s25, 1
      %p174 = scmp.ne.s32.totalorder %s169, %s171
      %p175 = scmp.eq.s32.totalorder %s25, 0
      %p176 = por %p174, %p175
      %p177 = scmp.ne.s32.totalorder %s169, %s171
      %p178 = scmp.eq.s32.totalorder %s30, 1
      %p179 = por %p177, %p178
      %p180 = scmp.ne.s32.totalorder %s171, %s172
      %p181 = scmp.eq.s32.totalorder %s30, 0
      %p182 = por %p180, %p181
      %p183 = scmp.ne.s32.totalorder %s171, %s172
      %p184 = scmp.eq.s32.totalorder %s31, 1
      %p185 = por %p183, %p184
      %p187 = scmp.ne.s32.totalorder %s172, %s186
      %p188 = scmp.eq.s32.totalorder %s31, 0
      %p189 = por %p187, %p188
      %s191 = sadd.s32 %s190, 1
      %p194 = scmp.eq.s32.totalorder %s25, 1
      %p195 = scmp.ne.s32.totalorder %s190, %s192
      %p196 = scmp.eq.s32.totalorder %s25, 0
      %p197 = por %p195, %p196
      %p198 = scmp.ne.s32.totalorder %s190, %s192
      %p199 = scmp.eq.s32.totalorder %s30, 1
      %p200 = por %p198, %p199
      %p201 = scmp.ne.s32.totalorder %s192, %s193
      %p202 = scmp.eq.s32.totalorder %s30, 0
      %p203 = por %p201, %p202
      %p204 = scmp.ne.s32.totalorder %s192, %s193
      %p205 = scmp.eq.s32.totalorder %s31, 1
      %p206 = por %p204, %p205
      %p208 = scmp.ne.s32.totalorder %s193, %s207
      %p209 = scmp.eq.s32.totalorder %s31, 0
      %p210 = por %p208, %p209
      %s212 = sadd.s32 %s211, 1
      %p215 = scmp.eq.s32.totalorder %s25, 1
      %p216 = scmp.ne.s32.totalorder %s211, %s213
      %p217 = scmp.eq.s32.totalorder %s25, 0
      %p218 = por %p216, %p217
      %p219 = scmp.ne.s32.totalorder %s211, %s213
      %p220 = scmp.eq.s32.totalorder %s30, 1
      %p221 = por %p219, %p220
      %p222 = scmp.ne.s32.totalorder %s213, %s214
      %p223 = scmp.eq.s32.totalorder %s30, 0
      %p224 = por %p222, %p223
      %p225 = scmp.ne.s32.totalorder %s213, %s214
      %p226 = scmp.eq.s32.totalorder %s31, 1
      %p227 = por %p225, %p226
      %p229 = scmp.ne.s32.totalorder %s214, %s228
      %p230 = scmp.eq.s32.totalorder %s31, 0
      %p231 = por %p229, %p230
      %s232 = ssub.s32 %s25, %s32
      %p233 = scmp.eq.s32.totalorder %s232, 0
      %s235 = sadd.s32 %s234, 1
      %s236 = scalar_select %p233, %s234, %s235
      %p239 = pneg %p233
      %p240 = scmp.eq.s32.totalorder %s25, 1
      %p241 = por %p239, %p240
      %p242 = scmp.ne.s32.totalorder %s234, %s237
      %p243 = scmp.eq.s32.totalorder %s25, 0
      %p244 = por %p242, %p243
      %p245 = scmp.ne.s32.totalorder %s234, %s237
      %p246 = scmp.eq.s32.totalorder %s30, 1
      %p247 = por %p245, %p246
      %p248 = scmp.ne.s32.totalorder %s237, %s238
      %p249 = scmp.eq.s32.totalorder %s30, 0
      %p250 = por %p248, %p249
      %p251 = scmp.ne.s32.totalorder %s237, %s238
      %p252 = scmp.eq.s32.totalorder %s31, 1
      %p253 = por %p251, %p252
      %p255 = scmp.ne.s32.totalorder %s238, %s254
      %p256 = scmp.eq.s32.totalorder %s31, 0
      %p257 = por %p255, %p256
      %p258 = scmp.le.s32.totalorder 1, %s25
      %p259 = scmp.lt.s32.totalorder %s25, 3
      %p260 = pnand %p258, %p259
      %p261 = pneg %p260
      // Predicated region
      $region9: #{tpu_custom_call.1} parent=5 // pred_check
        _
      $region10: #{tpu_custom_call.1} parent=5 // pred_check_branch
        %263 = sbr.rel (%p260) target = $region12
      $region11: #{tpu_custom_call.1} parent=5 // pred_region
        %s264 = ssub.s32 %s25, 1
        // Predicated region
        $region13: #{tpu_custom_call.1} parent=11 // pred_check
          %p265 = pneg %p98
        $region14: #{tpu_custom_call.1} parent=11 // pred_check_branch
          %267 = sbr.rel (%p265) target = $region16
        $region15: #{tpu_custom_call.1} parent=11 // pred_region
          %269 = vsyncadd [#allocation6], 0
          %s270 = sshll.u32 %s2, 4
          %s271 = int_to_ptr.hbm [resolvable:$true] %s270
          %s272 = sshll.u32 [#allocation7], 4
          %s273 = int_to_ptr.vmem [resolvable:$true] %s272
          %278 = dma.hbm_to_vmem [thread:$0]  %s271, 512, %s273, [#allocation6], 256, 256, 16
        $region16: #{tpu_custom_call.1} parent=11 // pred_fallthru
          _
        // Predicated region
        $region17: #{tpu_custom_call.1} parent=11 // pred_check
          %p279 = pneg %p119
        $region18: #{tpu_custom_call.1} parent=11 // pred_check_branch
          %281 = sbr.rel (%p279) target = $region20
        $region19: #{tpu_custom_call.1} parent=11 // pred_region
          _
        $region20: #{tpu_custom_call.1} parent=11 // pred_fallthru
          _
        // Predicated region
        $region21: #{tpu_custom_call.1} parent=11 // pred_check
          %p282 = pneg %p140
        $region22: #{tpu_custom_call.1} parent=11 // pred_check_branch
          %284 = sbr.rel (%p282) target = $region24
        $region23: #{tpu_custom_call.1} parent=11 // pred_region
          _
        $region24: #{tpu_custom_call.1} parent=11 // pred_fallthru
          _
        // Predicated region
        $region25: #{tpu_custom_call.1} parent=11 // pred_check
          %p285 = pneg %p161
        $region26: #{tpu_custom_call.1} parent=11 // pred_check_branch
          %287 = sbr.rel (%p285) target = $region28
        $region27: #{tpu_custom_call.1} parent=11 // pred_region
          _
        $region28: #{tpu_custom_call.1} parent=11 // pred_fallthru
          _
        // Predicated region
        $region29: #{tpu_custom_call.1} parent=11 // pred_check
          %p288 = pneg %p182
        $region30: #{tpu_custom_call.1} parent=11 // pred_check_branch
          %290 = sbr.rel (%p288) target = $region32
        $region31: #{tpu_custom_call.1} parent=11 // pred_region
          _
        $region32: #{tpu_custom_call.1} parent=11 // pred_fallthru
          _
        // Predicated region
        $region33: #{tpu_custom_call.1} parent=11 // pred_check
          %p291 = pneg %p203
        $region34: #{tpu_custom_call.1} parent=11 // pred_check_branch
          %293 = sbr.rel (%p291) target = $region36
        $region35: #{tpu_custom_call.1} parent=11 // pred_region
          _
        $region36: #{tpu_custom_call.1} parent=11 // pred_fallthru
          _
        // Predicated region
        $region37: #{tpu_custom_call.1} parent=11 // pred_check
          %p294 = pneg %p224
        $region38: #{tpu_custom_call.1} parent=11 // pred_check_branch
          %296 = sbr.rel (%p294) target = $region40
        $region39: #{tpu_custom_call.1} parent=11 // pred_region
          %298 = vsyncadd [#allocation9], 0
          %s300 = sshll.u32 %s8, 4
          %s301 = int_to_ptr.hbm [resolvable:$true] %s300
          %s302 = sshll.u32 [#allocation8], 4
          %s303 = int_to_ptr.vmem [resolvable:$true] %s302
          %305 = dma.hbm_to_vmem [thread:$0]  %s301, 64, %s303, [#allocation9]
        $region40: #{tpu_custom_call.1} parent=11 // pred_fallthru
          _
      $region12: #{tpu_custom_call.1} parent=5 // pred_fallthru
        _
      %p306 = scmp.lt.s32.totalorder %s25, 2
      // Predicated region
      $region41: #{tpu_custom_call.1} parent=5 // pred_check
        %p307 = pneg %p306
      $region42: #{tpu_custom_call.1} parent=5 // pred_check_branch
        %309 = sbr.rel (%p307) target = $region44
      $region43: #{tpu_custom_call.1} parent=5 // pred_region
        // Predicated region
        $region45: #{tpu_custom_call.1} parent=43 // pred_check
          %p310 = pneg %p45
        $region46: #{tpu_custom_call.1} parent=43 // pred_check_branch
          %312 = sbr.rel (%p310) target = $region48
        $region47: #{tpu_custom_call.1} parent=43 // pred_region
          %s313 = sand.u32 %s35, 1
          %s314 = scalar_lea.sflag [#allocation3], %s313
          %s315 = sand.u32 %s35, 1
          %s316 = smul.addr %s315, 8
          %s317 = scalar_lea.vmem [#allocation2], %s316
          %319 = vsyncadd %s314, 0
          %s320 = smul.addr %s25, 2
          %s321 = smul.addr %s320, 4
          %s322 = scalar_lea.hbm %s0, %s321
          %s324 = sshll.u32 %s322, 4
          %s325 = int_to_ptr.hbm [resolvable:$true] %s324
          %s326 = sshll.u32 %s317, 4
          %s327 = int_to_ptr.vmem [resolvable:$true] %s326
          %329 = dma.hbm_to_vmem [thread:$0]  %s325, 128, %s327, %s314
        $region48: #{tpu_custom_call.1} parent=43 // pred_fallthru
          _
        // Predicated region
        $region49: #{tpu_custom_call.1} parent=43 // pred_check
          %p330 = pneg %p71
        $region50: #{tpu_custom_call.1} parent=43 // pred_check_branch
          %332 = sbr.rel (%p330) target = $region52
        $region51: #{tpu_custom_call.1} parent=43 // pred_region
          %s333 = sand.u32 %s25, 1
          %s334 = scalar_lea.sflag [#allocation6], %s333
          %s335 = sand.u32 %s61, 1
          %s336 = smul.addr %s335, 8
          %s337 = scalar_lea.vmem [#allocation5], %s336
          %339 = vsyncadd %s334, 0
          %s340 = smul.addr %s25, 2
          %s341 = smul.addr %s340, 4
          %s342 = scalar_lea.hbm %s1, %s341
          %s344 = sshll.u32 %s342, 4
          %s345 = int_to_ptr.hbm [resolvable:$true] %s344
          %s346 = sshll.u32 %s337, 4
          %s347 = int_to_ptr.vmem [resolvable:$true] %s346
          %349 = dma.hbm_to_vmem [thread:$0]  %s345, 128, %s347, %s334
        $region52: #{tpu_custom_call.1} parent=43 // pred_fallthru
          _
      $region44: #{tpu_custom_call.1} parent=5 // pred_fallthru
        _
      %p350 = scmp.le.s32.totalorder 1, %s25
      %p351 = scmp.lt.s32.totalorder %s25, 3
      %p352 = pnand %p350, %p351
      %p353 = pneg %p352
      // Predicated region
      $region53: #{tpu_custom_call.1} parent=5 // pred_check
        _
      $region54: #{tpu_custom_call.1} parent=5 // pred_check_branch
        %355 = sbr.rel (%p352) target = $region56
      $region55: #{tpu_custom_call.1} parent=5 // pred_region
        %s356 = ssub.s32 %s25, 1
        %s357 = sand.u32 %s38, 1
        %s358 = scalar_lea.sflag [#allocation3], %s357
        %s359 = sand.u32 %s38, 1
        %s360 = smul.addr %s359, 8
        %s361 = scalar_lea.vmem [#allocation2], %s360
        // Predicated region
        $region57: #{tpu_custom_call.1} parent=55 // pred_check
          %p362 = pneg %p51
        $region58: #{tpu_custom_call.1} parent=55 // pred_check_branch
          %364 = sbr.rel (%p362) target = $region60
        $region59: #{tpu_custom_call.1} parent=55 // pred_region
          %366 = dma.done %s358, 128
        $region60: #{tpu_custom_call.1} parent=55 // pred_fallthru
          _
        %s367 = sand.u32 %s30, 1
        %s368 = scalar_lea.sflag [#allocation6], %s367
        %s369 = sand.u32 %s64, 1
        %s370 = smul.addr %s369, 8
        %s371 = scalar_lea.vmem [#allocation5], %s370
        // Predicated region
        $region61: #{tpu_custom_call.1} parent=55 // pred_check
          %p372 = pneg %p77
        $region62: #{tpu_custom_call.1} parent=55 // pred_check_branch
          %374 = sbr.rel (%p372) target = $region64
        $region63: #{tpu_custom_call.1} parent=55 // pred_region
          %376 = dma.done %s368, 128
        $region64: #{tpu_custom_call.1} parent=55 // pred_fallthru
          _
        // Predicated region
        $region65: #{tpu_custom_call.1} parent=55 // pred_check
          %p377 = pneg %p98
        $region66: #{tpu_custom_call.1} parent=55 // pred_check_branch
          %379 = sbr.rel (%p377) target = $region68
        $region67: #{tpu_custom_call.1} parent=55 // pred_region
          %381 = dma.done [#allocation6], 512
        $region68: #{tpu_custom_call.1} parent=55 // pred_fallthru
          _
        // Predicated region
        $region69: #{tpu_custom_call.1} parent=55 // pred_check
          %p382 = pneg %p224
        $region70: #{tpu_custom_call.1} parent=55 // pred_check_branch
          %384 = sbr.rel (%p382) target = $region72
        $region71: #{tpu_custom_call.1} parent=55 // pred_region
          %386 = dma.done [#allocation9], 64
        $region72: #{tpu_custom_call.1} parent=55 // pred_fallthru
          _
        %s387 = sand.u32 %s38, 1
        %s388 = scalar_lea.sflag [#allocation3], %s387
        %s389 = sand.u32 %s38, 1
        %s390 = smul.addr %s389, 8
        %s391 = scalar_lea.vmem [#allocation2], %s390
        %p392 = pneg %p51
        %p393 = pneg %p48
        %s394 = sand.u32 %s30, 1
        %s395 = scalar_lea.sflag [#allocation6], %s394
        %s396 = sand.u32 %s64, 1
        %s397 = smul.addr %s396, 8
        %s398 = scalar_lea.vmem [#allocation5], %s397
        %p399 = pneg %p77
        %p400 = pneg %p74
        %p401 = pneg %p98
        %p402 = pneg %p95
        %p403 = pneg %p119
        %p404 = pneg %p116
        %p405 = pneg %p140
        %p406 = pneg %p137
        %p407 = pneg %p161
        %p408 = pneg %p158
        %p409 = pneg %p182
        %p410 = pneg %p179
        %p411 = pneg %p203
        %p412 = pneg %p200
        %p413 = pneg %p224
        %p414 = pneg %p221
        %p415 = pneg %p250
        %p416 = pneg %p247
        %s417 = sand.u32 %s237, 1
        %s418 = scalar_lea.sflag [#allocation4], %s417
        %s419 = sand.u32 %s237, 1
        %s420 = smul.addr %s419, 8
        %s421 = scalar_lea.vmem [#allocation10], %s420
        %v422 = vld [vmem:[%s361] sm:$0xff]
        %v423 = vld [vmem:[%s371] sm:$0xff]
        %v424 = vld [vmem:[#allocation7] ss:$8 sm:$0x3]
        %s425 = scalar_lea.vmem [#allocation7], 1
        %v426 = vld [vmem:[%s425] ss:$8 sm:$0x3]
        %s427 = scalar_lea.vmem [#allocation7], 2
        %v428 = vld [vmem:[%s427] ss:$8 sm:$0x3]
        %s429 = scalar_lea.vmem [#allocation7], 3
        %v430 = vld [vmem:[%s429] ss:$8 sm:$0x3]
        %s431 = scalar_lea.vmem [#allocation7], 5
        %v432 = vld [vmem:[%s431] ss:$8 sm:$0x3]
        %s433 = scalar_lea.vmem [#allocation7], 6
        %v434 = vld [vmem:[%s433] ss:$8 sm:$0x3]
        %s435 = scalar_lea.vmem [#allocation7], 7
        %v436 = vld [vmem:[%s435] ss:$8 sm:$0x3]
        %s437 = scalar_lea.vmem [#allocation7], 16
        %v438 = vld [vmem:[%s437] ss:$8 sm:$0x3]
        %440 = vst [vmem:[#allocation1] ss:$2 sm:$0xff] %v422
        %v441 = vld.sshfl [vmem:[#allocation1] sm:$0xff pattern:$0x75316420]
        %v442 = vld.sshfl [vmem:[#allocation1 + $0x8] sm:$0xff pattern:$0x75316420]
        %vm445 = vcmask 1043456
        %v446 = vsel %vm445, %v441, 0.0
        %v447 = vsel %vm445, %v442, 0.0
        %v448 = vadd.f32 %v446, %v447
        %449 = vadd.xlane.f32.xlu0 %v448
        %v450 = vpop.xlane.xlu0 %449
        %v451 = vmul.f32 %v450, 0.00390625
        %v454 = vunpack.c.l.s4 839922192
        %v455 = vunpack.c.0.s8 %v454
        %v456 = vperm.slane %v451, %v455
        %v458 = vsub.f32 %v422, %v456
        %v459 = vmul.f32 %v458, %v458
        %461 = vst [vmem:[#allocation1] ss:$2 sm:$0xff] %v459
        %v462 = vld.sshfl [vmem:[#allocation1] sm:$0xff pattern:$0x75316420]
        %v463 = vld.sshfl [vmem:[#allocation1 + $0x8] sm:$0xff pattern:$0x75316420]
        %v466 = vsel %vm445, %v462, 0.0
        %v467 = vsel %vm445, %v463, 0.0
        %v468 = vadd.f32 %v466, %v467
        %469 = vadd.xlane.f32.xlu0 %v468
        %v470 = vpop.xlane.xlu0 %469
        %v471 = vrcp.pop 255.0
        %v472 = vmul.f32 255.0, %v471
        %v473 = vsub.f32 1.0, %v472
        %v474 = vmul.f32 %v471, %v473
        %v475 = vadd.f32 %v471, %v474
        %vm476 = vweird.f32 %v471
        %v477 = vsel %vm476, %v471, %v475
        %v478 = vmul.f32 %v470, %v477
        %v479 = vrsqrt.pop %v478
        %v480 = vmul.f32 %v479, %v478
        %v481 = vmul.f32 %v480, %v479
        %v482 = vmul.f32 0.5, %v481
        %v483 = vsub.f32 1.5, %v482
        %v484 = vmul.f32 %v479, %v483
        %v485 = vmul.f32 %v478, %v484
        %vm486 = vcmp.eq.f32.partialorder %v478, inf
        %v487 = vsel %vm486, %v478, %v485
        %vm488 = vcmp.eq.f32.partialorder %v478, 0.0
        %v489 = vand.u32 %v478, 2147483648
        %v490 = vsel %vm488, %v489, %v487
        %492 = vst [vmem:[#allocation1] ss:$2 sm:$0xff] %v423
        %v493 = vld.sshfl [vmem:[#allocation1] sm:$0xff pattern:$0x75316420]
        %v494 = vld.sshfl [vmem:[#allocation1 + $0x8] sm:$0xff pattern:$0x75316420]
        %v497 = vsel %vm445, %v493, 0.0
        %v498 = vsel %vm445, %v494, 0.0
        %v499 = vadd.f32 %v497, %v498
        %500 = vadd.xlane.f32.xlu0 %v499
        %v501 = vpop.xlane.xlu0 %500
        %v502 = vmul.f32 %v501, 0.00390625
        %v505 = vunpack.c.l.s4 839922192
        %v506 = vunpack.c.0.s8 %v505
        %v507 = vperm.slane %v502, %v506
        %v509 = vsub.f32 %v423, %v507
        %v510 = vmul.f32 %v509, %v509
        %512 = vst [vmem:[#allocation1] ss:$2 sm:$0xff] %v510
        %v513 = vld.sshfl [vmem:[#allocation1] sm:$0xff pattern:$0x75316420]
        %v514 = vld.sshfl [vmem:[#allocation1 + $0x8] sm:$0xff pattern:$0x75316420]
        %v517 = vsel %vm445, %v513, 0.0
        %v518 = vsel %vm445, %v514, 0.0
        %v519 = vadd.f32 %v517, %v518
        %520 = vadd.xlane.f32.xlu0 %v519
        %v521 = vpop.xlane.xlu0 %520
        %v522 = vmul.f32 %v521, 0.00390625
        %v523 = vadd.f32 %v522, 1e-05
        %v524 = vrsqrt.pop %v523
        %v525 = vmul.f32 %v524, %v523
        %v526 = vmul.f32 %v525, %v524
        %v527 = vmul.f32 0.5, %v526
        %v528 = vsub.f32 1.5, %v527
        %v529 = vmul.f32 %v524, %v528
        %vm530 = vweird.f32 %v523
        %vm531 = vweird.f32 %v524
        %vm532 = vmor %vm530, %vm531
        %v533 = vsel %vm532, %v524, %v529
        %v536 = vunpack.c.l.s4 839922192
        %v537 = vunpack.c.0.s8 %v536
        %v538 = vperm.slane %v533, %v537
        %v540 = vmul.f32 %v509, %v538
        %v541 = vld [vmem:[%s4] sm:$0xf]
        %v542 = vld [vmem:[%s3] sm:$0xf]
        %544 = vset.pattern.permute.xlu0 0
        %545 = vperm.xlu0 %544, %v541
        %v546 = vpop.permute.xlu0 %545
        %v548 = vadd.f32 %v546, 0.0
        %549 = vst [vmem:[#allocation1] ss:$2 sm:$0xff] %v422
        %v550 = vld.sshfl [vmem:[#allocation1] sm:$0xff pattern:$0x75316420]
        %v551 = vld.sshfl [vmem:[#allocation1 + $0x8] sm:$0xff pattern:$0x75316420]
        %554 = vrot.lane.b32.xlu0 %v550, 17
        %v555 = vpop.permute.xlu0 %554
        %556 = vrot.lane.b32.xlu0 %v551, 17
        %v557 = vpop.permute.xlu0 %556
        %v558 = vlaneseq
        %v559 = vand.u32 %v558, 127
        %vm560 = vcmp.lt.s32.totalorder %v559, 17
        %v561 = vsel %vm560, %v555, %v557
        %v562 = vsel %vm560, %v557, %v555
        %v564 = vperm.slane %v424, 0
        %v565 = vperm.slane %v424, 1
        %v568 = vmul.f32 %v562, %v564
        %v569 = vmul.f32 %v561, %v565
        %571 = vset.pattern.permute.xlu0 0
        %572 = vperm.xlu0 %571, %v542
        %v573 = vpop.permute.xlu0 %572
        %v575 = vperm.slane %v568, 0
        %v576 = vperm.slane %v569, 0
        %v577 = vmul.f32 %v573, %v575
        %v578 = vmul.f32 %v573, %v576
        %v579 = vadd.f32 %v548, %v577
        %v580 = vadd.f32 %v548, %v578
        %581 = vset.pattern.permute.xlu0 1
        %582 = vperm.xlu0 %581, %v542
        %v583 = vpop.permute.xlu0 %582
        %v585 = vperm.slane %v568, 1
        %v586 = vperm.slane %v569, 1
        %v587 = vmul.f32 %v583, %v585
        %v588 = vmul.f32 %v583, %v586
        %v589 = vadd.f32 %v579, %v587
        %v590 = vadd.f32 %v580, %v588
        %591 = vset.pattern.permute.xlu0 2
        %592 = vperm.xlu0 %591, %v542
        %v593 = vpop.permute.xlu0 %592
        %v595 = vperm.slane %v568, 2
        %v596 = vperm.slane %v569, 2
        %v597 = vmul.f32 %v593, %v595
        %v598 = vmul.f32 %v593, %v596
        %v599 = vadd.f32 %v589, %v597
        %v600 = vadd.f32 %v590, %v598
        %601 = vset.pattern.permute.xlu0 3
        %602 = vperm.xlu0 %601, %v542
        %v603 = vpop.permute.xlu0 %602
        %v605 = vperm.slane %v568, 3
        %v606 = vperm.slane %v569, 3
        %v607 = vmul.f32 %v603, %v605
        %v608 = vmul.f32 %v603, %v606
        %v609 = vadd.f32 %v599, %v607
        %v610 = vadd.f32 %v600, %v608
        %611 = vst [vmem:[#allocation1] ss:$2 sm:$0xff] %v423
        %v612 = vld.sshfl [vmem:[#allocation1] sm:$0xff pattern:$0x75316420]
        %v613 = vld.sshfl [vmem:[#allocation1 + $0x8] sm:$0xff pattern:$0x75316420]
        %616 = vrot.lane.b32.xlu0 %v612, 17
        %v617 = vpop.permute.xlu0 %616
        %618 = vrot.lane.b32.xlu0 %v613, 17
        %v619 = vpop.permute.xlu0 %618
        %v620 = vsel %vm560, %v617, %v619
        %v621 = vsel %vm560, %v619, %v617
        %v622 = vmul.f32 %v621, %v564
        %v623 = vmul.f32 %v620, %v565
        %624 = vset.pattern.permute.xlu0 4
        %625 = vperm.xlu0 %624, %v542
        %v626 = vpop.permute.xlu0 %625
        %v628 = vperm.slane %v622, 0
        %v629 = vperm.slane %v623, 0
        %v630 = vmul.f32 %v626, %v628
        %v631 = vmul.f32 %v626, %v629
        %v632 = vadd.f32 %v609, %v630
        %v633 = vadd.f32 %v610, %v631
        %634 = vset.pattern.permute.xlu0 5
        %635 = vperm.xlu0 %634, %v542
        %v636 = vpop.permute.xlu0 %635
        %v638 = vperm.slane %v622, 1
        %v639 = vperm.slane %v623, 1
        %v640 = vmul.f32 %v636, %v638
        %v641 = vmul.f32 %v636, %v639
        %v642 = vadd.f32 %v632, %v640
        %v643 = vadd.f32 %v633, %v641
        %644 = vset.pattern.permute.xlu0 6
        %645 = vperm.xlu0 %644, %v542
        %v646 = vpop.permute.xlu0 %645
        %v648 = vperm.slane %v622, 2
        %v649 = vperm.slane %v623, 2
        %v650 = vmul.f32 %v646, %v648
        %v651 = vmul.f32 %v646, %v649
        %v652 = vadd.f32 %v642, %v650
        %v653 = vadd.f32 %v643, %v651
        %654 = vset.pattern.permute.xlu0 7
        %655 = vperm.xlu0 %654, %v542
        %v656 = vpop.permute.xlu0 %655
        %v658 = vperm.slane %v622, 3
        %v659 = vperm.slane %v623, 3
        %v660 = vmul.f32 %v656, %v658
        %v661 = vmul.f32 %v656, %v659
        %v662 = vadd.f32 %v652, %v660
        %v663 = vadd.f32 %v653, %v661
        %664 = vst [vmem:[#allocation1] ss:$2 sm:$0xff] %v422
        %v665 = vld.sshfl [vmem:[#allocation1] sm:$0xff pattern:$0x75316420]
        %v666 = vld.sshfl [vmem:[#allocation1 + $0x8] sm:$0xff pattern:$0x75316420]
        %669 = vrot.lane.b32.xlu0 %v665, 16
        %v670 = vpop.permute.xlu0 %669
        %671 = vrot.lane.b32.xlu0 %v666, 16
        %v672 = vpop.permute.xlu0 %671
        %vm673 = vcmp.lt.s32.totalorder %v559, 16
        %v674 = vsel %vm673, %v670, %v672
        %v675 = vsel %vm673, %v672, %v670
        %v677 = vperm.slane %v426, 0
        %v678 = vperm.slane %v426, 1
        %v681 = vmul.f32 %v675, %v677
        %v682 = vmul.f32 %v674, %v678
        %683 = vset.pattern.permute.xlu0 8
        %684 = vperm.xlu0 %683, %v542
        %v685 = vpop.permute.xlu0 %684
        %v687 = vperm.slane %v681, 0
        %v688 = vperm.slane %v682, 0
        %v689 = vmul.f32 %v685, %v687
        %v690 = vmul.f32 %v685, %v688
        %v691 = vadd.f32 %v662, %v689
        %v692 = vadd.f32 %v663, %v690
        %693 = vset.pattern.permute.xlu0 9
        %694 = vperm.xlu0 %693, %v542
        %v695 = vpop.permute.xlu0 %694
        %v697 = vperm.slane %v681, 1
        %v698 = vperm.slane %v682, 1
        %v699 = vmul.f32 %v695, %v697
        %v700 = vmul.f32 %v695, %v698
        %v701 = vadd.f32 %v691, %v699
        %v702 = vadd.f32 %v692, %v700
        %703 = vset.pattern.permute.xlu0 10
        %704 = vperm.xlu0 %703, %v542
        %v705 = vpop.permute.xlu0 %704
        %v707 = vperm.slane %v681, 2
        %v708 = vperm.slane %v682, 2
        %v709 = vmul.f32 %v705, %v707
        %v710 = vmul.f32 %v705, %v708
        %v711 = vadd.f32 %v701, %v709
        %v712 = vadd.f32 %v702, %v710
        %713 = vset.pattern.permute.xlu0 11
        %714 = vperm.xlu0 %713, %v542
        %v715 = vpop.permute.xlu0 %714
        %v717 = vperm.slane %v681, 3
        %v718 = vperm.slane %v682, 3
        %v719 = vmul.f32 %v715, %v717
        %v720 = vmul.f32 %v715, %v718
        %v721 = vadd.f32 %v711, %v719
        %v722 = vadd.f32 %v712, %v720
        %723 = vst [vmem:[#allocation1] ss:$2 sm:$0xff] %v423
        %v724 = vld.sshfl [vmem:[#allocation1] sm:$0xff pattern:$0x75316420]
        %v725 = vld.sshfl [vmem:[#allocation1 + $0x8] sm:$0xff pattern:$0x75316420]
        %728 = vrot.lane.b32.xlu0 %v724, 16
        %v729 = vpop.permute.xlu0 %728
        %730 = vrot.lane.b32.xlu0 %v725, 16
        %v731 = vpop.permute.xlu0 %730
        %v732 = vsel %vm673, %v729, %v731
        %v733 = vsel %vm673, %v731, %v729
        %v734 = vmul.f32 %v733, %v677
        %v735 = vmul.f32 %v732, %v678
        %736 = vset.pattern.permute.xlu0 12
        %737 = vperm.xlu0 %736, %v542
        %v738 = vpop.permute.xlu0 %737
        %v740 = vperm.slane %v734, 0
        %v741 = vperm.slane %v735, 0
        %v742 = vmul.f32 %v738, %v740
        %v743 = vmul.f32 %v738, %v741
        %v744 = vadd.f32 %v721, %v742
        %v745 = vadd.f32 %v722, %v743
        %746 = vset.pattern.permute.xlu0 13
        %747 = vperm.xlu0 %746, %v542
        %v748 = vpop.permute.xlu0 %747
        %v750 = vperm.slane %v734, 1
        %v751 = vperm.slane %v735, 1
        %v752 = vmul.f32 %v748, %v750
        %v753 = vmul.f32 %v748, %v751
        %v754 = vadd.f32 %v744, %v752
        %v755 = vadd.f32 %v745, %v753
        %756 = vset.pattern.permute.xlu0 14
        %757 = vperm.xlu0 %756, %v542
        %v758 = vpop.permute.xlu0 %757
        %v760 = vperm.slane %v734, 2
        %v761 = vperm.slane %v735, 2
        %v762 = vmul.f32 %v758, %v760
        %v763 = vmul.f32 %v758, %v761
        %v764 = vadd.f32 %v754, %v762
        %v765 = vadd.f32 %v755, %v763
        %766 = vset.pattern.permute.xlu0 15
        %767 = vperm.xlu0 %766, %v542
        %v768 = vpop.permute.xlu0 %767
        %v770 = vperm.slane %v734, 3
        %v771 = vperm.slane %v735, 3
        %v772 = vmul.f32 %v768, %v770
        %v773 = vmul.f32 %v768, %v771
        %v774 = vadd.f32 %v764, %v772
        %v775 = vadd.f32 %v765, %v773
        %776 = vst [vmem:[#allocation1] ss:$2 sm:$0xff] %v422
        %v777 = vld.sshfl [vmem:[#allocation1] sm:$0xff pattern:$0x75316420]
        %v778 = vld.sshfl [vmem:[#allocation1 + $0x8] sm:$0xff pattern:$0x75316420]
        %781 = vrot.lane.b32.xlu0 %v777, 15
        %v782 = vpop.permute.xlu0 %781
        %783 = vrot.lane.b32.xlu0 %v778, 15
        %v784 = vpop.permute.xlu0 %783
        %vm785 = vcmp.lt.s32.totalorder %v559, 15
        %v786 = vsel %vm785, %v782, %v784
        %v787 = vsel %vm785, %v784, %v782
        %v789 = vperm.slane %v428, 0
        %v790 = vperm.slane %v428, 1
        %v793 = vmul.f32 %v787, %v789
        %v794 = vmul.f32 %v786, %v790
        %795 = vset.pattern.permute.xlu0 16
        %796 = vperm.xlu0 %795, %v542
        %v797 = vpop.permute.xlu0 %796
        %v799 = vperm.slane %v793, 0
        %v800 = vperm.slane %v794, 0
        %v801 = vmul.f32 %v797, %v799
        %v802 = vmul.f32 %v797, %v800
        %v803 = vadd.f32 %v774, %v801
        %v804 = vadd.f32 %v775, %v802
        %805 = vset.pattern.permute.xlu0 17
        %806 = vperm.xlu0 %805, %v542
        %v807 = vpop.permute.xlu0 %806
        %v809 = vperm.slane %v793, 1
        %v810 = vperm.slane %v794, 1
        %v811 = vmul.f32 %v807, %v809
        %v812 = vmul.f32 %v807, %v810
        %v813 = vadd.f32 %v803, %v811
        %v814 = vadd.f32 %v804, %v812
        %815 = vset.pattern.permute.xlu0 18
        %816 = vperm.xlu0 %815, %v542
        %v817 = vpop.permute.xlu0 %816
        %v819 = vperm.slane %v793, 2
        %v820 = vperm.slane %v794, 2
        %v821 = vmul.f32 %v817, %v819
        %v822 = vmul.f32 %v817, %v820
        %v823 = vadd.f32 %v813, %v821
        %v824 = vadd.f32 %v814, %v822
        %825 = vset.pattern.permute.xlu0 19
        %826 = vperm.xlu0 %825, %v542
        %v827 = vpop.permute.xlu0 %826
        %v829 = vperm.slane %v793, 3
        %v830 = vperm.slane %v794, 3
        %v831 = vmul.f32 %v827, %v829
        %v832 = vmul.f32 %v827, %v830
        %v833 = vadd.f32 %v823, %v831
        %v834 = vadd.f32 %v824, %v832
        %835 = vst [vmem:[#allocation1] ss:$2 sm:$0xff] %v423
        %v836 = vld.sshfl [vmem:[#allocation1] sm:$0xff pattern:$0x75316420]
        %v837 = vld.sshfl [vmem:[#allocation1 + $0x8] sm:$0xff pattern:$0x75316420]
        %840 = vrot.lane.b32.xlu0 %v836, 15
        %v841 = vpop.permute.xlu0 %840
        %842 = vrot.lane.b32.xlu0 %v837, 15
        %v843 = vpop.permute.xlu0 %842
        %v844 = vsel %vm785, %v841, %v843
        %v845 = vsel %vm785, %v843, %v841
        %v846 = vmul.f32 %v845, %v789
        %v847 = vmul.f32 %v844, %v790
        %848 = vset.pattern.permute.xlu0 20
        %849 = vperm.xlu0 %848, %v542
        %v850 = vpop.permute.xlu0 %849
        %v852 = vperm.slane %v846, 0
        %v853 = vperm.slane %v847, 0
        %v854 = vmul.f32 %v850, %v852
        %v855 = vmul.f32 %v850, %v853
        %v856 = vadd.f32 %v833, %v854
        %v857 = vadd.f32 %v834, %v855
        %858 = vset.pattern.permute.xlu0 21
        %859 = vperm.xlu0 %858, %v542
        %v860 = vpop.permute.xlu0 %859
        %v862 = vperm.slane %v846, 1
        %v863 = vperm.slane %v847, 1
        %v864 = vmul.f32 %v860, %v862
        %v865 = vmul.f32 %v860, %v863
        %v866 = vadd.f32 %v856, %v864
        %v867 = vadd.f32 %v857, %v865
        %868 = vset.pattern.permute.xlu0 22
        %869 = vperm.xlu0 %868, %v542
        %v870 = vpop.permute.xlu0 %869
        %v872 = vperm.slane %v846, 2
        %v873 = vperm.slane %v847, 2
        %v874 = vmul.f32 %v870, %v872
        %v875 = vmul.f32 %v870, %v873
        %v876 = vadd.f32 %v866, %v874
        %v877 = vadd.f32 %v867, %v875
        %878 = vset.pattern.permute.xlu0 23
        %879 = vperm.xlu0 %878, %v542
        %v880 = vpop.permute.xlu0 %879
        %v882 = vperm.slane %v846, 3
        %v883 = vperm.slane %v847, 3
        %v884 = vmul.f32 %v880, %v882
        %v885 = vmul.f32 %v880, %v883
        %v886 = vadd.f32 %v876, %v884
        %v887 = vadd.f32 %v877, %v885
        %888 = vst [vmem:[#allocation1] ss:$2 sm:$0xff] %v422
        %v889 = vld.sshfl [vmem:[#allocation1] sm:$0xff pattern:$0x75316420]
        %v890 = vld.sshfl [vmem:[#allocation1 + $0x8] sm:$0xff pattern:$0x75316420]
        %893 = vrot.lane.b32.xlu0 %v889, 1
        %v894 = vpop.permute.xlu0 %893
        %895 = vrot.lane.b32.xlu0 %v890, 1
        %v896 = vpop.permute.xlu0 %895
        %vm897 = vcmp.lt.s32.totalorder %v559, 1
        %v898 = vsel %vm897, %v894, %v896
        %v899 = vsel %vm897, %v896, %v894
        %v901 = vperm.slane %v430, 0
        %v902 = vperm.slane %v430, 1
        %v905 = vmul.f32 %v899, %v901
        %v906 = vmul.f32 %v898, %v902
        %907 = vset.pattern.permute.xlu0 24
        %908 = vperm.xlu0 %907, %v542
        %v909 = vpop.permute.xlu0 %908
        %v911 = vperm.slane %v905, 0
        %v912 = vperm.slane %v906, 0
        %v913 = vmul.f32 %v909, %v911
        %v914 = vmul.f32 %v909, %v912
        %v915 = vadd.f32 %v886, %v913
        %v916 = vadd.f32 %v887, %v914
        %917 = vset.pattern.permute.xlu0 25
        %918 = vperm.xlu0 %917, %v542
        %v919 = vpop.permute.xlu0 %918
        %v921 = vperm.slane %v905, 1
        %v922 = vperm.slane %v906, 1
        %v923 = vmul.f32 %v919, %v921
        %v924 = vmul.f32 %v919, %v922
        %v925 = vadd.f32 %v915, %v923
        %v926 = vadd.f32 %v916, %v924
        %927 = vset.pattern.permute.xlu0 26
        %928 = vperm.xlu0 %927, %v542
        %v929 = vpop.permute.xlu0 %928
        %v931 = vperm.slane %v905, 2
        %v932 = vperm.slane %v906, 2
        %v933 = vmul.f32 %v929, %v931
        %v934 = vmul.f32 %v929, %v932
        %v935 = vadd.f32 %v925, %v933
        %v936 = vadd.f32 %v926, %v934
        %937 = vset.pattern.permute.xlu0 27
        %938 = vperm.xlu0 %937, %v542
        %v939 = vpop.permute.xlu0 %938
        %v941 = vperm.slane %v905, 3
        %v942 = vperm.slane %v906, 3
        %v943 = vmul.f32 %v939, %v941
        %v944 = vmul.f32 %v939, %v942
        %v945 = vadd.f32 %v935, %v943
        %v946 = vadd.f32 %v936, %v944
        %947 = vst [vmem:[#allocation1] ss:$2 sm:$0xff] %v423
        %v948 = vld.sshfl [vmem:[#allocation1] sm:$0xff pattern:$0x75316420]
        %v949 = vld.sshfl [vmem:[#allocation1 + $0x8] sm:$0xff pattern:$0x75316420]
        %952 = vrot.lane.b32.xlu0 %v948, 1
        %v953 = vpop.permute.xlu0 %952
        %954 = vrot.lane.b32.xlu0 %v949, 1
        %v955 = vpop.permute.xlu0 %954
        %v956 = vsel %vm897, %v953, %v955
        %v957 = vsel %vm897, %v955, %v953
        %v958 = vmul.f32 %v957, %v901
        %v959 = vmul.f32 %v956, %v902
        %960 = vset.pattern.permute.xlu0 28
        %961 = vperm.xlu0 %960, %v542
        %v962 = vpop.permute.xlu0 %961
        %v964 = vperm.slane %v958, 0
        %v965 = vperm.slane %v959, 0
        %v966 = vmul.f32 %v962, %v964
        %v967 = vmul.f32 %v962, %v965
        %v968 = vadd.f32 %v945, %v966
        %v969 = vadd.f32 %v946, %v967
        %970 = vset.pattern.permute.xlu0 29
        %971 = vperm.xlu0 %970, %v542
        %v972 = vpop.permute.xlu0 %971
        %v974 = vperm.slane %v958, 1
        %v975 = vperm.slane %v959, 1
        %v976 = vmul.f32 %v972, %v974
        %v977 = vmul.f32 %v972, %v975
        %v978 = vadd.f32 %v968, %v976
        %v979 = vadd.f32 %v969, %v977
        %980 = vset.pattern.permute.xlu0 30
        %981 = vperm.xlu0 %980, %v542
        %v982 = vpop.permute.xlu0 %981
        %v984 = vperm.slane %v958, 2
        %v985 = vperm.slane %v959, 2
        %v986 = vmul.f32 %v982, %v984
        %v987 = vmul.f32 %v982, %v985
        %v988 = vadd.f32 %v978, %v986
        %v989 = vadd.f32 %v979, %v987
        %990 = vset.pattern.permute.xlu0 31
        %991 = vperm.xlu0 %990, %v542
        %v992 = vpop.permute.xlu0 %991
        %v994 = vperm.slane %v958, 3
        %v995 = vperm.slane %v959, 3
        %v996 = vmul.f32 %v992, %v994
        %v997 = vmul.f32 %v992, %v995
        %v998 = vadd.f32 %v988, %v996
        %v999 = vadd.f32 %v989, %v997
        %1000 = vset.pattern.permute.xlu0 32
        %1001 = vperm.xlu0 %1000, %v542
        %v1002 = vpop.permute.xlu0 %1001
        %v1004 = vperm.slane %v422, 0
        %v1005 = vperm.slane %v422, 4
        %v1008 = vperm.slane %v1004, 0
        %v1009 = vperm.slane %v1005, 0
        %v1010 = vmul.f32 %v1002, %v1008
        %v1011 = vmul.f32 %v1002, %v1009
        %v1012 = vadd.f32 %v998, %v1010
        %v1013 = vadd.f32 %v999, %v1011
        %1014 = vset.pattern.permute.xlu0 33
        %1015 = vperm.xlu0 %1014, %v542
        %v1016 = vpop.permute.xlu0 %1015
        %v1018 = vperm.slane %v422, 1
        %v1019 = vperm.slane %v422, 5
        %v1022 = vperm.slane %v1018, 1
        %v1023 = vperm.slane %v1019, 1
        %v1024 = vmul.f32 %v1016, %v1022
        %v1025 = vmul.f32 %v1016, %v1023
        %v1026 = vadd.f32 %v1012, %v1024
        %v1027 = vadd.f32 %v1013, %v1025
        %1028 = vset.pattern.permute.xlu0 34
        %1029 = vperm.xlu0 %1028, %v542
        %v1030 = vpop.permute.xlu0 %1029
        %v1032 = vperm.slane %v422, 2
        %v1033 = vperm.slane %v422, 6
        %v1036 = vperm.slane %v1032, 2
        %v1037 = vperm.slane %v1033, 2
        %v1038 = vmul.f32 %v1030, %v1036
        %v1039 = vmul.f32 %v1030, %v1037
        %v1040 = vadd.f32 %v1026, %v1038
        %v1041 = vadd.f32 %v1027, %v1039
        %1042 = vset.pattern.permute.xlu0 35
        %1043 = vperm.xlu0 %1042, %v542
        %v1044 = vpop.permute.xlu0 %1043
        %v1046 = vperm.slane %v422, 3
        %v1047 = vperm.slane %v422, 7
        %v1050 = vperm.slane %v1046, 3
        %v1051 = vperm.slane %v1047, 3
        %v1052 = vmul.f32 %v1044, %v1050
        %v1053 = vmul.f32 %v1044, %v1051
        %v1054 = vadd.f32 %v1040, %v1052
        %v1055 = vadd.f32 %v1041, %v1053
        %1056 = vset.pattern.permute.xlu0 36
        %1057 = vperm.xlu0 %1056, %v542
        %v1058 = vpop.permute.xlu0 %1057
        %v1060 = vperm.slane %v423, 0
        %v1061 = vperm.slane %v423, 4
        %v1064 = vperm.slane %v1060, 0
        %v1065 = vperm.slane %v1061, 0
        %v1066 = vmul.f32 %v1058, %v1064
        %v1067 = vmul.f32 %v1058, %v1065
        %v1068 = vadd.f32 %v1054, %v1066
        %v1069 = vadd.f32 %v1055, %v1067
        %1070 = vset.pattern.permute.xlu0 37
        %1071 = vperm.xlu0 %1070, %v542
        %v1072 = vpop.permute.xlu0 %1071
        %v1074 = vperm.slane %v423, 1
        %v1075 = vperm.slane %v423, 5
        %v1078 = vperm.slane %v1074, 1
        %v1079 = vperm.slane %v1075, 1
        %v1080 = vmul.f32 %v1072, %v1078
        %v1081 = vmul.f32 %v1072, %v1079
        %v1082 = vadd.f32 %v1068, %v1080
        %v1083 = vadd.f32 %v1069, %v1081
        %1084 = vset.pattern.permute.xlu0 38
        %1085 = vperm.xlu0 %1084, %v542
        %v1086 = vpop.permute.xlu0 %1085
        %v1088 = vperm.slane %v423, 2
        %v1089 = vperm.slane %v423, 6
        %v1092 = vperm.slane %v1088, 2
        %v1093 = vperm.slane %v1089, 2
        %v1094 = vmul.f32 %v1086, %v1092
        %v1095 = vmul.f32 %v1086, %v1093
        %v1096 = vadd.f32 %v1082, %v1094
        %v1097 = vadd.f32 %v1083, %v1095
        %1098 = vset.pattern.permute.xlu0 39
        %1099 = vperm.xlu0 %1098, %v542
        %v1100 = vpop.permute.xlu0 %1099
        %v1102 = vperm.slane %v423, 3
        %v1103 = vperm.slane %v423, 7
        %v1106 = vperm.slane %v1102, 3
        %v1107 = vperm.slane %v1103, 3
        %v1108 = vmul.f32 %v1100, %v1106
        %v1109 = vmul.f32 %v1100, %v1107
        %v1110 = vadd.f32 %v1096, %v1108
        %v1111 = vadd.f32 %v1097, %v1109
        %1112 = vst [vmem:[#allocation1] ss:$2 sm:$0xff] %v422
        %v1113 = vld.sshfl [vmem:[#allocation1] sm:$0xff pattern:$0x75316420]
        %v1114 = vld.sshfl [vmem:[#allocation1 + $0x8] sm:$0xff pattern:$0x75316420]
        %1117 = vrot.lane.b32.xlu0 %v1113, 127
        %v1118 = vpop.permute.xlu0 %1117
        %1119 = vrot.lane.b32.xlu0 %v1114, 127
        %v1120 = vpop.permute.xlu0 %1119
        %vm1121 = vcmp.lt.s32.totalorder %v559, 127
        %v1122 = vsel %vm1121, %v1118, %v1120
        %v1123 = vsel %vm1121, %v1120, %v1118
        %v1125 = vperm.slane %v432, 0
        %v1126 = vperm.slane %v432, 1
        %v1129 = vmul.f32 %v1122, %v1125
        %v1130 = vmul.f32 %v1123, %v1126
        %1131 = vset.pattern.permute.xlu0 40
        %1132 = vperm.xlu0 %1131, %v542
        %v1133 = vpop.permute.xlu0 %1132
        %v1135 = vperm.slane %v1129, 0
        %v1136 = vperm.slane %v1130, 0
        %v1137 = vmul.f32 %v1133, %v1135
        %v1138 = vmul.f32 %v1133, %v1136
        %v1139 = vadd.f32 %v1110, %v1137
        %v1140 = vadd.f32 %v1111, %v1138
        %1141 = vset.pattern.permute.xlu0 41
        %1142 = vperm.xlu0 %1141, %v542
        %v1143 = vpop.permute.xlu0 %1142
        %v1145 = vperm.slane %v1129, 1
        %v1146 = vperm.slane %v1130, 1
        %v1147 = vmul.f32 %v1143, %v1145
        %v1148 = vmul.f32 %v1143, %v1146
        %v1149 = vadd.f32 %v1139, %v1147
        %v1150 = vadd.f32 %v1140, %v1148
        %1151 = vset.pattern.permute.xlu0 42
        %1152 = vperm.xlu0 %1151, %v542
        %v1153 = vpop.permute.xlu0 %1152
        %v1155 = vperm.slane %v1129, 2
        %v1156 = vperm.slane %v1130, 2
        %v1157 = vmul.f32 %v1153, %v1155
        %v1158 = vmul.f32 %v1153, %v1156
        %v1159 = vadd.f32 %v1149, %v1157
        %v1160 = vadd.f32 %v1150, %v1158
        %1161 = vset.pattern.permute.xlu0 43
        %1162 = vperm.xlu0 %1161, %v542
        %v1163 = vpop.permute.xlu0 %1162
        %v1165 = vperm.slane %v1129, 3
        %v1166 = vperm.slane %v1130, 3
        %v1167 = vmul.f32 %v1163, %v1165
        %v1168 = vmul.f32 %v1163, %v1166
        %v1169 = vadd.f32 %v1159, %v1167
        %v1170 = vadd.f32 %v1160, %v1168
        %1171 = vst [vmem:[#allocation1] ss:$2 sm:$0xff] %v423
        %v1172 = vld.sshfl [vmem:[#allocation1] sm:$0xff pattern:$0x75316420]
        %v1173 = vld.sshfl [vmem:[#allocation1 + $0x8] sm:$0xff pattern:$0x75316420]
        %1176 = vrot.lane.b32.xlu0 %v1172, 127
        %v1177 = vpop.permute.xlu0 %1176
        %1178 = vrot.lane.b32.xlu0 %v1173, 127
        %v1179 = vpop.permute.xlu0 %1178
        %v1180 = vsel %vm1121, %v1177, %v1179
        %v1181 = vsel %vm1121, %v1179, %v1177
        %v1182 = vmul.f32 %v1180, %v1125
        %v1183 = vmul.f32 %v1181, %v1126
        %1184 = vset.pattern.permute.xlu0 44
        %1185 = vperm.xlu0 %1184, %v542
        %v1186 = vpop.permute.xlu0 %1185
        %v1188 = vperm.slane %v1182, 0
        %v1189 = vperm.slane %v1183, 0
        %v1190 = vmul.f32 %v1186, %v1188
        %v1191 = vmul.f32 %v1186, %v1189
        %v1192 = vadd.f32 %v1169, %v1190
        %v1193 = vadd.f32 %v1170, %v1191
        %1194 = vset.pattern.permute.xlu0 45
        %1195 = vperm.xlu0 %1194, %v542
        %v1196 = vpop.permute.xlu0 %1195
        %v1198 = vperm.slane %v1182, 1
        %v1199 = vperm.slane %v1183, 1
        %v1200 = vmul.f32 %v1196, %v1198
        %v1201 = vmul.f32 %v1196, %v1199
        %v1202 = vadd.f32 %v1192, %v1200
        %v1203 = vadd.f32 %v1193, %v1201
        %1204 = vset.pattern.permute.xlu0 46
        %1205 = vperm.xlu0 %1204, %v542
        %v1206 = vpop.permute.xlu0 %1205
        %v1208 = vperm.slane %v1182, 2
        %v1209 = vperm.slane %v1183, 2
        %v1210 = vmul.f32 %v1206, %v1208
        %v1211 = vmul.f32 %v1206, %v1209
        %v1212 = vadd.f32 %v1202, %v1210
        %v1213 = vadd.f32 %v1203, %v1211
        %1214 = vset.pattern.permute.xlu0 47
        %1215 = vperm.xlu0 %1214, %v542
        %v1216 = vpop.permute.xlu0 %1215
        %v1218 = vperm.slane %v1182, 3
        %v1219 = vperm.slane %v1183, 3
        %v1220 = vmul.f32 %v1216, %v1218
        %v1221 = vmul.f32 %v1216, %v1219
        %v1222 = vadd.f32 %v1212, %v1220
        %v1223 = vadd.f32 %v1213, %v1221
        %1224 = vst [vmem:[#allocation1] ss:$2 sm:$0xff] %v422
        %v1225 = vld.sshfl [vmem:[#allocation1] sm:$0xff pattern:$0x75316420]
        %v1226 = vld.sshfl [vmem:[#allocation1 + $0x8] sm:$0xff pattern:$0x75316420]
        %1229 = vrot.lane.b32.xlu0 %v1225, 113
        %v1230 = vpop.permute.xlu0 %1229
        %1231 = vrot.lane.b32.xlu0 %v1226, 113
        %v1232 = vpop.permute.xlu0 %1231
        %vm1233 = vcmp.lt.s32.totalorder %v559, 113
        %v1234 = vsel %vm1233, %v1230, %v1232
        %v1235 = vsel %vm1233, %v1232, %v1230
        %v1237 = vperm.slane %v434, 0
        %v1238 = vperm.slane %v434, 1
        %v1241 = vmul.f32 %v1234, %v1237
        %v1242 = vmul.f32 %v1235, %v1238
        %1243 = vset.pattern.permute.xlu0 48
        %1244 = vperm.xlu0 %1243, %v542
        %v1245 = vpop.permute.xlu0 %1244
        %v1247 = vperm.slane %v1241, 0
        %v1248 = vperm.slane %v1242, 0
        %v1249 = vmul.f32 %v1245, %v1247
        %v1250 = vmul.f32 %v1245, %v1248
        %v1251 = vadd.f32 %v1222, %v1249
        %v1252 = vadd.f32 %v1223, %v1250
        %1253 = vset.pattern.permute.xlu0 49
        %1254 = vperm.xlu0 %1253, %v542
        %v1255 = vpop.permute.xlu0 %1254
        %v1257 = vperm.slane %v1241, 1
        %v1258 = vperm.slane %v1242, 1
        %v1259 = vmul.f32 %v1255, %v1257
        %v1260 = vmul.f32 %v1255, %v1258
        %v1261 = vadd.f32 %v1251, %v1259
        %v1262 = vadd.f32 %v1252, %v1260
        %1263 = vset.pattern.permute.xlu0 50
        %1264 = vperm.xlu0 %1263, %v542
        %v1265 = vpop.permute.xlu0 %1264
        %v1267 = vperm.slane %v1241, 2
        %v1268 = vperm.slane %v1242, 2
        %v1269 = vmul.f32 %v1265, %v1267
        %v1270 = vmul.f32 %v1265, %v1268
        %v1271 = vadd.f32 %v1261, %v1269
        %v1272 = vadd.f32 %v1262, %v1270
        %1273 = vset.pattern.permute.xlu0 51
        %1274 = vperm.xlu0 %1273, %v542
        %v1275 = vpop.permute.xlu0 %1274
        %v1277 = vperm.slane %v1241, 3
        %v1278 = vperm.slane %v1242, 3
        %v1279 = vmul.f32 %v1275, %v1277
        %v1280 = vmul.f32 %v1275, %v1278
        %v1281 = vadd.f32 %v1271, %v1279
        %v1282 = vadd.f32 %v1272, %v1280
        %1283 = vst [vmem:[#allocation1] ss:$2 sm:$0xff] %v423
        %v1284 = vld.sshfl [vmem:[#allocation1] sm:$0xff pattern:$0x75316420]
        %v1285 = vld.sshfl [vmem:[#allocation1 + $0x8] sm:$0xff pattern:$0x75316420]
        %1288 = vrot.lane.b32.xlu0 %v1284, 113
        %v1289 = vpop.permute.xlu0 %1288
        %1290 = vrot.lane.b32.xlu0 %v1285, 113
        %v1291 = vpop.permute.xlu0 %1290
        %v1292 = vsel %vm1233, %v1289, %v1291
        %v1293 = vsel %vm1233, %v1291, %v1289
        %v1294 = vmul.f32 %v1292, %v1237
        %v1295 = vmul.f32 %v1293, %v1238
        %1296 = vset.pattern.permute.xlu0 52
        %1297 = vperm.xlu0 %1296, %v542
        %v1298 = vpop.permute.xlu0 %1297
        %v1300 = vperm.slane %v1294, 0
        %v1301 = vperm.slane %v1295, 0
        %v1302 = vmul.f32 %v1298, %v1300
        %v1303 = vmul.f32 %v1298, %v1301
        %v1304 = vadd.f32 %v1281, %v1302
        %v1305 = vadd.f32 %v1282, %v1303
        %1306 = vset.pattern.permute.xlu0 53
        %1307 = vperm.xlu0 %1306, %v542
        %v1308 = vpop.permute.xlu0 %1307
        %v1310 = vperm.slane %v1294, 1
        %v1311 = vperm.slane %v1295, 1
        %v1312 = vmul.f32 %v1308, %v1310
        %v1313 = vmul.f32 %v1308, %v1311
        %v1314 = vadd.f32 %v1304, %v1312
        %v1315 = vadd.f32 %v1305, %v1313
        %1316 = vset.pattern.permute.xlu0 54
        %1317 = vperm.xlu0 %1316, %v542
        %v1318 = vpop.permute.xlu0 %1317
        %v1320 = vperm.slane %v1294, 2
        %v1321 = vperm.slane %v1295, 2
        %v1322 = vmul.f32 %v1318, %v1320
        %v1323 = vmul.f32 %v1318, %v1321
        %v1324 = vadd.f32 %v1314, %v1322
        %v1325 = vadd.f32 %v1315, %v1323
        %1326 = vset.pattern.permute.xlu0 55
        %1327 = vperm.xlu0 %1326, %v542
        %v1328 = vpop.permute.xlu0 %1327
        %v1330 = vperm.slane %v1294, 3
        %v1331 = vperm.slane %v1295, 3
        %v1332 = vmul.f32 %v1328, %v1330
        %v1333 = vmul.f32 %v1328, %v1331
        %v1334 = vadd.f32 %v1324, %v1332
        %v1335 = vadd.f32 %v1325, %v1333
        %1336 = vst [vmem:[#allocation1] ss:$2 sm:$0xff] %v422
        %v1337 = vld.sshfl [vmem:[#allocation1] sm:$0xff pattern:$0x75316420]
        %v1338 = vld.sshfl [vmem:[#allocation1 + $0x8] sm:$0xff pattern:$0x75316420]
        %1341 = vrot.lane.b32.xlu0 %v1337, 112
        %v1342 = vpop.permute.xlu0 %1341
        %1343 = vrot.lane.b32.xlu0 %v1338, 112
        %v1344 = vpop.permute.xlu0 %1343
        %vm1345 = vcmp.lt.s32.totalorder %v559, 112
        %v1346 = vsel %vm1345, %v1342, %v1344
        %v1347 = vsel %vm1345, %v1344, %v1342
        %v1349 = vperm.slane %v436, 0
        %v1350 = vperm.slane %v436, 1
        %v1353 = vmul.f32 %v1346, %v1349
        %v1354 = vmul.f32 %v1347, %v1350
        %1355 = vset.pattern.permute.xlu0 56
        %1356 = vperm.xlu0 %1355, %v542
        %v1357 = vpop.permute.xlu0 %1356
        %v1359 = vperm.slane %v1353, 0
        %v1360 = vperm.slane %v1354, 0
        %v1361 = vmul.f32 %v1357, %v1359
        %v1362 = vmul.f32 %v1357, %v1360
        %v1363 = vadd.f32 %v1334, %v1361
        %v1364 = vadd.f32 %v1335, %v1362
        %1365 = vset.pattern.permute.xlu0 57
        %1366 = vperm.xlu0 %1365, %v542
        %v1367 = vpop.permute.xlu0 %1366
        %v1369 = vperm.slane %v1353, 1
        %v1370 = vperm.slane %v1354, 1
        %v1371 = vmul.f32 %v1367, %v1369
        %v1372 = vmul.f32 %v1367, %v1370
        %v1373 = vadd.f32 %v1363, %v1371
        %v1374 = vadd.f32 %v1364, %v1372
        %1375 = vset.pattern.permute.xlu0 58
        %1376 = vperm.xlu0 %1375, %v542
        %v1377 = vpop.permute.xlu0 %1376
        %v1379 = vperm.slane %v1353, 2
        %v1380 = vperm.slane %v1354, 2
        %v1381 = vmul.f32 %v1377, %v1379
        %v1382 = vmul.f32 %v1377, %v1380
        %v1383 = vadd.f32 %v1373, %v1381
        %v1384 = vadd.f32 %v1374, %v1382
        %1385 = vset.pattern.permute.xlu0 59
        %1386 = vperm.xlu0 %1385, %v542
        %v1387 = vpop.permute.xlu0 %1386
        %v1389 = vperm.slane %v1353, 3
        %v1390 = vperm.slane %v1354, 3
        %v1391 = vmul.f32 %v1387, %v1389
        %v1392 = vmul.f32 %v1387, %v1390
        %v1393 = vadd.f32 %v1383, %v1391
        %v1394 = vadd.f32 %v1384, %v1392
        %1395 = vst [vmem:[#allocation1] ss:$2 sm:$0xff] %v423
        %v1396 = vld.sshfl [vmem:[#allocation1] sm:$0xff pattern:$0x75316420]
        %v1397 = vld.sshfl [vmem:[#allocation1 + $0x8] sm:$0xff pattern:$0x75316420]
        %1400 = vrot.lane.b32.xlu0 %v1396, 112
        %v1401 = vpop.permute.xlu0 %1400
        %1402 = vrot.lane.b32.xlu0 %v1397, 112
        %v1403 = vpop.permute.xlu0 %1402
        %v1404 = vsel %vm1345, %v1401, %v1403
        %v1405 = vsel %vm1345, %v1403, %v1401
        %v1406 = vmul.f32 %v1404, %v1349
        %v1407 = vmul.f32 %v1405, %v1350
        %1408 = vset.pattern.permute.xlu0 60
        %1409 = vperm.xlu0 %1408, %v542
        %v1410 = vpop.permute.xlu0 %1409
        %v1412 = vperm.slane %v1406, 0
        %v1413 = vperm.slane %v1407, 0
        %v1414 = vmul.f32 %v1410, %v1412
        %v1415 = vmul.f32 %v1410, %v1413
        %v1416 = vadd.f32 %v1393, %v1414
        %v1417 = vadd.f32 %v1394, %v1415
        %1418 = vset.pattern.permute.xlu0 61
        %1419 = vperm.xlu0 %1418, %v542
        %v1420 = vpop.permute.xlu0 %1419
        %v1422 = vperm.slane %v1406, 1
        %v1423 = vperm.slane %v1407, 1
        %v1424 = vmul.f32 %v1420, %v1422
        %v1425 = vmul.f32 %v1420, %v1423
        %v1426 = vadd.f32 %v1416, %v1424
        %v1427 = vadd.f32 %v1417, %v1425
        %1428 = vset.pattern.permute.xlu0 62
        %1429 = vperm.xlu0 %1428, %v542
        %v1430 = vpop.permute.xlu0 %1429
        %v1432 = vperm.slane %v1406, 2
        %v1433 = vperm.slane %v1407, 2
        %v1434 = vmul.f32 %v1430, %v1432
        %v1435 = vmul.f32 %v1430, %v1433
        %v1436 = vadd.f32 %v1426, %v1434
        %v1437 = vadd.f32 %v1427, %v1435
        %1438 = vset.pattern.permute.xlu0 63
        %1439 = vperm.xlu0 %1438, %v542
        %v1440 = vpop.permute.xlu0 %1439
        %v1442 = vperm.slane %v1406, 3
        %v1443 = vperm.slane %v1407, 3
        %v1444 = vmul.f32 %v1440, %v1442
        %v1445 = vmul.f32 %v1440, %v1443
        %v1446 = vadd.f32 %v1436, %v1444
        %v1447 = vadd.f32 %v1437, %v1445
        %1448 = vst [vmem:[#allocation1] ss:$2 sm:$0xff] %v422
        %v1449 = vld.sshfl [vmem:[#allocation1] sm:$0xff pattern:$0x75316420]
        %v1450 = vld.sshfl [vmem:[#allocation1 + $0x8] sm:$0xff pattern:$0x75316420]
        %1453 = vrot.lane.b32.xlu0 %v1449, 111
        %v1454 = vpop.permute.xlu0 %1453
        %1455 = vrot.lane.b32.xlu0 %v1450, 111
        %v1456 = vpop.permute.xlu0 %1455
        %vm1457 = vcmp.lt.s32.totalorder %v559, 111
        %v1458 = vsel %vm1457, %v1454, %v1456
        %v1459 = vsel %vm1457, %v1456, %v1454
        %v1461 = vperm.slane %v438, 0
        %v1462 = vperm.slane %v438, 1
        %v1465 = vmul.f32 %v1458, %v1461
        %v1466 = vmul.f32 %v1459, %v1462
        %1467 = vset.pattern.permute.xlu0 64
        %1468 = vperm.xlu0 %1467, %v542
        %v1469 = vpop.permute.xlu0 %1468
        %v1471 = vperm.slane %v1465, 0
        %v1472 = vperm.slane %v1466, 0
        %v1473 = vmul.f32 %v1469, %v1471
        %v1474 = vmul.f32 %v1469, %v1472
        %v1475 = vadd.f32 %v1446, %v1473
        %v1476 = vadd.f32 %v1447, %v1474
        %1477 = vset.pattern.permute.xlu0 65
        %1478 = vperm.xlu0 %1477, %v542
        %v1479 = vpop.permute.xlu0 %1478
        %v1481 = vperm.slane %v1465, 1
        %v1482 = vperm.slane %v1466, 1
        %v1483 = vmul.f32 %v1479, %v1481
        %v1484 = vmul.f32 %v1479, %v1482
        %v1485 = vadd.f32 %v1475, %v1483
        %v1486 = vadd.f32 %v1476, %v1484
        %1487 = vset.pattern.permute.xlu0 66
        %1488 = vperm.xlu0 %1487, %v542
        %v1489 = vpop.permute.xlu0 %1488
        %v1491 = vperm.slane %v1465, 2
        %v1492 = vperm.slane %v1466, 2
        %v1493 = vmul.f32 %v1489, %v1491
        %v1494 = vmul.f32 %v1489, %v1492
        %v1495 = vadd.f32 %v1485, %v1493
        %v1496 = vadd.f32 %v1486, %v1494
        %1497 = vset.pattern.permute.xlu0 67
        %1498 = vperm.xlu0 %1497, %v542
        %v1499 = vpop.permute.xlu0 %1498
        %v1501 = vperm.slane %v1465, 3
        %v1502 = vperm.slane %v1466, 3
        %v1503 = vmul.f32 %v1499, %v1501
        %v1504 = vmul.f32 %v1499, %v1502
        %v1505 = vadd.f32 %v1495, %v1503
        %v1506 = vadd.f32 %v1496, %v1504
        %1507 = vst [vmem:[#allocation1] ss:$2 sm:$0xff] %v423
        %v1508 = vld.sshfl [vmem:[#allocation1] sm:$0xff pattern:$0x75316420]
        %v1509 = vld.sshfl [vmem:[#allocation1 + $0x8] sm:$0xff pattern:$0x75316420]
        %1512 = vrot.lane.b32.xlu0 %v1508, 111
        %v1513 = vpop.permute.xlu0 %1512
        %1514 = vrot.lane.b32.xlu0 %v1509, 111
        %v1515 = vpop.permute.xlu0 %1514
        %v1516 = vsel %vm1457, %v1513, %v1515
        %v1517 = vsel %vm1457, %v1515, %v1513
        %v1518 = vmul.f32 %v1516, %v1461
        %v1519 = vmul.f32 %v1517, %v1462
        %1520 = vset.pattern.permute.xlu0 68
        %1521 = vperm.xlu0 %1520, %v542
        %v1522 = vpop.permute.xlu0 %1521
        %v1524 = vperm.slane %v1518, 0
        %v1525 = vperm.slane %v1519, 0
        %v1526 = vmul.f32 %v1522, %v1524
        %v1527 = vmul.f32 %v1522, %v1525
        %v1528 = vadd.f32 %v1505, %v1526
        %v1529 = vadd.f32 %v1506, %v1527
        %1530 = vset.pattern.permute.xlu0 69
        %1531 = vperm.xlu0 %1530, %v542
        %v1532 = vpop.permute.xlu0 %1531
        %v1534 = vperm.slane %v1518, 1
        %v1535 = vperm.slane %v1519, 1
        %v1536 = vmul.f32 %v1532, %v1534
        %v1537 = vmul.f32 %v1532, %v1535
        %v1538 = vadd.f32 %v1528, %v1536
        %v1539 = vadd.f32 %v1529, %v1537
        %1540 = vset.pattern.permute.xlu0 70
        %1541 = vperm.xlu0 %1540, %v542
        %v1542 = vpop.permute.xlu0 %1541
        %v1544 = vperm.slane %v1518, 2
        %v1545 = vperm.slane %v1519, 2
        %v1546 = vmul.f32 %v1542, %v1544
        %v1547 = vmul.f32 %v1542, %v1545
        %v1548 = vadd.f32 %v1538, %v1546
        %v1549 = vadd.f32 %v1539, %v1547
        %1550 = vset.pattern.permute.xlu0 71
        %1551 = vperm.xlu0 %1550, %v542
        %v1552 = vpop.permute.xlu0 %1551
        %v1554 = vperm.slane %v1518, 3
        %v1555 = vperm.slane %v1519, 3
        %v1556 = vmul.f32 %v1552, %v1554
        %v1557 = vmul.f32 %v1552, %v1555
        %v1558 = vadd.f32 %v1548, %v1556
        %v1559 = vadd.f32 %v1549, %v1557
        %v1560 = vmax.f32 %v1558, 0.0
        %v1561 = vmax.f32 %v1559, 0.0
        %v1562 = vld [vmem:[%s6] sm:$0xff]
        %v1563 = vld [vmem:[%s5] sm:$0xff]
        %1565 = vset.pattern.permute.xlu0 0
        %1566 = vperm.xlu0 %1565, %v1562
        %v1567 = vpop.permute.xlu0 %1566
        %v1569 = vadd.f32 %v1567, 0.0
        %1570 = vrot.lane.b32.xlu0 %v1560, 17
        %v1571 = vpop.permute.xlu0 %1570
        %1572 = vrot.lane.b32.xlu0 %v1561, 17
        %v1573 = vpop.permute.xlu0 %1572
        %v1574 = vsel %vm560, %v1571, %v1573
        %v1575 = vsel %vm560, %v1573, %v1571
        %v1576 = vmul.f32 %v1575, %v564
        %v1577 = vmul.f32 %v1574, %v565
        %1579 = vset.pattern.permute.xlu0 0
        %1580 = vperm.xlu0 %1579, %v1563
        %v1581 = vpop.permute.xlu0 %1580
        %v1583 = vperm.slane %v1576, 0
        %v1584 = vperm.slane %v1577, 0
        %v1585 = vmul.f32 %v1581, %v1583
        %v1586 = vmul.f32 %v1581, %v1584
        %v1587 = vadd.f32 %v1569, %v1585
        %v1588 = vadd.f32 %v1569, %v1586
        %1589 = vset.pattern.permute.xlu0 1
        %1590 = vperm.xlu0 %1589, %v1563
        %v1591 = vpop.permute.xlu0 %1590
        %v1593 = vperm.slane %v1576, 1
        %v1594 = vperm.slane %v1577, 1
        %v1595 = vmul.f32 %v1591, %v1593
        %v1596 = vmul.f32 %v1591, %v1594
        %v1597 = vadd.f32 %v1587, %v1595
        %v1598 = vadd.f32 %v1588, %v1596
        %1599 = vset.pattern.permute.xlu0 2
        %1600 = vperm.xlu0 %1599, %v1563
        %v1601 = vpop.permute.xlu0 %1600
        %v1603 = vperm.slane %v1576, 2
        %v1604 = vperm.slane %v1577, 2
        %v1605 = vmul.f32 %v1601, %v1603
        %v1606 = vmul.f32 %v1601, %v1604
        %v1607 = vadd.f32 %v1597, %v1605
        %v1608 = vadd.f32 %v1598, %v1606
        %1609 = vset.pattern.permute.xlu0 3
        %1610 = vperm.xlu0 %1609, %v1563
        %v1611 = vpop.permute.xlu0 %1610
        %v1613 = vperm.slane %v1576, 3
        %v1614 = vperm.slane %v1577, 3
        %v1615 = vmul.f32 %v1611, %v1613
        %v1616 = vmul.f32 %v1611, %v1614
        %v1617 = vadd.f32 %v1607, %v1615
        %v1618 = vadd.f32 %v1608, %v1616
        %1619 = vrot.lane.b32.xlu0 %v1560, 16
        %v1620 = vpop.permute.xlu0 %1619
        %1621 = vrot.lane.b32.xlu0 %v1561, 16
        %v1622 = vpop.permute.xlu0 %1621
        %v1623 = vsel %vm673, %v1620, %v1622
        %v1624 = vsel %vm673, %v1622, %v1620
        %v1625 = vmul.f32 %v1624, %v677
        %v1626 = vmul.f32 %v1623, %v678
        %1627 = vset.pattern.permute.xlu0 4
        %1628 = vperm.xlu0 %1627, %v1563
        %v1629 = vpop.permute.xlu0 %1628
        %v1631 = vperm.slane %v1625, 0
        %v1632 = vperm.slane %v1626, 0
        %v1633 = vmul.f32 %v1629, %v1631
        %v1634 = vmul.f32 %v1629, %v1632
        %v1635 = vadd.f32 %v1617, %v1633
        %v1636 = vadd.f32 %v1618, %v1634
        %1637 = vset.pattern.permute.xlu0 5
        %1638 = vperm.xlu0 %1637, %v1563
        %v1639 = vpop.permute.xlu0 %1638
        %v1641 = vperm.slane %v1625, 1
        %v1642 = vperm.slane %v1626, 1
        %v1643 = vmul.f32 %v1639, %v1641
        %v1644 = vmul.f32 %v1639, %v1642
        %v1645 = vadd.f32 %v1635, %v1643
        %v1646 = vadd.f32 %v1636, %v1644
        %1647 = vset.pattern.permute.xlu0 6
        %1648 = vperm.xlu0 %1647, %v1563
        %v1649 = vpop.permute.xlu0 %1648
        %v1651 = vperm.slane %v1625, 2
        %v1652 = vperm.slane %v1626, 2
        %v1653 = vmul.f32 %v1649, %v1651
        %v1654 = vmul.f32 %v1649, %v1652
        %v1655 = vadd.f32 %v1645, %v1653
        %v1656 = vadd.f32 %v1646, %v1654
        %1657 = vset.pattern.permute.xlu0 7
        %1658 = vperm.xlu0 %1657, %v1563
        %v1659 = vpop.permute.xlu0 %1658
        %v1661 = vperm.slane %v1625, 3
        %v1662 = vperm.slane %v1626, 3
        %v1663 = vmul.f32 %v1659, %v1661
        %v1664 = vmul.f32 %v1659, %v1662
        %v1665 = vadd.f32 %v1655, %v1663
        %v1666 = vadd.f32 %v1656, %v1664
        %1667 = vrot.lane.b32.xlu0 %v1560, 15
        %v1668 = vpop.permute.xlu0 %1667
        %1669 = vrot.lane.b32.xlu0 %v1561, 15
        %v1670 = vpop.permute.xlu0 %1669
        %v1671 = vsel %vm785, %v1668, %v1670
        %v1672 = vsel %vm785, %v1670, %v1668
        %v1673 = vmul.f32 %v1672, %v789
        %v1674 = vmul.f32 %v1671, %v790
        %1675 = vset.pattern.permute.xlu0 8
        %1676 = vperm.xlu0 %1675, %v1563
        %v1677 = vpop.permute.xlu0 %1676
        %v1679 = vperm.slane %v1673, 0
        %v1680 = vperm.slane %v1674, 0
        %v1681 = vmul.f32 %v1677, %v1679
        %v1682 = vmul.f32 %v1677, %v1680
        %v1683 = vadd.f32 %v1665, %v1681
        %v1684 = vadd.f32 %v1666, %v1682
        %1685 = vset.pattern.permute.xlu0 9
        %1686 = vperm.xlu0 %1685, %v1563
        %v1687 = vpop.permute.xlu0 %1686
        %v1689 = vperm.slane %v1673, 1
        %v1690 = vperm.slane %v1674, 1
        %v1691 = vmul.f32 %v1687, %v1689
        %v1692 = vmul.f32 %v1687, %v1690
        %v1693 = vadd.f32 %v1683, %v1691
        %v1694 = vadd.f32 %v1684, %v1692
        %1695 = vset.pattern.permute.xlu0 10
        %1696 = vperm.xlu0 %1695, %v1563
        %v1697 = vpop.permute.xlu0 %1696
        %v1699 = vperm.slane %v1673, 2
        %v1700 = vperm.slane %v1674, 2
        %v1701 = vmul.f32 %v1697, %v1699
        %v1702 = vmul.f32 %v1697, %v1700
        %v1703 = vadd.f32 %v1693, %v1701
        %v1704 = vadd.f32 %v1694, %v1702
        %1705 = vset.pattern.permute.xlu0 11
        %1706 = vperm.xlu0 %1705, %v1563
        %v1707 = vpop.permute.xlu0 %1706
        %v1709 = vperm.slane %v1673, 3
        %v1710 = vperm.slane %v1674, 3
        %v1711 = vmul.f32 %v1707, %v1709
        %v1712 = vmul.f32 %v1707, %v1710
        %v1713 = vadd.f32 %v1703, %v1711
        %v1714 = vadd.f32 %v1704, %v1712
        %1715 = vrot.lane.b32.xlu0 %v1560, 1
        %v1716 = vpop.permute.xlu0 %1715
        %1717 = vrot.lane.b32.xlu0 %v1561, 1
        %v1718 = vpop.permute.xlu0 %1717
        %v1719 = vsel %vm897, %v1716, %v1718
        %v1720 = vsel %vm897, %v1718, %v1716
        %v1721 = vmul.f32 %v1720, %v901
        %v1722 = vmul.f32 %v1719, %v902
        %1723 = vset.pattern.permute.xlu0 12
        %1724 = vperm.xlu0 %1723, %v1563
        %v1725 = vpop.permute.xlu0 %1724
        %v1727 = vperm.slane %v1721, 0
        %v1728 = vperm.slane %v1722, 0
        %v1729 = vmul.f32 %v1725, %v1727
        %v1730 = vmul.f32 %v1725, %v1728
        %v1731 = vadd.f32 %v1713, %v1729
        %v1732 = vadd.f32 %v1714, %v1730
        %1733 = vset.pattern.permute.xlu0 13
        %1734 = vperm.xlu0 %1733, %v1563
        %v1735 = vpop.permute.xlu0 %1734
        %v1737 = vperm.slane %v1721, 1
        %v1738 = vperm.slane %v1722, 1
        %v1739 = vmul.f32 %v1735, %v1737
        %v1740 = vmul.f32 %v1735, %v1738
        %v1741 = vadd.f32 %v1731, %v1739
        %v1742 = vadd.f32 %v1732, %v1740
        %1743 = vset.pattern.permute.xlu0 14
        %1744 = vperm.xlu0 %1743, %v1563
        %v1745 = vpop.permute.xlu0 %1744
        %v1747 = vperm.slane %v1721, 2
        %v1748 = vperm.slane %v1722, 2
        %v1749 = vmul.f32 %v1745, %v1747
        %v1750 = vmul.f32 %v1745, %v1748
        %v1751 = vadd.f32 %v1741, %v1749
        %v1752 = vadd.f32 %v1742, %v1750
        %1753 = vset.pattern.permute.xlu0 15
        %1754 = vperm.xlu0 %1753, %v1563
        %v1755 = vpop.permute.xlu0 %1754
        %v1757 = vperm.slane %v1721, 3
        %v1758 = vperm.slane %v1722, 3
        %v1759 = vmul.f32 %v1755, %v1757
        %v1760 = vmul.f32 %v1755, %v1758
        %v1761 = vadd.f32 %v1751, %v1759
        %v1762 = vadd.f32 %v1752, %v1760
        %1763 = vset.pattern.permute.xlu0 16
        %1764 = vperm.xlu0 %1763, %v1563
        %v1765 = vpop.permute.xlu0 %1764
        %v1767 = vperm.slane %v1560, 0
        %v1768 = vperm.slane %v1561, 0
        %v1769 = vmul.f32 %v1765, %v1767
        %v1770 = vmul.f32 %v1765, %v1768
        %v1771 = vadd.f32 %v1761, %v1769
        %v1772 = vadd.f32 %v1762, %v1770
        %1773 = vset.pattern.permute.xlu0 17
        %1774 = vperm.xlu0 %1773, %v1563
        %v1775 = vpop.permute.xlu0 %1774
        %v1777 = vperm.slane %v1560, 1
        %v1778 = vperm.slane %v1561, 1
        %v1779 = vmul.f32 %v1775, %v1777
        %v1780 = vmul.f32 %v1775, %v1778
        %v1781 = vadd.f32 %v1771, %v1779
        %v1782 = vadd.f32 %v1772, %v1780
        %1783 = vset.pattern.permute.xlu0 18
        %1784 = vperm.xlu0 %1783, %v1563
        %v1785 = vpop.permute.xlu0 %1784
        %v1787 = vperm.slane %v1560, 2
        %v1788 = vperm.slane %v1561, 2
        %v1789 = vmul.f32 %v1785, %v1787
        %v1790 = vmul.f32 %v1785, %v1788
        %v1791 = vadd.f32 %v1781, %v1789
        %v1792 = vadd.f32 %v1782, %v1790
        %1793 = vset.pattern.permute.xlu0 19
        %1794 = vperm.xlu0 %1793, %v1563
        %v1795 = vpop.permute.xlu0 %1794
        %v1797 = vperm.slane %v1560, 3
        %v1798 = vperm.slane %v1561, 3
        %v1799 = vmul.f32 %v1795, %v1797
        %v1800 = vmul.f32 %v1795, %v1798
        %v1801 = vadd.f32 %v1791, %v1799
        %v1802 = vadd.f32 %v1792, %v1800
        %1803 = vrot.lane.b32.xlu0 %v1560, 127
        %v1804 = vpop.permute.xlu0 %1803
        %1805 = vrot.lane.b32.xlu0 %v1561, 127
        %v1806 = vpop.permute.xlu0 %1805
        %v1807 = vsel %vm1121, %v1804, %v1806
        %v1808 = vsel %vm1121, %v1806, %v1804
        %v1809 = vmul.f32 %v1807, %v1125
        %v1810 = vmul.f32 %v1808, %v1126
        %1811 = vset.pattern.permute.xlu0 20
        %1812 = vperm.xlu0 %1811, %v1563
        %v1813 = vpop.permute.xlu0 %1812
        %v1815 = vperm.slane %v1809, 0
        %v1816 = vperm.slane %v1810, 0
        %v1817 = vmul.f32 %v1813, %v1815
        %v1818 = vmul.f32 %v1813, %v1816
        %v1819 = vadd.f32 %v1801, %v1817
        %v1820 = vadd.f32 %v1802, %v1818
        %1821 = vset.pattern.permute.xlu0 21
        %1822 = vperm.xlu0 %1821, %v1563
        %v1823 = vpop.permute.xlu0 %1822
        %v1825 = vperm.slane %v1809, 1
        %v1826 = vperm.slane %v1810, 1
        %v1827 = vmul.f32 %v1823, %v1825
        %v1828 = vmul.f32 %v1823, %v1826
        %v1829 = vadd.f32 %v1819, %v1827
        %v1830 = vadd.f32 %v1820, %v1828
        %1831 = vset.pattern.permute.xlu0 22
        %1832 = vperm.xlu0 %1831, %v1563
        %v1833 = vpop.permute.xlu0 %1832
        %v1835 = vperm.slane %v1809, 2
        %v1836 = vperm.slane %v1810, 2
        %v1837 = vmul.f32 %v1833, %v1835
        %v1838 = vmul.f32 %v1833, %v1836
        %v1839 = vadd.f32 %v1829, %v1837
        %v1840 = vadd.f32 %v1830, %v1838
        %1841 = vset.pattern.permute.xlu0 23
        %1842 = vperm.xlu0 %1841, %v1563
        %v1843 = vpop.permute.xlu0 %1842
        %v1845 = vperm.slane %v1809, 3
        %v1846 = vperm.slane %v1810, 3
        %v1847 = vmul.f32 %v1843, %v1845
        %v1848 = vmul.f32 %v1843, %v1846
        %v1849 = vadd.f32 %v1839, %v1847
        %v1850 = vadd.f32 %v1840, %v1848
        %1851 = vrot.lane.b32.xlu0 %v1560, 113
        %v1852 = vpop.permute.xlu0 %1851
        %1853 = vrot.lane.b32.xlu0 %v1561, 113
        %v1854 = vpop.permute.xlu0 %1853
        %v1855 = vsel %vm1233, %v1852, %v1854
        %v1856 = vsel %vm1233, %v1854, %v1852
        %v1857 = vmul.f32 %v1855, %v1237
        %v1858 = vmul.f32 %v1856, %v1238
        %1859 = vset.pattern.permute.xlu0 24
        %1860 = vperm.xlu0 %1859, %v1563
        %v1861 = vpop.permute.xlu0 %1860
        %v1863 = vperm.slane %v1857, 0
        %v1864 = vperm.slane %v1858, 0
        %v1865 = vmul.f32 %v1861, %v1863
        %v1866 = vmul.f32 %v1861, %v1864
        %v1867 = vadd.f32 %v1849, %v1865
        %v1868 = vadd.f32 %v1850, %v1866
        %1869 = vset.pattern.permute.xlu0 25
        %1870 = vperm.xlu0 %1869, %v1563
        %v1871 = vpop.permute.xlu0 %1870
        %v1873 = vperm.slane %v1857, 1
        %v1874 = vperm.slane %v1858, 1
        %v1875 = vmul.f32 %v1871, %v1873
        %v1876 = vmul.f32 %v1871, %v1874
        %v1877 = vadd.f32 %v1867, %v1875
        %v1878 = vadd.f32 %v1868, %v1876
        %1879 = vset.pattern.permute.xlu0 26
        %1880 = vperm.xlu0 %1879, %v1563
        %v1881 = vpop.permute.xlu0 %1880
        %v1883 = vperm.slane %v1857, 2
        %v1884 = vperm.slane %v1858, 2
        %v1885 = vmul.f32 %v1881, %v1883
        %v1886 = vmul.f32 %v1881, %v1884
        %v1887 = vadd.f32 %v1877, %v1885
        %v1888 = vadd.f32 %v1878, %v1886
        %1889 = vset.pattern.permute.xlu0 27
        %1890 = vperm.xlu0 %1889, %v1563
        %v1891 = vpop.permute.xlu0 %1890
        %v1893 = vperm.slane %v1857, 3
        %v1894 = vperm.slane %v1858, 3
        %v1895 = vmul.f32 %v1891, %v1893
        %v1896 = vmul.f32 %v1891, %v1894
        %v1897 = vadd.f32 %v1887, %v1895
        %v1898 = vadd.f32 %v1888, %v1896
        %1899 = vrot.lane.b32.xlu0 %v1560, 112
        %v1900 = vpop.permute.xlu0 %1899
        %1901 = vrot.lane.b32.xlu0 %v1561, 112
        %v1902 = vpop.permute.xlu0 %1901
        %v1903 = vsel %vm1345, %v1900, %v1902
        %v1904 = vsel %vm1345, %v1902, %v1900
        %v1905 = vmul.f32 %v1903, %v1349
        %v1906 = vmul.f32 %v1904, %v1350
        %1907 = vset.pattern.permute.xlu0 28
        %1908 = vperm.xlu0 %1907, %v1563
        %v1909 = vpop.permute.xlu0 %1908
        %v1911 = vperm.slane %v1905, 0
        %v1912 = vperm.slane %v1906, 0
        %v1913 = vmul.f32 %v1909, %v1911
        %v1914 = vmul.f32 %v1909, %v1912
        %v1915 = vadd.f32 %v1897, %v1913
        %v1916 = vadd.f32 %v1898, %v1914
        %1917 = vset.pattern.permute.xlu0 29
        %1918 = vperm.xlu0 %1917, %v1563
        %v1919 = vpop.permute.xlu0 %1918
        %v1921 = vperm.slane %v1905, 1
        %v1922 = vperm.slane %v1906, 1
        %v1923 = vmul.f32 %v1919, %v1921
        %v1924 = vmul.f32 %v1919, %v1922
        %v1925 = vadd.f32 %v1915, %v1923
        %v1926 = vadd.f32 %v1916, %v1924
        %1927 = vset.pattern.permute.xlu0 30
        %1928 = vperm.xlu0 %1927, %v1563
        %v1929 = vpop.permute.xlu0 %1928
        %v1931 = vperm.slane %v1905, 2
        %v1932 = vperm.slane %v1906, 2
        %v1933 = vmul.f32 %v1929, %v1931
        %v1934 = vmul.f32 %v1929, %v1932
        %v1935 = vadd.f32 %v1925, %v1933
        %v1936 = vadd.f32 %v1926, %v1934
        %1937 = vset.pattern.permute.xlu0 31
        %1938 = vperm.xlu0 %1937, %v1563
        %v1939 = vpop.permute.xlu0 %1938
        %v1941 = vperm.slane %v1905, 3
        %v1942 = vperm.slane %v1906, 3
        %v1943 = vmul.f32 %v1939, %v1941
        %v1944 = vmul.f32 %v1939, %v1942
        %v1945 = vadd.f32 %v1935, %v1943
        %v1946 = vadd.f32 %v1936, %v1944
        %1947 = vrot.lane.b32.xlu0 %v1560, 111
        %v1948 = vpop.permute.xlu0 %1947
        %1949 = vrot.lane.b32.xlu0 %v1561, 111
        %v1950 = vpop.permute.xlu0 %1949
        %v1951 = vsel %vm1457, %v1948, %v1950
        %v1952 = vsel %vm1457, %v1950, %v1948
        %v1953 = vmul.f32 %v1951, %v1461
        %v1954 = vmul.f32 %v1952, %v1462
        %1955 = vset.pattern.permute.xlu0 32
        %1956 = vperm.xlu0 %1955, %v1563
        %v1957 = vpop.permute.xlu0 %1956
        %v1959 = vperm.slane %v1953, 0
        %v1960 = vperm.slane %v1954, 0
        %v1961 = vmul.f32 %v1957, %v1959
        %v1962 = vmul.f32 %v1957, %v1960
        %v1963 = vadd.f32 %v1945, %v1961
        %v1964 = vadd.f32 %v1946, %v1962
        %1965 = vset.pattern.permute.xlu0 33
        %1966 = vperm.xlu0 %1965, %v1563
        %v1967 = vpop.permute.xlu0 %1966
        %v1969 = vperm.slane %v1953, 1
        %v1970 = vperm.slane %v1954, 1
        %v1971 = vmul.f32 %v1967, %v1969
        %v1972 = vmul.f32 %v1967, %v1970
        %v1973 = vadd.f32 %v1963, %v1971
        %v1974 = vadd.f32 %v1964, %v1972
        %1975 = vset.pattern.permute.xlu0 34
        %1976 = vperm.xlu0 %1975, %v1563
        %v1977 = vpop.permute.xlu0 %1976
        %v1979 = vperm.slane %v1953, 2
        %v1980 = vperm.slane %v1954, 2
        %v1981 = vmul.f32 %v1977, %v1979
        %v1982 = vmul.f32 %v1977, %v1980
        %v1983 = vadd.f32 %v1973, %v1981
        %v1984 = vadd.f32 %v1974, %v1982
        %1985 = vset.pattern.permute.xlu0 35
        %1986 = vperm.xlu0 %1985, %v1563
        %v1987 = vpop.permute.xlu0 %1986
        %v1989 = vperm.slane %v1953, 3
        %v1990 = vperm.slane %v1954, 3
        %v1991 = vmul.f32 %v1987, %v1989
        %v1992 = vmul.f32 %v1987, %v1990
        %v1993 = vadd.f32 %v1983, %v1991
        %v1994 = vadd.f32 %v1984, %v1992
        %v1995 = vadd.f32 %v490, %v1993
        %v1996 = vadd.f32 %v490, %v1994
        %v1999 = vrot.slane %v1993, 4
        %v2000 = vrot.slane %v1994, 4
        %v2003 = vadd.f32 %v451, %v1999
        %v2004 = vadd.f32 %v451, %v2000
        %2006 = vst [vmem:[#allocation1] ss:$2 sm:$0xff] %v540
        %v2007 = vld.sshfl [vmem:[#allocation1] sm:$0xff pattern:$0x75316420]
        %v2008 = vld.sshfl [vmem:[#allocation1 + $0x8] sm:$0xff pattern:$0x75316420]
        %v2011 = vmul.f32 %v1995, %v2007
        %v2012 = vmul.f32 %v1996, %v2008
        %v2013 = vadd.f32 %v2011, %v2003
        %v2014 = vadd.f32 %v2012, %v2004
        %vm2015 = vcmp.ge.f32.partialorder %v2013, 0.0
        %vm2016 = vcmp.ge.f32.partialorder %v2014, 0.0
        %v2017 = vmul.f32 %v2013, 0.2
        %v2018 = vmul.f32 %v2014, 0.2
        %v2019 = vsel %vm2015, %v2013, %v2017
        %v2020 = vsel %vm2016, %v2014, %v2018
        %v2021 = vld [vmem:[%s7] sm:$0xf]
        %2022 = vrot.lane.b32.xlu0 %v2019, 17
        %v2023 = vpop.permute.xlu0 %2022
        %2024 = vrot.lane.b32.xlu0 %v2020, 17
        %v2025 = vpop.permute.xlu0 %2024
        %v2026 = vsel %vm560, %v2023, %v2025
        %v2027 = vsel %vm560, %v2025, %v2023
        %v2028 = vmul.f32 %v2027, %v564
        %v2029 = vmul.f32 %v2026, %v565
        %2031 = vset.pattern.permute.xlu0 0
        %2032 = vperm.xlu0 %2031, %v2021
        %v2033 = vpop.permute.xlu0 %2032
        %v2035 = vperm.slane %v2028, 0
        %v2036 = vperm.slane %v2029, 0
        %v2037 = vmul.f32 %v2033, %v2035
        %v2038 = vmul.f32 %v2033, %v2036
        %v2039 = vadd.f32 %v2037, 0.0
        %v2040 = vadd.f32 %v2038, 0.0
        %2041 = vset.pattern.permute.xlu0 1
        %2042 = vperm.xlu0 %2041, %v2021
        %v2043 = vpop.permute.xlu0 %2042
        %v2045 = vperm.slane %v2028, 1
        %v2046 = vperm.slane %v2029, 1
        %v2047 = vmul.f32 %v2043, %v2045
        %v2048 = vmul.f32 %v2043, %v2046
        %v2049 = vadd.f32 %v2039, %v2047
        %v2050 = vadd.f32 %v2040, %v2048
        %2051 = vset.pattern.permute.xlu0 2
        %2052 = vperm.xlu0 %2051, %v2021
        %v2053 = vpop.permute.xlu0 %2052
        %v2055 = vperm.slane %v2028, 2
        %v2056 = vperm.slane %v2029, 2
        %v2057 = vmul.f32 %v2053, %v2055
        %v2058 = vmul.f32 %v2053, %v2056
        %v2059 = vadd.f32 %v2049, %v2057
        %v2060 = vadd.f32 %v2050, %v2058
        %2061 = vset.pattern.permute.xlu0 3
        %2062 = vperm.xlu0 %2061, %v2021
        %v2063 = vpop.permute.xlu0 %2062
        %v2065 = vperm.slane %v2028, 3
        %v2066 = vperm.slane %v2029, 3
        %v2067 = vmul.f32 %v2063, %v2065
        %v2068 = vmul.f32 %v2063, %v2066
        %v2069 = vadd.f32 %v2059, %v2067
        %v2070 = vadd.f32 %v2060, %v2068
        %2071 = vrot.lane.b32.xlu0 %v2019, 16
        %v2072 = vpop.permute.xlu0 %2071
        %2073 = vrot.lane.b32.xlu0 %v2020, 16
        %v2074 = vpop.permute.xlu0 %2073
        %v2075 = vsel %vm673, %v2072, %v2074
        %v2076 = vsel %vm673, %v2074, %v2072
        %v2077 = vmul.f32 %v2076, %v677
        %v2078 = vmul.f32 %v2075, %v678
        %2079 = vset.pattern.permute.xlu0 4
        %2080 = vperm.xlu0 %2079, %v2021
        %v2081 = vpop.permute.xlu0 %2080
        %v2083 = vperm.slane %v2077, 0
        %v2084 = vperm.slane %v2078, 0
        %v2085 = vmul.f32 %v2081, %v2083
        %v2086 = vmul.f32 %v2081, %v2084
        %v2087 = vadd.f32 %v2069, %v2085
        %v2088 = vadd.f32 %v2070, %v2086
        %2089 = vset.pattern.permute.xlu0 5
        %2090 = vperm.xlu0 %2089, %v2021
        %v2091 = vpop.permute.xlu0 %2090
        %v2093 = vperm.slane %v2077, 1
        %v2094 = vperm.slane %v2078, 1
        %v2095 = vmul.f32 %v2091, %v2093
        %v2096 = vmul.f32 %v2091, %v2094
        %v2097 = vadd.f32 %v2087, %v2095
        %v2098 = vadd.f32 %v2088, %v2096
        %2099 = vset.pattern.permute.xlu0 6
        %2100 = vperm.xlu0 %2099, %v2021
        %v2101 = vpop.permute.xlu0 %2100
        %v2103 = vperm.slane %v2077, 2
        %v2104 = vperm.slane %v2078, 2
        %v2105 = vmul.f32 %v2101, %v2103
        %v2106 = vmul.f32 %v2101, %v2104
        %v2107 = vadd.f32 %v2097, %v2105
        %v2108 = vadd.f32 %v2098, %v2106
        %2109 = vset.pattern.permute.xlu0 7
        %2110 = vperm.xlu0 %2109, %v2021
        %v2111 = vpop.permute.xlu0 %2110
        %v2113 = vperm.slane %v2077, 3
        %v2114 = vperm.slane %v2078, 3
        %v2115 = vmul.f32 %v2111, %v2113
        %v2116 = vmul.f32 %v2111, %v2114
        %v2117 = vadd.f32 %v2107, %v2115
        %v2118 = vadd.f32 %v2108, %v2116
        %2119 = vrot.lane.b32.xlu0 %v2019, 15
        %v2120 = vpop.permute.xlu0 %2119
        %2121 = vrot.lane.b32.xlu0 %v2020, 15
        %v2122 = vpop.permute.xlu0 %2121
        %v2123 = vsel %vm785, %v2120, %v2122
        %v2124 = vsel %vm785, %v2122, %v2120
        %v2125 = vmul.f32 %v2124, %v789
        %v2126 = vmul.f32 %v2123, %v790
        %2127 = vset.pattern.permute.xlu0 8
        %2128 = vperm.xlu0 %2127, %v2021
        %v2129 = vpop.permute.xlu0 %2128
        %v2131 = vperm.slane %v2125, 0
        %v2132 = vperm.slane %v2126, 0
        %v2133 = vmul.f32 %v2129, %v2131
        %v2134 = vmul.f32 %v2129, %v2132
        %v2135 = vadd.f32 %v2117, %v2133
        %v2136 = vadd.f32 %v2118, %v2134
        %2137 = vset.pattern.permute.xlu0 9
        %2138 = vperm.xlu0 %2137, %v2021
        %v2139 = vpop.permute.xlu0 %2138
        %v2141 = vperm.slane %v2125, 1
        %v2142 = vperm.slane %v2126, 1
        %v2143 = vmul.f32 %v2139, %v2141
        %v2144 = vmul.f32 %v2139, %v2142
        %v2145 = vadd.f32 %v2135, %v2143
        %v2146 = vadd.f32 %v2136, %v2144
        %2147 = vset.pattern.permute.xlu0 10
        %2148 = vperm.xlu0 %2147, %v2021
        %v2149 = vpop.permute.xlu0 %2148
        %v2151 = vperm.slane %v2125, 2
        %v2152 = vperm.slane %v2126, 2
        %v2153 = vmul.f32 %v2149, %v2151
        %v2154 = vmul.f32 %v2149, %v2152
        %v2155 = vadd.f32 %v2145, %v2153
        %v2156 = vadd.f32 %v2146, %v2154
        %2157 = vset.pattern.permute.xlu0 11
        %2158 = vperm.xlu0 %2157, %v2021
        %v2159 = vpop.permute.xlu0 %2158
        %v2161 = vperm.slane %v2125, 3
        %v2162 = vperm.slane %v2126, 3
        %v2163 = vmul.f32 %v2159, %v2161
        %v2164 = vmul.f32 %v2159, %v2162
        %v2165 = vadd.f32 %v2155, %v2163
        %v2166 = vadd.f32 %v2156, %v2164
        %2167 = vrot.lane.b32.xlu0 %v2019, 1
        %v2168 = vpop.permute.xlu0 %2167
        %2169 = vrot.lane.b32.xlu0 %v2020, 1
        %v2170 = vpop.permute.xlu0 %2169
        %v2171 = vsel %vm897, %v2168, %v2170
        %v2172 = vsel %vm897, %v2170, %v2168
        %v2173 = vmul.f32 %v2172, %v901
        %v2174 = vmul.f32 %v2171, %v902
        %2175 = vset.pattern.permute.xlu0 12
        %2176 = vperm.xlu0 %2175, %v2021
        %v2177 = vpop.permute.xlu0 %2176
        %v2179 = vperm.slane %v2173, 0
        %v2180 = vperm.slane %v2174, 0
        %v2181 = vmul.f32 %v2177, %v2179
        %v2182 = vmul.f32 %v2177, %v2180
        %v2183 = vadd.f32 %v2165, %v2181
        %v2184 = vadd.f32 %v2166, %v2182
        %2185 = vset.pattern.permute.xlu0 13
        %2186 = vperm.xlu0 %2185, %v2021
        %v2187 = vpop.permute.xlu0 %2186
        %v2189 = vperm.slane %v2173, 1
        %v2190 = vperm.slane %v2174, 1
        %v2191 = vmul.f32 %v2187, %v2189
        %v2192 = vmul.f32 %v2187, %v2190
        %v2193 = vadd.f32 %v2183, %v2191
        %v2194 = vadd.f32 %v2184, %v2192
        %2195 = vset.pattern.permute.xlu0 14
        %2196 = vperm.xlu0 %2195, %v2021
        %v2197 = vpop.permute.xlu0 %2196
        %v2199 = vperm.slane %v2173, 2
        %v2200 = vperm.slane %v2174, 2
        %v2201 = vmul.f32 %v2197, %v2199
        %v2202 = vmul.f32 %v2197, %v2200
        %v2203 = vadd.f32 %v2193, %v2201
        %v2204 = vadd.f32 %v2194, %v2202
        %2205 = vset.pattern.permute.xlu0 15
        %2206 = vperm.xlu0 %2205, %v2021
        %v2207 = vpop.permute.xlu0 %2206
        %v2209 = vperm.slane %v2173, 3
        %v2210 = vperm.slane %v2174, 3
        %v2211 = vmul.f32 %v2207, %v2209
        %v2212 = vmul.f32 %v2207, %v2210
        %v2213 = vadd.f32 %v2203, %v2211
        %v2214 = vadd.f32 %v2204, %v2212
        %2215 = vset.pattern.permute.xlu0 16
        %2216 = vperm.xlu0 %2215, %v2021
        %v2217 = vpop.permute.xlu0 %2216
        %v2219 = vperm.slane %v2019, 0
        %v2220 = vperm.slane %v2020, 0
        %v2221 = vmul.f32 %v2217, %v2219
        %v2222 = vmul.f32 %v2217, %v2220
        %v2223 = vadd.f32 %v2213, %v2221
        %v2224 = vadd.f32 %v2214, %v2222
        %2225 = vset.pattern.permute.xlu0 17
        %2226 = vperm.xlu0 %2225, %v2021
        %v2227 = vpop.permute.xlu0 %2226
        %v2229 = vperm.slane %v2019, 1
        %v2230 = vperm.slane %v2020, 1
        %v2231 = vmul.f32 %v2227, %v2229
        %v2232 = vmul.f32 %v2227, %v2230
        %v2233 = vadd.f32 %v2223, %v2231
        %v2234 = vadd.f32 %v2224, %v2232
        %2235 = vset.pattern.permute.xlu0 18
        %2236 = vperm.xlu0 %2235, %v2021
        %v2237 = vpop.permute.xlu0 %2236
        %v2239 = vperm.slane %v2019, 2
        %v2240 = vperm.slane %v2020, 2
        %v2241 = vmul.f32 %v2237, %v2239
        %v2242 = vmul.f32 %v2237, %v2240
        %v2243 = vadd.f32 %v2233, %v2241
        %v2244 = vadd.f32 %v2234, %v2242
        %2245 = vset.pattern.permute.xlu0 19
        %2246 = vperm.xlu0 %2245, %v2021
        %v2247 = vpop.permute.xlu0 %2246
        %v2249 = vperm.slane %v2019, 3
        %v2250 = vperm.slane %v2020, 3
        %v2251 = vmul.f32 %v2247, %v2249
        %v2252 = vmul.f32 %v2247, %v2250
        %v2253 = vadd.f32 %v2243, %v2251
        %v2254 = vadd.f32 %v2244, %v2252
        %2255 = vrot.lane.b32.xlu0 %v2019, 127
        %v2256 = vpop.permute.xlu0 %2255
        %2257 = vrot.lane.b32.xlu0 %v2020, 127
        %v2258 = vpop.permute.xlu0 %2257
        %v2259 = vsel %vm1121, %v2256, %v2258
        %v2260 = vsel %vm1121, %v2258, %v2256
        %v2261 = vmul.f32 %v2259, %v1125
        %v2262 = vmul.f32 %v2260, %v1126
        %2263 = vset.pattern.permute.xlu0 20
        %2264 = vperm.xlu0 %2263, %v2021
        %v2265 = vpop.permute.xlu0 %2264
        %v2267 = vperm.slane %v2261, 0
        %v2268 = vperm.slane %v2262, 0
        %v2269 = vmul.f32 %v2265, %v2267
        %v2270 = vmul.f32 %v2265, %v2268
        %v2271 = vadd.f32 %v2253, %v2269
        %v2272 = vadd.f32 %v2254, %v2270
        %2273 = vset.pattern.permute.xlu0 21
        %2274 = vperm.xlu0 %2273, %v2021
        %v2275 = vpop.permute.xlu0 %2274
        %v2277 = vperm.slane %v2261, 1
        %v2278 = vperm.slane %v2262, 1
        %v2279 = vmul.f32 %v2275, %v2277
        %v2280 = vmul.f32 %v2275, %v2278
        %v2281 = vadd.f32 %v2271, %v2279
        %v2282 = vadd.f32 %v2272, %v2280
        %2283 = vset.pattern.permute.xlu0 22
        %2284 = vperm.xlu0 %2283, %v2021
        %v2285 = vpop.permute.xlu0 %2284
        %v2287 = vperm.slane %v2261, 2
        %v2288 = vperm.slane %v2262, 2
        %v2289 = vmul.f32 %v2285, %v2287
        %v2290 = vmul.f32 %v2285, %v2288
        %v2291 = vadd.f32 %v2281, %v2289
        %v2292 = vadd.f32 %v2282, %v2290
        %2293 = vset.pattern.permute.xlu0 23
        %2294 = vperm.xlu0 %2293, %v2021
        %v2295 = vpop.permute.xlu0 %2294
        %v2297 = vperm.slane %v2261, 3
        %v2298 = vperm.slane %v2262, 3
        %v2299 = vmul.f32 %v2295, %v2297
        %v2300 = vmul.f32 %v2295, %v2298
        %v2301 = vadd.f32 %v2291, %v2299
        %v2302 = vadd.f32 %v2292, %v2300
        %2303 = vrot.lane.b32.xlu0 %v2019, 113
        %v2304 = vpop.permute.xlu0 %2303
        %2305 = vrot.lane.b32.xlu0 %v2020, 113
        %v2306 = vpop.permute.xlu0 %2305
        %v2307 = vsel %vm1233, %v2304, %v2306
        %v2308 = vsel %vm1233, %v2306, %v2304
        %v2309 = vmul.f32 %v2307, %v1237
        %v2310 = vmul.f32 %v2308, %v1238
        %2311 = vset.pattern.permute.xlu0 24
        %2312 = vperm.xlu0 %2311, %v2021
        %v2313 = vpop.permute.xlu0 %2312
        %v2315 = vperm.slane %v2309, 0
        %v2316 = vperm.slane %v2310, 0
        %v2317 = vmul.f32 %v2313, %v2315
        %v2318 = vmul.f32 %v2313, %v2316
        %v2319 = vadd.f32 %v2301, %v2317
        %v2320 = vadd.f32 %v2302, %v2318
        %2321 = vset.pattern.permute.xlu0 25
        %2322 = vperm.xlu0 %2321, %v2021
        %v2323 = vpop.permute.xlu0 %2322
        %v2325 = vperm.slane %v2309, 1
        %v2326 = vperm.slane %v2310, 1
        %v2327 = vmul.f32 %v2323, %v2325
        %v2328 = vmul.f32 %v2323, %v2326
        %v2329 = vadd.f32 %v2319, %v2327
        %v2330 = vadd.f32 %v2320, %v2328
        %2331 = vset.pattern.permute.xlu0 26
        %2332 = vperm.xlu0 %2331, %v2021
        %v2333 = vpop.permute.xlu0 %2332
        %v2335 = vperm.slane %v2309, 2
        %v2336 = vperm.slane %v2310, 2
        %v2337 = vmul.f32 %v2333, %v2335
        %v2338 = vmul.f32 %v2333, %v2336
        %v2339 = vadd.f32 %v2329, %v2337
        %v2340 = vadd.f32 %v2330, %v2338
        %2341 = vset.pattern.permute.xlu0 27
        %2342 = vperm.xlu0 %2341, %v2021
        %v2343 = vpop.permute.xlu0 %2342
        %v2345 = vperm.slane %v2309, 3
        %v2346 = vperm.slane %v2310, 3
        %v2347 = vmul.f32 %v2343, %v2345
        %v2348 = vmul.f32 %v2343, %v2346
        %v2349 = vadd.f32 %v2339, %v2347
        %v2350 = vadd.f32 %v2340, %v2348
        %2351 = vrot.lane.b32.xlu0 %v2019, 112
        %v2352 = vpop.permute.xlu0 %2351
        %2353 = vrot.lane.b32.xlu0 %v2020, 112
        %v2354 = vpop.permute.xlu0 %2353
        %v2355 = vsel %vm1345, %v2352, %v2354
        %v2356 = vsel %vm1345, %v2354, %v2352
        %v2357 = vmul.f32 %v2355, %v1349
        %v2358 = vmul.f32 %v2356, %v1350
        %2359 = vset.pattern.permute.xlu0 28
        %2360 = vperm.xlu0 %2359, %v2021
        %v2361 = vpop.permute.xlu0 %2360
        %v2363 = vperm.slane %v2357, 0
        %v2364 = vperm.slane %v2358, 0
        %v2365 = vmul.f32 %v2361, %v2363
        %v2366 = vmul.f32 %v2361, %v2364
        %v2367 = vadd.f32 %v2349, %v2365
        %v2368 = vadd.f32 %v2350, %v2366
        %2369 = vset.pattern.permute.xlu0 29
        %2370 = vperm.xlu0 %2369, %v2021
        %v2371 = vpop.permute.xlu0 %2370
        %v2373 = vperm.slane %v2357, 1
        %v2374 = vperm.slane %v2358, 1
        %v2375 = vmul.f32 %v2371, %v2373
        %v2376 = vmul.f32 %v2371, %v2374
        %v2377 = vadd.f32 %v2367, %v2375
        %v2378 = vadd.f32 %v2368, %v2376
        %2379 = vset.pattern.permute.xlu0 30
        %2380 = vperm.xlu0 %2379, %v2021
        %v2381 = vpop.permute.xlu0 %2380
        %v2383 = vperm.slane %v2357, 2
        %v2384 = vperm.slane %v2358, 2
        %v2385 = vmul.f32 %v2381, %v2383
        %v2386 = vmul.f32 %v2381, %v2384
        %v2387 = vadd.f32 %v2377, %v2385
        %v2388 = vadd.f32 %v2378, %v2386
        %2389 = vset.pattern.permute.xlu0 31
        %2390 = vperm.xlu0 %2389, %v2021
        %v2391 = vpop.permute.xlu0 %2390
        %v2393 = vperm.slane %v2357, 3
        %v2394 = vperm.slane %v2358, 3
        %v2395 = vmul.f32 %v2391, %v2393
        %v2396 = vmul.f32 %v2391, %v2394
        %v2397 = vadd.f32 %v2387, %v2395
        %v2398 = vadd.f32 %v2388, %v2396
        %2399 = vrot.lane.b32.xlu0 %v2019, 111
        %v2400 = vpop.permute.xlu0 %2399
        %2401 = vrot.lane.b32.xlu0 %v2020, 111
        %v2402 = vpop.permute.xlu0 %2401
        %v2403 = vsel %vm1457, %v2400, %v2402
        %v2404 = vsel %vm1457, %v2402, %v2400
        %v2405 = vmul.f32 %v2403, %v1461
        %v2406 = vmul.f32 %v2404, %v1462
        %2407 = vset.pattern.permute.xlu0 32
        %2408 = vperm.xlu0 %2407, %v2021
        %v2409 = vpop.permute.xlu0 %2408
        %v2411 = vperm.slane %v2405, 0
        %v2412 = vperm.slane %v2406, 0
        %v2413 = vmul.f32 %v2409, %v2411
        %v2414 = vmul.f32 %v2409, %v2412
        %v2415 = vadd.f32 %v2397, %v2413
        %v2416 = vadd.f32 %v2398, %v2414
        %2417 = vset.pattern.permute.xlu0 33
        %2418 = vperm.xlu0 %2417, %v2021
        %v2419 = vpop.permute.xlu0 %2418
        %v2421 = vperm.slane %v2405, 1
        %v2422 = vperm.slane %v2406, 1
        %v2423 = vmul.f32 %v2419, %v2421
        %v2424 = vmul.f32 %v2419, %v2422
        %v2425 = vadd.f32 %v2415, %v2423
        %v2426 = vadd.f32 %v2416, %v2424
        %2427 = vset.pattern.permute.xlu0 34
        %2428 = vperm.xlu0 %2427, %v2021
        %v2429 = vpop.permute.xlu0 %2428
        %v2431 = vperm.slane %v2405, 2
        %v2432 = vperm.slane %v2406, 2
        %v2433 = vmul.f32 %v2429, %v2431
        %v2434 = vmul.f32 %v2429, %v2432
        %v2435 = vadd.f32 %v2425, %v2433
        %v2436 = vadd.f32 %v2426, %v2434
        %2437 = vset.pattern.permute.xlu0 35
        %2438 = vperm.xlu0 %2437, %v2021
        %v2439 = vpop.permute.xlu0 %2438
        %v2441 = vperm.slane %v2405, 3
        %v2442 = vperm.slane %v2406, 3
        %v2443 = vmul.f32 %v2439, %v2441
        %v2444 = vmul.f32 %v2439, %v2442
        %v2445 = vadd.f32 %v2435, %v2443
        %v2446 = vadd.f32 %v2436, %v2444
        %v2447 = vmul.f32 %v1995, %v2445
        %v2448 = vmul.f32 %v1996, %v2446
        %v2449 = vadd.f32 %v2447, %v2003
        %v2450 = vadd.f32 %v2448, %v2004
        %vm2451 = vcmp.ge.f32.partialorder %v2449, 0.0
        %vm2452 = vcmp.ge.f32.partialorder %v2450, 0.0
        %v2453 = vmul.f32 %v2449, 0.2
        %v2454 = vmul.f32 %v2450, 0.2
        %v2455 = vsel %vm2451, %v2449, %v2453
        %v2456 = vsel %vm2452, %v2450, %v2454
        %v2457 = vld [vmem:[#allocation8] sm:$0xf]
        %2458 = vrot.lane.b32.xlu0 %v2455, 17
        %v2459 = vpop.permute.xlu0 %2458
        %2460 = vrot.lane.b32.xlu0 %v2456, 17
        %v2461 = vpop.permute.xlu0 %2460
        %v2462 = vsel %vm560, %v2459, %v2461
        %v2463 = vsel %vm560, %v2461, %v2459
        %v2464 = vmul.f32 %v2463, %v564
        %v2465 = vmul.f32 %v2462, %v565
        %2467 = vset.pattern.permute.xlu0 0
        %2468 = vperm.xlu0 %2467, %v2457
        %v2469 = vpop.permute.xlu0 %2468
        %v2471 = vperm.slane %v2464, 0
        %v2472 = vperm.slane %v2465, 0
        %v2473 = vmul.f32 %v2469, %v2471
        %v2474 = vmul.f32 %v2469, %v2472
        %v2475 = vadd.f32 %v2473, 0.0
        %v2476 = vadd.f32 %v2474, 0.0
        %2477 = vset.pattern.permute.xlu0 1
        %2478 = vperm.xlu0 %2477, %v2457
        %v2479 = vpop.permute.xlu0 %2478
        %v2481 = vperm.slane %v2464, 1
        %v2482 = vperm.slane %v2465, 1
        %v2483 = vmul.f32 %v2479, %v2481
        %v2484 = vmul.f32 %v2479, %v2482
        %v2485 = vadd.f32 %v2475, %v2483
        %v2486 = vadd.f32 %v2476, %v2484
        %2487 = vset.pattern.permute.xlu0 2
        %2488 = vperm.xlu0 %2487, %v2457
        %v2489 = vpop.permute.xlu0 %2488
        %v2491 = vperm.slane %v2464, 2
        %v2492 = vperm.slane %v2465, 2
        %v2493 = vmul.f32 %v2489, %v2491
        %v2494 = vmul.f32 %v2489, %v2492
        %v2495 = vadd.f32 %v2485, %v2493
        %v2496 = vadd.f32 %v2486, %v2494
        %2497 = vset.pattern.permute.xlu0 3
        %2498 = vperm.xlu0 %2497, %v2457
        %v2499 = vpop.permute.xlu0 %2498
        %v2501 = vperm.slane %v2464, 3
        %v2502 = vperm.slane %v2465, 3
        %v2503 = vmul.f32 %v2499, %v2501
        %v2504 = vmul.f32 %v2499, %v2502
        %v2505 = vadd.f32 %v2495, %v2503
        %v2506 = vadd.f32 %v2496, %v2504
        %2507 = vrot.lane.b32.xlu0 %v2455, 16
        %v2508 = vpop.permute.xlu0 %2507
        %2509 = vrot.lane.b32.xlu0 %v2456, 16
        %v2510 = vpop.permute.xlu0 %2509
        %v2511 = vsel %vm673, %v2508, %v2510
        %v2512 = vsel %vm673, %v2510, %v2508
        %v2513 = vmul.f32 %v2512, %v677
        %v2514 = vmul.f32 %v2511, %v678
        %2515 = vset.pattern.permute.xlu0 4
        %2516 = vperm.xlu0 %2515, %v2457
        %v2517 = vpop.permute.xlu0 %2516
        %v2519 = vperm.slane %v2513, 0
        %v2520 = vperm.slane %v2514, 0
        %v2521 = vmul.f32 %v2517, %v2519
        %v2522 = vmul.f32 %v2517, %v2520
        %v2523 = vadd.f32 %v2505, %v2521
        %v2524 = vadd.f32 %v2506, %v2522
        %2525 = vset.pattern.permute.xlu0 5
        %2526 = vperm.xlu0 %2525, %v2457
        %v2527 = vpop.permute.xlu0 %2526
        %v2529 = vperm.slane %v2513, 1
        %v2530 = vperm.slane %v2514, 1
        %v2531 = vmul.f32 %v2527, %v2529
        %v2532 = vmul.f32 %v2527, %v2530
        %v2533 = vadd.f32 %v2523, %v2531
        %v2534 = vadd.f32 %v2524, %v2532
        %2535 = vset.pattern.permute.xlu0 6
        %2536 = vperm.xlu0 %2535, %v2457
        %v2537 = vpop.permute.xlu0 %2536
        %v2539 = vperm.slane %v2513, 2
        %v2540 = vperm.slane %v2514, 2
        %v2541 = vmul.f32 %v2537, %v2539
        %v2542 = vmul.f32 %v2537, %v2540
        %v2543 = vadd.f32 %v2533, %v2541
        %v2544 = vadd.f32 %v2534, %v2542
        %2545 = vset.pattern.permute.xlu0 7
        %2546 = vperm.xlu0 %2545, %v2457
        %v2547 = vpop.permute.xlu0 %2546
        %v2549 = vperm.slane %v2513, 3
        %v2550 = vperm.slane %v2514, 3
        %v2551 = vmul.f32 %v2547, %v2549
        %v2552 = vmul.f32 %v2547, %v2550
        %v2553 = vadd.f32 %v2543, %v2551
        %v2554 = vadd.f32 %v2544, %v2552
        %2555 = vrot.lane.b32.xlu0 %v2455, 15
        %v2556 = vpop.permute.xlu0 %2555
        %2557 = vrot.lane.b32.xlu0 %v2456, 15
        %v2558 = vpop.permute.xlu0 %2557
        %v2559 = vsel %vm785, %v2556, %v2558
        %v2560 = vsel %vm785, %v2558, %v2556
        %v2561 = vmul.f32 %v2560, %v789
        %v2562 = vmul.f32 %v2559, %v790
        %2563 = vset.pattern.permute.xlu0 8
        %2564 = vperm.xlu0 %2563, %v2457
        %v2565 = vpop.permute.xlu0 %2564
        %v2567 = vperm.slane %v2561, 0
        %v2568 = vperm.slane %v2562, 0
        %v2569 = vmul.f32 %v2565, %v2567
        %v2570 = vmul.f32 %v2565, %v2568
        %v2571 = vadd.f32 %v2553, %v2569
        %v2572 = vadd.f32 %v2554, %v2570
        %2573 = vset.pattern.permute.xlu0 9
        %2574 = vperm.xlu0 %2573, %v2457
        %v2575 = vpop.permute.xlu0 %2574
        %v2577 = vperm.slane %v2561, 1
        %v2578 = vperm.slane %v2562, 1
        %v2579 = vmul.f32 %v2575, %v2577
        %v2580 = vmul.f32 %v2575, %v2578
        %v2581 = vadd.f32 %v2571, %v2579
        %v2582 = vadd.f32 %v2572, %v2580
        %2583 = vset.pattern.permute.xlu0 10
        %2584 = vperm.xlu0 %2583, %v2457
        %v2585 = vpop.permute.xlu0 %2584
        %v2587 = vperm.slane %v2561, 2
        %v2588 = vperm.slane %v2562, 2
        %v2589 = vmul.f32 %v2585, %v2587
        %v2590 = vmul.f32 %v2585, %v2588
        %v2591 = vadd.f32 %v2581, %v2589
        %v2592 = vadd.f32 %v2582, %v2590
        %2593 = vset.pattern.permute.xlu0 11
        %2594 = vperm.xlu0 %2593, %v2457
        %v2595 = vpop.permute.xlu0 %2594
        %v2597 = vperm.slane %v2561, 3
        %v2598 = vperm.slane %v2562, 3
        %v2599 = vmul.f32 %v2595, %v2597
        %v2600 = vmul.f32 %v2595, %v2598
        %v2601 = vadd.f32 %v2591, %v2599
        %v2602 = vadd.f32 %v2592, %v2600
        %2603 = vrot.lane.b32.xlu0 %v2455, 1
        %v2604 = vpop.permute.xlu0 %2603
        %2605 = vrot.lane.b32.xlu0 %v2456, 1
        %v2606 = vpop.permute.xlu0 %2605
        %v2607 = vsel %vm897, %v2604, %v2606
        %v2608 = vsel %vm897, %v2606, %v2604
        %v2609 = vmul.f32 %v2608, %v901
        %v2610 = vmul.f32 %v2607, %v902
        %2611 = vset.pattern.permute.xlu0 12
        %2612 = vperm.xlu0 %2611, %v2457
        %v2613 = vpop.permute.xlu0 %2612
        %v2615 = vperm.slane %v2609, 0
        %v2616 = vperm.slane %v2610, 0
        %v2617 = vmul.f32 %v2613, %v2615
        %v2618 = vmul.f32 %v2613, %v2616
        %v2619 = vadd.f32 %v2601, %v2617
        %v2620 = vadd.f32 %v2602, %v2618
        %2621 = vset.pattern.permute.xlu0 13
        %2622 = vperm.xlu0 %2621, %v2457
        %v2623 = vpop.permute.xlu0 %2622
        %v2625 = vperm.slane %v2609, 1
        %v2626 = vperm.slane %v2610, 1
        %v2627 = vmul.f32 %v2623, %v2625
        %v2628 = vmul.f32 %v2623, %v2626
        %v2629 = vadd.f32 %v2619, %v2627
        %v2630 = vadd.f32 %v2620, %v2628
        %2631 = vset.pattern.permute.xlu0 14
        %2632 = vperm.xlu0 %2631, %v2457
        %v2633 = vpop.permute.xlu0 %2632
        %v2635 = vperm.slane %v2609, 2
        %v2636 = vperm.slane %v2610, 2
        %v2637 = vmul.f32 %v2633, %v2635
        %v2638 = vmul.f32 %v2633, %v2636
        %v2639 = vadd.f32 %v2629, %v2637
        %v2640 = vadd.f32 %v2630, %v2638
        %2641 = vset.pattern.permute.xlu0 15
        %2642 = vperm.xlu0 %2641, %v2457
        %v2643 = vpop.permute.xlu0 %2642
        %v2645 = vperm.slane %v2609, 3
        %v2646 = vperm.slane %v2610, 3
        %v2647 = vmul.f32 %v2643, %v2645
        %v2648 = vmul.f32 %v2643, %v2646
        %v2649 = vadd.f32 %v2639, %v2647
        %v2650 = vadd.f32 %v2640, %v2648
        %2651 = vset.pattern.permute.xlu0 16
        %2652 = vperm.xlu0 %2651, %v2457
        %v2653 = vpop.permute.xlu0 %2652
        %v2655 = vperm.slane %v2455, 0
        %v2656 = vperm.slane %v2456, 0
        %v2657 = vmul.f32 %v2653, %v2655
        %v2658 = vmul.f32 %v2653, %v2656
        %v2659 = vadd.f32 %v2649, %v2657
        %v2660 = vadd.f32 %v2650, %v2658
        %2661 = vset.pattern.permute.xlu0 17
        %2662 = vperm.xlu0 %2661, %v2457
        %v2663 = vpop.permute.xlu0 %2662
        %v2665 = vperm.slane %v2455, 1
        %v2666 = vperm.slane %v2456, 1
        %v2667 = vmul.f32 %v2663, %v2665
        %v2668 = vmul.f32 %v2663, %v2666
        %v2669 = vadd.f32 %v2659, %v2667
        %v2670 = vadd.f32 %v2660, %v2668
        %2671 = vset.pattern.permute.xlu0 18
        %2672 = vperm.xlu0 %2671, %v2457
        %v2673 = vpop.permute.xlu0 %2672
        %v2675 = vperm.slane %v2455, 2
        %v2676 = vperm.slane %v2456, 2
        %v2677 = vmul.f32 %v2673, %v2675
        %v2678 = vmul.f32 %v2673, %v2676
        %v2679 = vadd.f32 %v2669, %v2677
        %v2680 = vadd.f32 %v2670, %v2678
        %2681 = vset.pattern.permute.xlu0 19
        %2682 = vperm.xlu0 %2681, %v2457
        %v2683 = vpop.permute.xlu0 %2682
        %v2685 = vperm.slane %v2455, 3
        %v2686 = vperm.slane %v2456, 3
        %v2687 = vmul.f32 %v2683, %v2685
        %v2688 = vmul.f32 %v2683, %v2686
        %v2689 = vadd.f32 %v2679, %v2687
        %v2690 = vadd.f32 %v2680, %v2688
        %2691 = vrot.lane.b32.xlu0 %v2455, 127
        %v2692 = vpop.permute.xlu0 %2691
        %2693 = vrot.lane.b32.xlu0 %v2456, 127
        %v2694 = vpop.permute.xlu0 %2693
        %v2695 = vsel %vm1121, %v2692, %v2694
        %v2696 = vsel %vm1121, %v2694, %v2692
        %v2697 = vmul.f32 %v2695, %v1125
        %v2698 = vmul.f32 %v2696, %v1126
        %2699 = vset.pattern.permute.xlu0 20
        %2700 = vperm.xlu0 %2699, %v2457
        %v2701 = vpop.permute.xlu0 %2700
        %v2703 = vperm.slane %v2697, 0
        %v2704 = vperm.slane %v2698, 0
        %v2705 = vmul.f32 %v2701, %v2703
        %v2706 = vmul.f32 %v2701, %v2704
        %v2707 = vadd.f32 %v2689, %v2705
        %v2708 = vadd.f32 %v2690, %v2706
        %2709 = vset.pattern.permute.xlu0 21
        %2710 = vperm.xlu0 %2709, %v2457
        %v2711 = vpop.permute.xlu0 %2710
        %v2713 = vperm.slane %v2697, 1
        %v2714 = vperm.slane %v2698, 1
        %v2715 = vmul.f32 %v2711, %v2713
        %v2716 = vmul.f32 %v2711, %v2714
        %v2717 = vadd.f32 %v2707, %v2715
        %v2718 = vadd.f32 %v2708, %v2716
        %2719 = vset.pattern.permute.xlu0 22
        %2720 = vperm.xlu0 %2719, %v2457
        %v2721 = vpop.permute.xlu0 %2720
        %v2723 = vperm.slane %v2697, 2
        %v2724 = vperm.slane %v2698, 2
        %v2725 = vmul.f32 %v2721, %v2723
        %v2726 = vmul.f32 %v2721, %v2724
        %v2727 = vadd.f32 %v2717, %v2725
        %v2728 = vadd.f32 %v2718, %v2726
        %2729 = vset.pattern.permute.xlu0 23
        %2730 = vperm.xlu0 %2729, %v2457
        %v2731 = vpop.permute.xlu0 %2730
        %v2733 = vperm.slane %v2697, 3
        %v2734 = vperm.slane %v2698, 3
        %v2735 = vmul.f32 %v2731, %v2733
        %v2736 = vmul.f32 %v2731, %v2734
        %v2737 = vadd.f32 %v2727, %v2735
        %v2738 = vadd.f32 %v2728, %v2736
        %2739 = vrot.lane.b32.xlu0 %v2455, 113
        %v2740 = vpop.permute.xlu0 %2739
        %2741 = vrot.lane.b32.xlu0 %v2456, 113
        %v2742 = vpop.permute.xlu0 %2741
        %v2743 = vsel %vm1233, %v2740, %v2742
        %v2744 = vsel %vm1233, %v2742, %v2740
        %v2745 = vmul.f32 %v2743, %v1237
        %v2746 = vmul.f32 %v2744, %v1238
        %2747 = vset.pattern.permute.xlu0 24
        %2748 = vperm.xlu0 %2747, %v2457
        %v2749 = vpop.permute.xlu0 %2748
        %v2751 = vperm.slane %v2745, 0
        %v2752 = vperm.slane %v2746, 0
        %v2753 = vmul.f32 %v2749, %v2751
        %v2754 = vmul.f32 %v2749, %v2752
        %v2755 = vadd.f32 %v2737, %v2753
        %v2756 = vadd.f32 %v2738, %v2754
        %2757 = vset.pattern.permute.xlu0 25
        %2758 = vperm.xlu0 %2757, %v2457
        %v2759 = vpop.permute.xlu0 %2758
        %v2761 = vperm.slane %v2745, 1
        %v2762 = vperm.slane %v2746, 1
        %v2763 = vmul.f32 %v2759, %v2761
        %v2764 = vmul.f32 %v2759, %v2762
        %v2765 = vadd.f32 %v2755, %v2763
        %v2766 = vadd.f32 %v2756, %v2764
        %2767 = vset.pattern.permute.xlu0 26
        %2768 = vperm.xlu0 %2767, %v2457
        %v2769 = vpop.permute.xlu0 %2768
        %v2771 = vperm.slane %v2745, 2
        %v2772 = vperm.slane %v2746, 2
        %v2773 = vmul.f32 %v2769, %v2771
        %v2774 = vmul.f32 %v2769, %v2772
        %v2775 = vadd.f32 %v2765, %v2773
        %v2776 = vadd.f32 %v2766, %v2774
        %2777 = vset.pattern.permute.xlu0 27
        %2778 = vperm.xlu0 %2777, %v2457
        %v2779 = vpop.permute.xlu0 %2778
        %v2781 = vperm.slane %v2745, 3
        %v2782 = vperm.slane %v2746, 3
        %v2783 = vmul.f32 %v2779, %v2781
        %v2784 = vmul.f32 %v2779, %v2782
        %v2785 = vadd.f32 %v2775, %v2783
        %v2786 = vadd.f32 %v2776, %v2784
        %2787 = vrot.lane.b32.xlu0 %v2455, 112
        %v2788 = vpop.permute.xlu0 %2787
        %2789 = vrot.lane.b32.xlu0 %v2456, 112
        %v2790 = vpop.permute.xlu0 %2789
        %v2791 = vsel %vm1345, %v2788, %v2790
        %v2792 = vsel %vm1345, %v2790, %v2788
        %v2793 = vmul.f32 %v2791, %v1349
        %v2794 = vmul.f32 %v2792, %v1350
        %2795 = vset.pattern.permute.xlu0 28
        %2796 = vperm.xlu0 %2795, %v2457
        %v2797 = vpop.permute.xlu0 %2796
        %v2799 = vperm.slane %v2793, 0
        %v2800 = vperm.slane %v2794, 0
        %v2801 = vmul.f32 %v2797, %v2799
        %v2802 = vmul.f32 %v2797, %v2800
        %v2803 = vadd.f32 %v2785, %v2801
        %v2804 = vadd.f32 %v2786, %v2802
        %2805 = vset.pattern.permute.xlu0 29
        %2806 = vperm.xlu0 %2805, %v2457
        %v2807 = vpop.permute.xlu0 %2806
        %v2809 = vperm.slane %v2793, 1
        %v2810 = vperm.slane %v2794, 1
        %v2811 = vmul.f32 %v2807, %v2809
        %v2812 = vmul.f32 %v2807, %v2810
        %v2813 = vadd.f32 %v2803, %v2811
        %v2814 = vadd.f32 %v2804, %v2812
        %2815 = vset.pattern.permute.xlu0 30
        %2816 = vperm.xlu0 %2815, %v2457
        %v2817 = vpop.permute.xlu0 %2816
        %v2819 = vperm.slane %v2793, 2
        %v2820 = vperm.slane %v2794, 2
        %v2821 = vmul.f32 %v2817, %v2819
        %v2822 = vmul.f32 %v2817, %v2820
        %v2823 = vadd.f32 %v2813, %v2821
        %v2824 = vadd.f32 %v2814, %v2822
        %2825 = vset.pattern.permute.xlu0 31
        %2826 = vperm.xlu0 %2825, %v2457
        %v2827 = vpop.permute.xlu0 %2826
        %v2829 = vperm.slane %v2793, 3
        %v2830 = vperm.slane %v2794, 3
        %v2831 = vmul.f32 %v2827, %v2829
        %v2832 = vmul.f32 %v2827, %v2830
        %v2833 = vadd.f32 %v2823, %v2831
        %v2834 = vadd.f32 %v2824, %v2832
        %2835 = vrot.lane.b32.xlu0 %v2455, 111
        %v2836 = vpop.permute.xlu0 %2835
        %2837 = vrot.lane.b32.xlu0 %v2456, 111
        %v2838 = vpop.permute.xlu0 %2837
        %v2839 = vsel %vm1457, %v2836, %v2838
        %v2840 = vsel %vm1457, %v2838, %v2836
        %v2841 = vmul.f32 %v2839, %v1461
        %v2842 = vmul.f32 %v2840, %v1462
        %2843 = vset.pattern.permute.xlu0 32
        %2844 = vperm.xlu0 %2843, %v2457
        %v2845 = vpop.permute.xlu0 %2844
        %v2847 = vperm.slane %v2841, 0
        %v2848 = vperm.slane %v2842, 0
        %v2849 = vmul.f32 %v2845, %v2847
        %v2850 = vmul.f32 %v2845, %v2848
        %v2851 = vadd.f32 %v2833, %v2849
        %v2852 = vadd.f32 %v2834, %v2850
        %2853 = vset.pattern.permute.xlu0 33
        %2854 = vperm.xlu0 %2853, %v2457
        %v2855 = vpop.permute.xlu0 %2854
        %v2857 = vperm.slane %v2841, 1
        %v2858 = vperm.slane %v2842, 1
        %v2859 = vmul.f32 %v2855, %v2857
        %v2860 = vmul.f32 %v2855, %v2858
        %v2861 = vadd.f32 %v2851, %v2859
        %v2862 = vadd.f32 %v2852, %v2860
        %2863 = vset.pattern.permute.xlu0 34
        %2864 = vperm.xlu0 %2863, %v2457
        %v2865 = vpop.permute.xlu0 %2864
        %v2867 = vperm.slane %v2841, 2
        %v2868 = vperm.slane %v2842, 2
        %v2869 = vmul.f32 %v2865, %v2867
        %v2870 = vmul.f32 %v2865, %v2868
        %v2871 = vadd.f32 %v2861, %v2869
        %v2872 = vadd.f32 %v2862, %v2870
        %2873 = vset.pattern.permute.xlu0 35
        %2874 = vperm.xlu0 %2873, %v2457
        %v2875 = vpop.permute.xlu0 %2874
        %v2877 = vperm.slane %v2841, 3
        %v2878 = vperm.slane %v2842, 3
        %v2879 = vmul.f32 %v2875, %v2877
        %v2880 = vmul.f32 %v2875, %v2878
        %v2881 = vadd.f32 %v2871, %v2879
        %v2882 = vadd.f32 %v2872, %v2880
        %2883 = vst [vmem:[#allocation1] ss:$2 sm:$0xff] %v423
        %v2884 = vld.sshfl [vmem:[#allocation1] sm:$0xff pattern:$0x75316420]
        %v2885 = vld.sshfl [vmem:[#allocation1 + $0x8] sm:$0xff pattern:$0x75316420]
        %v2888 = vadd.f32 %v2881, %v2884
        %v2889 = vadd.f32 %v2882, %v2885
        %v2892 = vrot.slane %v2889, 4
        %v2893 = vsel %vm445, %v2888, %v2892
        %2895 = vst [vmem:[%s421] sm:$0xff] %v2893
        %s2896 = sand.u32 %s237, 1
        %s2897 = scalar_lea.sflag [#allocation4], %s2896
        %s2898 = sand.u32 %s237, 1
        %s2899 = smul.addr %s2898, 8
        %s2900 = scalar_lea.vmem [#allocation10], %s2899
        // Predicated region
        $region73: #{tpu_custom_call.1} parent=55 // pred_check
          %p2901 = pneg %p247
        $region74: #{tpu_custom_call.1} parent=55 // pred_check_branch
          %2903 = sbr.rel (%p2901) target = $region76
        $region75: #{tpu_custom_call.1} parent=55 // pred_region
          %2905 = vsyncadd %s2897, 0
          %s2906 = smul.addr %s30, 2
          %s2907 = smul.addr %s2906, 4
          %s2908 = scalar_lea.hbm %s9, %s2907
          %s2910 = sshll.u32 %s2900, 4
          %s2911 = int_to_ptr.vmem [resolvable:$true] %s2910
          %s2912 = sshll.u32 %s2908, 4
          %s2913 = int_to_ptr.hbm [resolvable:$true] %s2912
          %2915 = dma.vmem_to_hbm [thread:$0]  %s2911, 128, %s2913, %s2897
        $region76: #{tpu_custom_call.1} parent=55 // pred_fallthru
          _
      $region56: #{tpu_custom_call.1} parent=5 // pred_fallthru
        _
      %p2916 = scmp.le.s32.totalorder 2, %s25
      // Predicated region
      $region77: #{tpu_custom_call.1} parent=5 // pred_check
        %p2917 = pneg %p2916
      $region78: #{tpu_custom_call.1} parent=5 // pred_check_branch
        %2919 = sbr.rel (%p2917) target = $region80
      $region79: #{tpu_custom_call.1} parent=5 // pred_region
        %s2920 = ssub.s32 %s25, 2
        // Predicated region
        $region81: #{tpu_custom_call.1} parent=79 // pred_check
          %p2921 = pneg %p253
        $region82: #{tpu_custom_call.1} parent=79 // pred_check_branch
          %2923 = sbr.rel (%p2921) target = $region84
        $region83: #{tpu_custom_call.1} parent=79 // pred_region
          %s2924 = sand.u32 %s238, 1
          %s2925 = scalar_lea.sflag [#allocation4], %s2924
          %s2926 = sand.u32 %s238, 1
          %s2927 = smul.addr %s2926, 8
          %s2928 = scalar_lea.vmem [#allocation10], %s2927
          %2930 = dma.done %s2925, 128
        $region84: #{tpu_custom_call.1} parent=79 // pred_fallthru
          _
      $region80: #{tpu_custom_call.1} parent=5 // pred_fallthru
        _
    $region6: #{tpu_custom_call.1} parent=1 // loop_footer
      %s29 = sadd.s32 1, %s25
    $region7: #{tpu_custom_call.1} parent=1 // loop_footer_branch
      %24 = sbr.rel target = $region3
    $region8: #{tpu_custom_call.1} parent=1 // loop_exit
      _
    %2931 = vsyncpa [#allocation3], 1
    %s2932 = scalar_lea.sflag [#allocation3], 1
    %2933 = vsyncpa %s2932, 1
    %2934 = vsyncpa [#allocation6], 1
    %s2935 = scalar_lea.sflag [#allocation6], 1
    %2936 = vsyncpa %s2935, 1
    %2937 = vsyncpa [#allocation9], 1
    %2938 = vsyncpa [#allocation4], 1
    %s2939 = scalar_lea.sflag [#allocation4], 1
    %2940 = vsyncpa %s2939, 1

</llo_original>
